<compile_context>
chip_gen: v6e
topology: v6e:2x2x1
jax: 0.10.0
libtpu: 0.0.40
codegen_flags: <defaults>
</compile_context>

<pallas_src>
import functools
import math

import jax
import jax.numpy as jnp
from jax.experimental import pallas as pl
from jax.experimental.pallas import tpu as pltpu

_PAD_W = 8    # left/right margin in the padded scratch (keeps interior stores sublane-aligned)
_SLOPE = 0.1  # LeakyReLU negative slope


# ---------------- in-kernel helpers ----------------

def _lrelu(y):
    return jnp.where(y > 0, y, _SLOPE * y)


def _fill_padded(pad_ref, a, h, w, c):
    """Store `a` (h, w, c) into the scratch interior and zero ONLY the halo ring."""
    zcol = jnp.zeros((h + 2, 1, c), jnp.float32)
    pad_ref[:, _PAD_W - 1:_PAD_W, :] = zcol               # left halo column (+ corners)
    pad_ref[:, _PAD_W + w:_PAD_W + w + 1, :] = zcol       # right halo column (+ corners)
    zrow = jnp.zeros((1, w, c), jnp.float32)
    pad_ref[0:1, _PAD_W:_PAD_W + w, :] = zrow             # top halo row
    pad_ref[h + 1:h + 2, _PAD_W:_PAD_W + w, :] = zrow     # bottom halo row
    pad_ref[1:h + 1, _PAD_W:_PAD_W + w, :] = a            # interior (sublane-aligned store)


def _conv3x3_from_padded(pad_ref, w_ref, h, w, cin, stride):
    """3x3 / pad=1 / stride-s conv: 9 accumulating MXU dots reading shifted
    (strided) windows straight from the padded VMEM scratch."""
    ho, wo = h // stride, w // stride
    cout = w_ref.shape[-1]
    acc = None
    for k in range(9):
        ky, kx = divmod(k, 3)
        c0 = _PAD_W - 1 + kx
        if stride == 1:
            win = pad_ref[ky:ky + h, c0:c0 + w, :]
        else:
            win = pad_ref[pl.ds(ky, ho, stride), pl.ds(c0, wo, stride), :]
        p = jnp.dot(win.reshape(ho * wo, cin).astype(jnp.bfloat16),
                    w_ref[k],                               # (cin, cout) bf16
                    preferred_element_type=jnp.float32)
        acc = p if acc is None else acc + p
    return acc.reshape(ho, wo, cout)


# ---------------- fused block kernel ----------------

def _block_kernel(*refs, h, w, cin, cout, stride, apply_act1, equal_in_out):
    if equal_in_out:
        (x_ref, s1_ref, b1_ref, w1_ref, s2_ref, b2_ref, w2_ref,
         o_ref, pad1_ref, pad2_ref) = refs
        wsc_ref = None
    else:
        (x_ref, s1_ref, b1_ref, w1_ref, s2_ref, b2_ref, w2_ref, wsc_ref,
         o_ref, pad1_ref, pad2_ref) = refs

    ho, wo = h // stride, w // stride

    x = x_ref[0]                                            # (h, w, cin) f32
    if apply_act1:                                          # folded BN1 + LeakyReLU
        a1 = _lrelu(x * s1_ref[...].reshape(1, 1, cin) + b1_ref[...].reshape(1, 1, cin))
    else:                                                   # conv1 consumes raw x
        a1 = x

    # ---- conv1 (3x3, stride folded into strided window reads) ----
    _fill_padded(pad1_ref, a1, h, w, cin)
    h1 = _conv3x3_from_padded(pad1_ref, w1_ref, h, w, cin, stride)   # (ho, wo, cout) f32

    # ---- residual path ----
    if equal_in_out:
        res = x                                             # identity (stride==1, cin==cout)
    else:
        if stride == 1:
            a1s = pad1_ref[1:h + 1, _PAD_W:_PAD_W + w, :]
        else:
            a1s = pad1_ref[pl.ds(1, ho, stride), pl.ds(_PAD_W, wo, stride), :]
        res = jnp.dot(a1s.reshape(ho * wo, cin).astype(jnp.bfloat16),
                      wsc_ref[...],                          # (cin, cout) bf16
                      preferred_element_type=jnp.float32).reshape(ho, wo, cout)

    # ---- BN2 + LeakyReLU -> conv2 (3x3, stride 1) -> + residual ----
    a2 = _lrelu(h1 * s2_ref[...].reshape(1, 1, cout) + b2_ref[...].reshape(1, 1, cout))
    # TODO(synk): training-mode F.dropout (droprate > 0) not implemented (module default 0.0).
    _fill_padded(pad2_ref, a2, ho, wo, cout)
    y = _conv3x3_from_padded(pad2_ref, w2_ref, ho, wo, cout, 1)

    o_ref[0] = (y + res).astype(o_ref.dtype)


# ---------------- pallas_call wrapper ----------------

def _fused_block(x, s1, b1, w1, s2, b2, w2, wsc, *, stride, apply_act1):
    n, h, w, cin = x.shape
    cout = w1.shape[-1]
    ho, wo = h // stride, w // stride
    equal_in_out = wsc is None

    kern = functools.partial(_block_kernel, h=h, w=w, cin=cin, cout=cout,
                             stride=stride, apply_act1=apply_act1,
                             equal_in_out=equal_in_out)

    in_specs = [
        pl.BlockSpec((1, h, w, cin), lambda i: (i, 0, 0, 0)),
        pl.BlockSpec((1, cin), lambda i: (0, 0)),
        pl.BlockSpec((1, cin), lambda i: (0, 0)),
        pl.BlockSpec((9, cin, cout), lambda i: (0, 0, 0)),     # whole-cout weight slab
        pl.BlockSpec((1, cout), lambda i: (0, 0)),
        pl.BlockSpec((1, cout), lambda i: (0, 0)),
        pl.BlockSpec((9, cout, cout), lambda i: (0, 0, 0)),
    ]
    args = [x, s1, b1, w1, s2, b2, w2]
    if not equal_in_out:
        in_specs.append(pl.BlockSpec((cin, cout), lambda i: (0, 0)))
        args.append(wsc)

    return pl.pallas_call(
        kern,
        out_shape=jax.ShapeDtypeStruct((n, ho, wo, cout), x.dtype),
        grid=(n,),
        in_specs=in_specs,
        out_specs=pl.BlockSpec((1, ho, wo, cout), lambda i: (i, 0, 0, 0)),
        scratch_shapes=[
            pltpu.VMEM((h + 2, w + 2 * _PAD_W, cin), jnp.float32),    # conv1 halo scratch
            pltpu.VMEM((ho + 2, wo + 2 * _PAD_W, cout), jnp.float32),  # conv2 halo scratch
        ],
        compiler_params=pltpu.CompilerParams(
            dimension_semantics=("parallel",),     # batch axis -> megacore on v7x
            vmem_limit_bytes=48 * 1024 * 1024),
    )(*args)


# ---------------- module forward (glue) ----------------

def _fold_bn(bn, eps=1e-5):
    gamma, beta, mean, var = bn
    scale = gamma / jnp.sqrt(var + eps)
    bias = beta - mean * scale
    return (scale.reshape(1, -1).astype(jnp.float32),
            bias.reshape(1, -1).astype(jnp.float32))


def basic_block_forward(params, x_nchw, *, stride, activate_before_residual=False,
                        droprate=0.0):
    """Mirrors BasicBlock.forward.  x_nchw: (N, C_in, H, W) -> (N, C_out, H', W')."""
    w1 = params["conv1_w"]
    cin, cout = w1.shape[2], w1.shape[3]
    equal_in_out = cin == cout
    assert droprate == 0.0  # TODO(synk): training-mode dropout (RNG) not implemented.
    if equal_in_out:
        assert stride == 1, "identity shortcut requires stride == 1"

    x = jnp.transpose(x_nchw, (0, 2, 3, 1)).astype(jnp.float32)   # NCHW -> NHWC

    s1, b1 = _fold_bn(params["bn1"])
    s2, b2 = _fold_bn(params["bn2"])
    # Weights cast to bf16 (native MXU operand dtype): halves weight VMEM/HBM traffic.
    w1_k = w1.reshape(9, cin, cout).astype(jnp.bfloat16)
    w2_k = params["conv2_w"].reshape(9, cout, cout).astype(jnp.bfloat16)
    wsc_k = (None if equal_in_out
             else params["convsc_w"].reshape(cin, cout).astype(jnp.bfloat16))

    apply_act1 = equal_in_out or activate_before_residual
    y = _fused_block(x, s1, b1, w1_k, s2, b2, w2_k, wsc_k,
                     stride=stride, apply_act1=apply_act1)
    return jnp.transpose(y, (0, 3, 1, 2))                  # NHWC -> NCHW


# ---------------- pure-JAX reference (sanity check) ----------------

def ref_forward(params, x_nchw, *, stride, activate_before_residual=False):
    equal_in_out = params["conv1_w"].shape[2] == params["conv1_w"].shape[3]
    eps = 1e-5

    def bn_lrelu(x, bn):
        g, b, m, v = bn
        scale = g / jnp.sqrt(v + eps)
        bias = b - m * scale
        y = x * scale[None, :, None, None] + bias[None, :, None, None]
        return jnp.where(y > 0, y, _SLOPE * y)

    def conv(x, w_hwio, s, pad):
        # Quantize operands to bf16 exactly like the kernel (bf16 products are exact
        # in f32, so kernel/reference differ only by accumulation order).
        xq = x.astype(jnp.bfloat16).astype(jnp.float32)
        wq = w_hwio.astype(jnp.bfloat16).astype(jnp.float32)
        w_oihw = jnp.transpose(wq, (3, 2, 0, 1))
        return jax.lax.conv_general_dilated(
            xq, w_oihw, (s, s), [(pad, pad), (pad, pad)],
            dimension_numbers=("NCHW", "OIHW", "NCHW"),
            precision=jax.lax.Precision.HIGHEST)

    x = x_nchw
    if (not equal_in_out) and activate_before_residual:
        x = bn_lrelu(x, params["bn1"])
        out = x
    else:
        out = bn_lrelu(x, params["bn1"])
    h = conv(out if equal_in_out else x, params["conv1_w"], stride, 1)
    h = bn_lrelu(h, params["bn2"])
    y = conv(h, params["conv2_w"], 1, 1)
    res = x if equal_in_out else conv(x, params["convsc_w"], stride, 0)
    return res + y


# ---------------- deterministic parameter init ----------------

def init_params(key, in_planes, out_planes):
    ks = jax.random.split(key, 12)

    def bn(kg, kb, km, kv, c):
        return (jax.random.uniform(kg, (c,), jnp.float32, 0.5, 1.5),   # gamma
                0.1 * jax.random.normal(kb, (c,), jnp.float32),        # beta
                0.1 * jax.random.normal(km, (c,), jnp.float32),        # running_mean
                jax.random.uniform(kv, (c,), jnp.float32, 0.5, 1.5))   # running_var

    p = {
        "bn1": bn(ks[0], ks[1], ks[2], ks[3], in_planes),
        "conv1_w": jax.random.normal(ks[4], (3, 3, in_planes, out_planes), jnp.float32)
                   * math.sqrt(2.0 / (9 * out_planes)),
        "bn2": bn(ks[5], ks[6], ks[7], ks[8], out_planes),
        "conv2_w": jax.random.normal(ks[9], (3, 3, out_planes, out_planes), jnp.float32)
                   * math.sqrt(2.0 / (9 * out_planes)),
    }
    if in_planes != out_planes:
        p["convsc_w"] = jax.random.normal(ks[10], (1, 1, in_planes, out_planes),
                                          jnp.float32) * math.sqrt(2.0 / out_planes)
    return p


if __name__ == "__main__":
    key = jax.random.PRNGKey(0)
    kx1, kx2, kp1, kp2 = jax.random.split(key, 4)

    # Kernel and reference quantize matmul operands to bf16 at identical points, so
    # residual differences are f32 accumulation order (~1e-6) plus rare bf16
    # rounding-boundary flips at the conv2-input requantization (~1e-3).
    RTOL = ATOL = 2e-2

    # Case 1: in_planes != out_planes, stride=2, activate_before_residual=True
    x1 = jax.random.normal(kx1, (2, 4, 16, 16), jnp.float32)
    p1 = init_params(kp1, 4, 8)
    y1 = jax.block_until_ready(
        basic_block_forward(p1, x1, stride=2, activate_before_residual=True))
    r1 = ref_forward(p1, x1, stride=2, activate_before_residual=True)
    assert y1.shape == (2, 8, 8, 8), y1.shape
    assert jnp.allclose(y1, r1, rtol=RTOL, atol=ATOL), float(jnp.max(jnp.abs(y1 - r1)))

    # Case 2: in_planes == out_planes, stride=1 (identity shortcut)
    x2 = jax.random.normal(kx2, (2, 8, 16, 16), jnp.float32)
    p2 = init_params(kp2, 8, 8)
    y2 = jax.block_until_ready(
        basic_block_forward(p2, x2, stride=1, activate_before_residual=False))
    r2 = ref_forward(p2, x2, stride=1, activate_before_residual=False)
    assert y2.shape == (2, 8, 16, 16), y2.shape
    assert jnp.allclose(y2, r2, rtol=RTOL, atol=ATOL), float(jnp.max(jnp.abs(y2 - r2)))

    print("KERNEL_OK")
</pallas_src>

<mosaic_0001>
module attributes {stable_mosaic.version = 11 : i64} {
  func.func @_block_kernel(%arg0: i32, %arg1: memref<1x16x16x4xf32, #tpu.memory_space<vmem>>, %arg2: memref<1x4xf32, #tpu.memory_space<vmem>>, %arg3: memref<1x4xf32, #tpu.memory_space<vmem>>, %arg4: memref<9x4x8xbf16, #tpu.memory_space<vmem>>, %arg5: memref<1x8xf32, #tpu.memory_space<vmem>>, %arg6: memref<1x8xf32, #tpu.memory_space<vmem>>, %arg7: memref<9x8x8xbf16, #tpu.memory_space<vmem>>, %arg8: memref<4x8xbf16, #tpu.memory_space<vmem>>, %arg9: memref<1x8x8x8xf32, #tpu.memory_space<vmem>>, %arg10: memref<18x32x4xf32, #tpu.memory_space<vmem>>, %arg11: memref<10x24x8xf32, #tpu.memory_space<vmem>>) attributes {dimension_semantics = [#tpu.dimension_semantics<parallel>], iteration_bounds = array<i64: 2>, scalar_prefetch = 0 : i64, scratch_operands = 2 : i64, tpu.core_type = #tpu.core_type<tc>, window_params = [{transform_indices = @transform_0, window_bounds = array<i64: 1, 16, 16, 4>}, {pipeline_mode = #tpu.pipeline_mode<synchronous>, transform_indices = @transform_1, window_bounds = array<i64: 1, 4>}, {pipeline_mode = #tpu.pipeline_mode<synchronous>, transform_indices = @transform_2, window_bounds = array<i64: 1, 4>}, {pipeline_mode = #tpu.pipeline_mode<synchronous>, transform_indices = @transform_3, window_bounds = array<i64: 9, 4, 8>}, {pipeline_mode = #tpu.pipeline_mode<synchronous>, transform_indices = @transform_4, window_bounds = array<i64: 1, 8>}, {pipeline_mode = #tpu.pipeline_mode<synchronous>, transform_indices = @transform_5, window_bounds = array<i64: 1, 8>}, {pipeline_mode = #tpu.pipeline_mode<synchronous>, transform_indices = @transform_6, window_bounds = array<i64: 9, 8, 8>}, {pipeline_mode = #tpu.pipeline_mode<synchronous>, transform_indices = @transform_7, window_bounds = array<i64: 4, 8>}, {transform_indices = @transform_8, window_bounds = array<i64: 1, 8, 8, 8>}]} {
    %c0 = arith.constant 0 : index
    %c0_0 = arith.constant 0 : index
    %c0_1 = arith.constant 0 : index
    %c0_2 = arith.constant 0 : index
    %0 = vector.load %arg1[%c0, %c0_0, %c0_1, %c0_2] : memref<1x16x16x4xf32, #tpu.memory_space<vmem>>, vector<1x16x16x4xf32>
    %1 = vector.shape_cast %0 : vector<1x16x16x4xf32> to vector<16x16x4xf32>
    %c0_3 = arith.constant 0 : index
    %c0_4 = arith.constant 0 : index
    %2 = vector.load %arg2[%c0_3, %c0_4] : memref<1x4xf32, #tpu.memory_space<vmem>>, vector<1x4xf32>
    %3 = vector.shape_cast %2 : vector<1x4xf32> to vector<1x1x4xf32>
    %4 = vector.broadcast %3 : vector<1x1x4xf32> to vector<16x16x4xf32>
    %5 = arith.mulf %1, %4 : vector<16x16x4xf32>
    %c0_5 = arith.constant 0 : index
    %c0_6 = arith.constant 0 : index
    %6 = vector.load %arg3[%c0_5, %c0_6] : memref<1x4xf32, #tpu.memory_space<vmem>>, vector<1x4xf32>
    %7 = vector.shape_cast %6 : vector<1x4xf32> to vector<1x1x4xf32>
    %8 = vector.broadcast %7 : vector<1x1x4xf32> to vector<16x16x4xf32>
    %9 = arith.addf %5, %8 : vector<16x16x4xf32>
    %cst = arith.constant 0.000000e+00 : f32
    %10 = vector.broadcast %cst : f32 to vector<16x16x4xf32>
    %11 = arith.cmpf ogt, %9, %10 : vector<16x16x4xf32>
    %cst_7 = arith.constant 1.000000e-01 : f32
    %12 = vector.broadcast %cst_7 : f32 to vector<16x16x4xf32>
    %13 = arith.mulf %12, %9 : vector<16x16x4xf32>
    %14 = arith.select %11, %9, %13 : vector<16x16x4xi1>, vector<16x16x4xf32>
    %cst_8 = arith.constant 0.000000e+00 : f32
    %15 = vector.broadcast %cst_8 : f32 to vector<18x1x4xf32>
    %c0_9 = arith.constant 0 : index
    %c7 = arith.constant 7 : index
    %c0_10 = arith.constant 0 : index
    %16 = vector.load %arg10[%c0_9, %c7, %c0_10] : memref<18x32x4xf32, #tpu.memory_space<vmem>>, vector<18x1x4xf32>
    tpu.vector_store %arg10[%c0_9, %c7, %c0_10], %15 {strides = array<i32>} : memref<18x32x4xf32, #tpu.memory_space<vmem>>, vector<18x1x4xf32>,
    %c0_11 = arith.constant 0 : index
    %c24 = arith.constant 24 : index
    %c0_12 = arith.constant 0 : index
    %17 = vector.load %arg10[%c0_11, %c24, %c0_12] : memref<18x32x4xf32, #tpu.memory_space<vmem>>, vector<18x1x4xf32>
    tpu.vector_store %arg10[%c0_11, %c24, %c0_12], %15 {strides = array<i32>} : memref<18x32x4xf32, #tpu.memory_space<vmem>>, vector<18x1x4xf32>,
    %cst_13 = arith.constant 0.000000e+00 : f32
    %18 = vector.broadcast %cst_13 : f32 to vector<1x16x4xf32>
    %c0_14 = arith.constant 0 : index
    %c8 = arith.constant 8 : index
    %c0_15 = arith.constant 0 : index
    %19 = vector.load %arg10[%c0_14, %c8, %c0_15] : memref<18x32x4xf32, #tpu.memory_space<vmem>>, vector<1x16x4xf32>
    tpu.vector_store %arg10[%c0_14, %c8, %c0_15], %18 {strides = array<i32>} : memref<18x32x4xf32, #tpu.memory_space<vmem>>, vector<1x16x4xf32>,
    %c17 = arith.constant 17 : index
    %c8_16 = arith.constant 8 : index
    %c0_17 = arith.constant 0 : index
    %20 = vector.load %arg10[%c17, %c8_16, %c0_17] : memref<18x32x4xf32, #tpu.memory_space<vmem>>, vector<1x16x4xf32>
    tpu.vector_store %arg10[%c17, %c8_16, %c0_17], %18 {strides = array<i32>} : memref<18x32x4xf32, #tpu.memory_space<vmem>>, vector<1x16x4xf32>,
    %c1 = arith.constant 1 : index
    %c8_18 = arith.constant 8 : index
    %c0_19 = arith.constant 0 : index
    %21 = vector.load %arg10[%c1, %c8_18, %c0_19] : memref<18x32x4xf32, #tpu.memory_space<vmem>>, vector<16x16x4xf32>
    tpu.vector_store %arg10[%c1, %c8_18, %c0_19], %14 {strides = array<i32>} : memref<18x32x4xf32, #tpu.memory_space<vmem>>, vector<16x16x4xf32>,
    %c0_20 = arith.constant 0 : index
    %c7_21 = arith.constant 7 : index
    %c0_22 = arith.constant 0 : index
    %22 = tpu.strided_load %arg10[%c0_20, %c7_21, %c0_22] {strides = array<i32: 2, 2, 1>} : memref<18x32x4xf32, #tpu.memory_space<vmem>>, vector<8x8x4xf32>
    %23 = vector.shape_cast %22 : vector<8x8x4xf32> to vector<64x4xf32>
    %24 = arith.truncf %23 : vector<64x4xf32> to vector<64x4xbf16>
    %c0_23 = arith.constant 0 : index
    %c0_24 = arith.constant 0 : index
    %c0_25 = arith.constant 0 : index
    %25 = vector.load %arg4[%c0_23, %c0_24, %c0_25] : memref<9x4x8xbf16, #tpu.memory_space<vmem>>, vector<1x4x8xbf16>
    %26 = vector.shape_cast %25 : vector<1x4x8xbf16> to vector<4x8xbf16>
    %cst_26 = arith.constant dense<0.000000e+00> : vector<64x8xf32>
    %27 = tpu.matmul %24, %26, %cst_26 {dimension_numbers = #tpu.dot_dimension_numbers<[1], [0], [0], [1], [0, 0, 1, 1], [], []>} : vector<64x4xbf16>, vector<4x8xbf16>, vector<64x8xf32> -> vector<64x8xf32>
    %c0_27 = arith.constant 0 : index
    %c8_28 = arith.constant 8 : index
    %c0_29 = arith.constant 0 : index
    %28 = tpu.strided_load %arg10[%c0_27, %c8_28, %c0_29] {strides = array<i32: 2, 2, 1>} : memref<18x32x4xf32, #tpu.memory_space<vmem>>, vector<8x8x4xf32>
    %29 = vector.shape_cast %28 : vector<8x8x4xf32> to vector<64x4xf32>
    %30 = arith.truncf %29 : vector<64x4xf32> to vector<64x4xbf16>
    %c1_30 = arith.constant 1 : index
    %c0_31 = arith.constant 0 : index
    %c0_32 = arith.constant 0 : index
    %31 = vector.load %arg4[%c1_30, %c0_31, %c0_32] : memref<9x4x8xbf16, #tpu.memory_space<vmem>>, vector<1x4x8xbf16>
    %32 = vector.shape_cast %31 : vector<1x4x8xbf16> to vector<4x8xbf16>
    %cst_33 = arith.constant dense<0.000000e+00> : vector<64x8xf32>
    %33 = tpu.matmul %30, %32, %cst_33 {dimension_numbers = #tpu.dot_dimension_numbers<[1], [0], [0], [1], [0, 0, 1, 1], [], []>} : vector<64x4xbf16>, vector<4x8xbf16>, vector<64x8xf32> -> vector<64x8xf32>
    %34 = arith.addf %27, %33 : vector<64x8xf32>
    %c0_34 = arith.constant 0 : index
    %c9 = arith.constant 9 : index
    %c0_35 = arith.constant 0 : index
    %35 = tpu.strided_load %arg10[%c0_34, %c9, %c0_35] {strides = array<i32: 2, 2, 1>} : memref<18x32x4xf32, #tpu.memory_space<vmem>>, vector<8x8x4xf32>
    %36 = vector.shape_cast %35 : vector<8x8x4xf32> to vector<64x4xf32>
    %37 = arith.truncf %36 : vector<64x4xf32> to vector<64x4xbf16>
    %c2 = arith.constant 2 : index
    %c0_36 = arith.constant 0 : index
    %c0_37 = arith.constant 0 : index
    %38 = vector.load %arg4[%c2, %c0_36, %c0_37] : memref<9x4x8xbf16, #tpu.memory_space<vmem>>, vector<1x4x8xbf16>
    %39 = vector.shape_cast %38 : vector<1x4x8xbf16> to vector<4x8xbf16>
    %cst_38 = arith.constant dense<0.000000e+00> : vector<64x8xf32>
    %40 = tpu.matmul %37, %39, %cst_38 {dimension_numbers = #tpu.dot_dimension_numbers<[1], [0], [0], [1], [0, 0, 1, 1], [], []>} : vector<64x4xbf16>, vector<4x8xbf16>, vector<64x8xf32> -> vector<64x8xf32>
    %41 = arith.addf %34, %40 : vector<64x8xf32>
    %c1_39 = arith.constant 1 : index
    %c7_40 = arith.constant 7 : index
    %c0_41 = arith.constant 0 : index
    %42 = tpu.strided_load %arg10[%c1_39, %c7_40, %c0_41] {strides = array<i32: 2, 2, 1>} : memref<18x32x4xf32, #tpu.memory_space<vmem>>, vector<8x8x4xf32>
    %43 = vector.shape_cast %42 : vector<8x8x4xf32> to vector<64x4xf32>
    %44 = arith.truncf %43 : vector<64x4xf32> to vector<64x4xbf16>
    %c3 = arith.constant 3 : index
    %c0_42 = arith.constant 0 : index
    %c0_43 = arith.constant 0 : index
    %45 = vector.load %arg4[%c3, %c0_42, %c0_43] : memref<9x4x8xbf16, #tpu.memory_space<vmem>>, vector<1x4x8xbf16>
    %46 = vector.shape_cast %45 : vector<1x4x8xbf16> to vector<4x8xbf16>
    %cst_44 = arith.constant dense<0.000000e+00> : vector<64x8xf32>
    %47 = tpu.matmul %44, %46, %cst_44 {dimension_numbers = #tpu.dot_dimension_numbers<[1], [0], [0], [1], [0, 0, 1, 1], [], []>} : vector<64x4xbf16>, vector<4x8xbf16>, vector<64x8xf32> -> vector<64x8xf32>
    %48 = arith.addf %41, %47 : vector<64x8xf32>
    %c1_45 = arith.constant 1 : index
    %c8_46 = arith.constant 8 : index
    %c0_47 = arith.constant 0 : index
    %49 = tpu.strided_load %arg10[%c1_45, %c8_46, %c0_47] {strides = array<i32: 2, 2, 1>} : memref<18x32x4xf32, #tpu.memory_space<vmem>>, vector<8x8x4xf32>
    %50 = vector.shape_cast %49 : vector<8x8x4xf32> to vector<64x4xf32>
    %51 = arith.truncf %50 : vector<64x4xf32> to vector<64x4xbf16>
    %c4 = arith.constant 4 : index
    %c0_48 = arith.constant 0 : index
    %c0_49 = arith.constant 0 : index
    %52 = vector.load %arg4[%c4, %c0_48, %c0_49] : memref<9x4x8xbf16, #tpu.memory_space<vmem>>, vector<1x4x8xbf16>
    %53 = vector.shape_cast %52 : vector<1x4x8xbf16> to vector<4x8xbf16>
    %cst_50 = arith.constant dense<0.000000e+00> : vector<64x8xf32>
    %54 = tpu.matmul %51, %53, %cst_50 {dimension_numbers = #tpu.dot_dimension_numbers<[1], [0], [0], [1], [0, 0, 1, 1], [], []>} : vector<64x4xbf16>, vector<4x8xbf16>, vector<64x8xf32> -> vector<64x8xf32>
    %55 = arith.addf %48, %54 : vector<64x8xf32>
    %c1_51 = arith.constant 1 : index
    %c9_52 = arith.constant 9 : index
    %c0_53 = arith.constant 0 : index
    %56 = tpu.strided_load %arg10[%c1_51, %c9_52, %c0_53] {strides = array<i32: 2, 2, 1>} : memref<18x32x4xf32, #tpu.memory_space<vmem>>, vector<8x8x4xf32>
    %57 = vector.shape_cast %56 : vector<8x8x4xf32> to vector<64x4xf32>
    %58 = arith.truncf %57 : vector<64x4xf32> to vector<64x4xbf16>
    %c5 = arith.constant 5 : index
    %c0_54 = arith.constant 0 : index
    %c0_55 = arith.constant 0 : index
    %59 = vector.load %arg4[%c5, %c0_54, %c0_55] : memref<9x4x8xbf16, #tpu.memory_space<vmem>>, vector<1x4x8xbf16>
    %60 = vector.shape_cast %59 : vector<1x4x8xbf16> to vector<4x8xbf16>
    %cst_56 = arith.constant dense<0.000000e+00> : vector<64x8xf32>
    %61 = tpu.matmul %58, %60, %cst_56 {dimension_numbers = #tpu.dot_dimension_numbers<[1], [0], [0], [1], [0, 0, 1, 1], [], []>} : vector<64x4xbf16>, vector<4x8xbf16>, vector<64x8xf32> -> vector<64x8xf32>
    %62 = arith.addf %55, %61 : vector<64x8xf32>
    %c2_57 = arith.constant 2 : index
    %c7_58 = arith.constant 7 : index
    %c0_59 = arith.constant 0 : index
    %63 = tpu.strided_load %arg10[%c2_57, %c7_58, %c0_59] {strides = array<i32: 2, 2, 1>} : memref<18x32x4xf32, #tpu.memory_space<vmem>>, vector<8x8x4xf32>
    %64 = vector.shape_cast %63 : vector<8x8x4xf32> to vector<64x4xf32>
    %65 = arith.truncf %64 : vector<64x4xf32> to vector<64x4xbf16>
    %c6 = arith.constant 6 : index
    %c0_60 = arith.constant 0 : index
    %c0_61 = arith.constant 0 : index
    %66 = vector.load %arg4[%c6, %c0_60, %c0_61] : memref<9x4x8xbf16, #tpu.memory_space<vmem>>, vector<1x4x8xbf16>
    %67 = vector.shape_cast %66 : vector<1x4x8xbf16> to vector<4x8xbf16>
    %cst_62 = arith.constant dense<0.000000e+00> : vector<64x8xf32>
    %68 = tpu.matmul %65, %67, %cst_62 {dimension_numbers = #tpu.dot_dimension_numbers<[1], [0], [0], [1], [0, 0, 1, 1], [], []>} : vector<64x4xbf16>, vector<4x8xbf16>, vector<64x8xf32> -> vector<64x8xf32>
    %69 = arith.addf %62, %68 : vector<64x8xf32>
    %c2_63 = arith.constant 2 : index
    %c8_64 = arith.constant 8 : index
    %c0_65 = arith.constant 0 : index
    %70 = tpu.strided_load %arg10[%c2_63, %c8_64, %c0_65] {strides = array<i32: 2, 2, 1>} : memref<18x32x4xf32, #tpu.memory_space<vmem>>, vector<8x8x4xf32>
    %71 = vector.shape_cast %70 : vector<8x8x4xf32> to vector<64x4xf32>
    %72 = arith.truncf %71 : vector<64x4xf32> to vector<64x4xbf16>
    %c7_66 = arith.constant 7 : index
    %c0_67 = arith.constant 0 : index
    %c0_68 = arith.constant 0 : index
    %73 = vector.load %arg4[%c7_66, %c0_67, %c0_68] : memref<9x4x8xbf16, #tpu.memory_space<vmem>>, vector<1x4x8xbf16>
    %74 = vector.shape_cast %73 : vector<1x4x8xbf16> to vector<4x8xbf16>
    %cst_69 = arith.constant dense<0.000000e+00> : vector<64x8xf32>
    %75 = tpu.matmul %72, %74, %cst_69 {dimension_numbers = #tpu.dot_dimension_numbers<[1], [0], [0], [1], [0, 0, 1, 1], [], []>} : vector<64x4xbf16>, vector<4x8xbf16>, vector<64x8xf32> -> vector<64x8xf32>
    %76 = arith.addf %69, %75 : vector<64x8xf32>
    %c2_70 = arith.constant 2 : index
    %c9_71 = arith.constant 9 : index
    %c0_72 = arith.constant 0 : index
    %77 = tpu.strided_load %arg10[%c2_70, %c9_71, %c0_72] {strides = array<i32: 2, 2, 1>} : memref<18x32x4xf32, #tpu.memory_space<vmem>>, vector<8x8x4xf32>
    %78 = vector.shape_cast %77 : vector<8x8x4xf32> to vector<64x4xf32>
    %79 = arith.truncf %78 : vector<64x4xf32> to vector<64x4xbf16>
    %c8_73 = arith.constant 8 : index
    %c0_74 = arith.constant 0 : index
    %c0_75 = arith.constant 0 : index
    %80 = vector.load %arg4[%c8_73, %c0_74, %c0_75] : memref<9x4x8xbf16, #tpu.memory_space<vmem>>, vector<1x4x8xbf16>
    %81 = vector.shape_cast %80 : vector<1x4x8xbf16> to vector<4x8xbf16>
    %cst_76 = arith.constant dense<0.000000e+00> : vector<64x8xf32>
    %82 = tpu.matmul %79, %81, %cst_76 {dimension_numbers = #tpu.dot_dimension_numbers<[1], [0], [0], [1], [0, 0, 1, 1], [], []>} : vector<64x4xbf16>, vector<4x8xbf16>, vector<64x8xf32> -> vector<64x8xf32>
    %83 = arith.addf %76, %82 : vector<64x8xf32>
    %84 = vector.shape_cast %83 : vector<64x8xf32> to vector<8x8x8xf32>
    %c1_77 = arith.constant 1 : index
    %c8_78 = arith.constant 8 : index
    %c0_79 = arith.constant 0 : index
    %85 = tpu.strided_load %arg10[%c1_77, %c8_78, %c0_79] {strides = array<i32: 2, 2, 1>} : memref<18x32x4xf32, #tpu.memory_space<vmem>>, vector<8x8x4xf32>
    %86 = vector.shape_cast %85 : vector<8x8x4xf32> to vector<64x4xf32>
    %87 = arith.truncf %86 : vector<64x4xf32> to vector<64x4xbf16>
    %c0_80 = arith.constant 0 : index
    %c0_81 = arith.constant 0 : index
    %88 = vector.load %arg8[%c0_80, %c0_81] : memref<4x8xbf16, #tpu.memory_space<vmem>>, vector<4x8xbf16>
    %cst_82 = arith.constant dense<0.000000e+00> : vector<64x8xf32>
    %89 = tpu.matmul %87, %88, %cst_82 {dimension_numbers = #tpu.dot_dimension_numbers<[1], [0], [0], [1], [0, 0, 1, 1], [], []>} : vector<64x4xbf16>, vector<4x8xbf16>, vector<64x8xf32> -> vector<64x8xf32>
    %90 = vector.shape_cast %89 : vector<64x8xf32> to vector<8x8x8xf32>
    %c0_83 = arith.constant 0 : index
    %c0_84 = arith.constant 0 : index
    %91 = vector.load %arg5[%c0_83, %c0_84] : memref<1x8xf32, #tpu.memory_space<vmem>>, vector<1x8xf32>
    %92 = vector.shape_cast %91 : vector<1x8xf32> to vector<1x1x8xf32>
    %93 = vector.broadcast %92 : vector<1x1x8xf32> to vector<8x8x8xf32>
    %94 = arith.mulf %84, %93 : vector<8x8x8xf32>
    %c0_85 = arith.constant 0 : index
    %c0_86 = arith.constant 0 : index
    %95 = vector.load %arg6[%c0_85, %c0_86] : memref<1x8xf32, #tpu.memory_space<vmem>>, vector<1x8xf32>
    %96 = vector.shape_cast %95 : vector<1x8xf32> to vector<1x1x8xf32>
    %97 = vector.broadcast %96 : vector<1x1x8xf32> to vector<8x8x8xf32>
    %98 = arith.addf %94, %97 : vector<8x8x8xf32>
    %cst_87 = arith.constant 0.000000e+00 : f32
    %99 = vector.broadcast %cst_87 : f32 to vector<8x8x8xf32>
    %100 = arith.cmpf ogt, %98, %99 : vector<8x8x8xf32>
    %cst_88 = arith.constant 1.000000e-01 : f32
    %101 = vector.broadcast %cst_88 : f32 to vector<8x8x8xf32>
    %102 = arith.mulf %101, %98 : vector<8x8x8xf32>
    %103 = arith.select %100, %98, %102 : vector<8x8x8xi1>, vector<8x8x8xf32>
    %cst_89 = arith.constant 0.000000e+00 : f32
    %104 = vector.broadcast %cst_89 : f32 to vector<10x1x8xf32>
    %c0_90 = arith.constant 0 : index
    %c7_91 = arith.constant 7 : index
    %c0_92 = arith.constant 0 : index
    %105 = vector.load %arg11[%c0_90, %c7_91, %c0_92] : memref<10x24x8xf32, #tpu.memory_space<vmem>>, vector<10x1x8xf32>
    tpu.vector_store %arg11[%c0_90, %c7_91, %c0_92], %104 {strides = array<i32>} : memref<10x24x8xf32, #tpu.memory_space<vmem>>, vector<10x1x8xf32>,
    %c0_93 = arith.constant 0 : index
    %c16 = arith.constant 16 : index
    %c0_94 = arith.constant 0 : index
    %106 = vector.load %arg11[%c0_93, %c16, %c0_94] : memref<10x24x8xf32, #tpu.memory_space<vmem>>, vector<10x1x8xf32>
    tpu.vector_store %arg11[%c0_93, %c16, %c0_94], %104 {strides = array<i32>} : memref<10x24x8xf32, #tpu.memory_space<vmem>>, vector<10x1x8xf32>,
    %cst_95 = arith.constant 0.000000e+00 : f32
    %107 = vector.broadcast %cst_95 : f32 to vector<1x8x8xf32>
    %c0_96 = arith.constant 0 : index
    %c8_97 = arith.constant 8 : index
    %c0_98 = arith.constant 0 : index
    %108 = vector.load %arg11[%c0_96, %c8_97, %c0_98] : memref<10x24x8xf32, #tpu.memory_space<vmem>>, vector<1x8x8xf32>
    tpu.vector_store %arg11[%c0_96, %c8_97, %c0_98], %107 {strides = array<i32>} : memref<10x24x8xf32, #tpu.memory_space<vmem>>, vector<1x8x8xf32>,
    %c9_99 = arith.constant 9 : index
    %c8_100 = arith.constant 8 : index
    %c0_101 = arith.constant 0 : index
    %109 = vector.load %arg11[%c9_99, %c8_100, %c0_101] : memref<10x24x8xf32, #tpu.memory_space<vmem>>, vector<1x8x8xf32>
    tpu.vector_store %arg11[%c9_99, %c8_100, %c0_101], %107 {strides = array<i32>} : memref<10x24x8xf32, #tpu.memory_space<vmem>>, vector<1x8x8xf32>,
    %c1_102 = arith.constant 1 : index
    %c8_103 = arith.constant 8 : index
    %c0_104 = arith.constant 0 : index
    %110 = vector.load %arg11[%c1_102, %c8_103, %c0_104] : memref<10x24x8xf32, #tpu.memory_space<vmem>>, vector<8x8x8xf32>
    tpu.vector_store %arg11[%c1_102, %c8_103, %c0_104], %103 {strides = array<i32>} : memref<10x24x8xf32, #tpu.memory_space<vmem>>, vector<8x8x8xf32>,
    %c0_105 = arith.constant 0 : index
    %c7_106 = arith.constant 7 : index
    %c0_107 = arith.constant 0 : index
    %111 = vector.load %arg11[%c0_105, %c7_106, %c0_107] : memref<10x24x8xf32, #tpu.memory_space<vmem>>, vector<8x8x8xf32>
    %112 = vector.shape_cast %111 : vector<8x8x8xf32> to vector<64x8xf32>
    %113 = arith.truncf %112 : vector<64x8xf32> to vector<64x8xbf16>
    %c0_108 = arith.constant 0 : index
    %c0_109 = arith.constant 0 : index
    %c0_110 = arith.constant 0 : index
    %114 = vector.load %arg7[%c0_108, %c0_109, %c0_110] : memref<9x8x8xbf16, #tpu.memory_space<vmem>>, vector<1x8x8xbf16>
    %115 = vector.shape_cast %114 : vector<1x8x8xbf16> to vector<8x8xbf16>
    %cst_111 = arith.constant dense<0.000000e+00> : vector<64x8xf32>
    %116 = tpu.matmul %113, %115, %cst_111 {dimension_numbers = #tpu.dot_dimension_numbers<[1], [0], [0], [1], [0, 0, 1, 1], [], []>} : vector<64x8xbf16>, vector<8x8xbf16>, vector<64x8xf32> -> vector<64x8xf32>
    %c0_112 = arith.constant 0 : index
    %c8_113 = arith.constant 8 : index
    %c0_114 = arith.constant 0 : index
    %117 = vector.load %arg11[%c0_112, %c8_113, %c0_114] : memref<10x24x8xf32, #tpu.memory_space<vmem>>, vector<8x8x8xf32>
    %118 = vector.shape_cast %117 : vector<8x8x8xf32> to vector<64x8xf32>
    %119 = arith.truncf %118 : vector<64x8xf32> to vector<64x8xbf16>
    %c1_115 = arith.constant 1 : index
    %c0_116 = arith.constant 0 : index
    %c0_117 = arith.constant 0 : index
    %120 = vector.load %arg7[%c1_115, %c0_116, %c0_117] : memref<9x8x8xbf16, #tpu.memory_space<vmem>>, vector<1x8x8xbf16>
    %121 = vector.shape_cast %120 : vector<1x8x8xbf16> to vector<8x8xbf16>
    %cst_118 = arith.constant dense<0.000000e+00> : vector<64x8xf32>
    %122 = tpu.matmul %119, %121, %cst_118 {dimension_numbers = #tpu.dot_dimension_numbers<[1], [0], [0], [1], [0, 0, 1, 1], [], []>} : vector<64x8xbf16>, vector<8x8xbf16>, vector<64x8xf32> -> vector<64x8xf32>
    %123 = arith.addf %116, %122 : vector<64x8xf32>
    %c0_119 = arith.constant 0 : index
    %c9_120 = arith.constant 9 : index
    %c0_121 = arith.constant 0 : index
    %124 = vector.load %arg11[%c0_119, %c9_120, %c0_121] : memref<10x24x8xf32, #tpu.memory_space<vmem>>, vector<8x8x8xf32>
    %125 = vector.shape_cast %124 : vector<8x8x8xf32> to vector<64x8xf32>
    %126 = arith.truncf %125 : vector<64x8xf32> to vector<64x8xbf16>
    %c2_122 = arith.constant 2 : index
    %c0_123 = arith.constant 0 : index
    %c0_124 = arith.constant 0 : index
    %127 = vector.load %arg7[%c2_122, %c0_123, %c0_124] : memref<9x8x8xbf16, #tpu.memory_space<vmem>>, vector<1x8x8xbf16>
    %128 = vector.shape_cast %127 : vector<1x8x8xbf16> to vector<8x8xbf16>
    %cst_125 = arith.constant dense<0.000000e+00> : vector<64x8xf32>
    %129 = tpu.matmul %126, %128, %cst_125 {dimension_numbers = #tpu.dot_dimension_numbers<[1], [0], [0], [1], [0, 0, 1, 1], [], []>} : vector<64x8xbf16>, vector<8x8xbf16>, vector<64x8xf32> -> vector<64x8xf32>
    %130 = arith.addf %123, %129 : vector<64x8xf32>
    %c1_126 = arith.constant 1 : index
    %c7_127 = arith.constant 7 : index
    %c0_128 = arith.constant 0 : index
    %131 = vector.load %arg11[%c1_126, %c7_127, %c0_128] : memref<10x24x8xf32, #tpu.memory_space<vmem>>, vector<8x8x8xf32>
    %132 = vector.shape_cast %131 : vector<8x8x8xf32> to vector<64x8xf32>
    %133 = arith.truncf %132 : vector<64x8xf32> to vector<64x8xbf16>
    %c3_129 = arith.constant 3 : index
    %c0_130 = arith.constant 0 : index
    %c0_131 = arith.constant 0 : index
    %134 = vector.load %arg7[%c3_129, %c0_130, %c0_131] : memref<9x8x8xbf16, #tpu.memory_space<vmem>>, vector<1x8x8xbf16>
    %135 = vector.shape_cast %134 : vector<1x8x8xbf16> to vector<8x8xbf16>
    %cst_132 = arith.constant dense<0.000000e+00> : vector<64x8xf32>
    %136 = tpu.matmul %133, %135, %cst_132 {dimension_numbers = #tpu.dot_dimension_numbers<[1], [0], [0], [1], [0, 0, 1, 1], [], []>} : vector<64x8xbf16>, vector<8x8xbf16>, vector<64x8xf32> -> vector<64x8xf32>
    %137 = arith.addf %130, %136 : vector<64x8xf32>
    %c1_133 = arith.constant 1 : index
    %c8_134 = arith.constant 8 : index
    %c0_135 = arith.constant 0 : index
    %138 = vector.load %arg11[%c1_133, %c8_134, %c0_135] : memref<10x24x8xf32, #tpu.memory_space<vmem>>, vector<8x8x8xf32>
    %139 = vector.shape_cast %138 : vector<8x8x8xf32> to vector<64x8xf32>
    %140 = arith.truncf %139 : vector<64x8xf32> to vector<64x8xbf16>
    %c4_136 = arith.constant 4 : index
    %c0_137 = arith.constant 0 : index
    %c0_138 = arith.constant 0 : index
    %141 = vector.load %arg7[%c4_136, %c0_137, %c0_138] : memref<9x8x8xbf16, #tpu.memory_space<vmem>>, vector<1x8x8xbf16>
    %142 = vector.shape_cast %141 : vector<1x8x8xbf16> to vector<8x8xbf16>
    %cst_139 = arith.constant dense<0.000000e+00> : vector<64x8xf32>
    %143 = tpu.matmul %140, %142, %cst_139 {dimension_numbers = #tpu.dot_dimension_numbers<[1], [0], [0], [1], [0, 0, 1, 1], [], []>} : vector<64x8xbf16>, vector<8x8xbf16>, vector<64x8xf32> -> vector<64x8xf32>
    %144 = arith.addf %137, %143 : vector<64x8xf32>
    %c1_140 = arith.constant 1 : index
    %c9_141 = arith.constant 9 : index
    %c0_142 = arith.constant 0 : index
    %145 = vector.load %arg11[%c1_140, %c9_141, %c0_142] : memref<10x24x8xf32, #tpu.memory_space<vmem>>, vector<8x8x8xf32>
    %146 = vector.shape_cast %145 : vector<8x8x8xf32> to vector<64x8xf32>
    %147 = arith.truncf %146 : vector<64x8xf32> to vector<64x8xbf16>
    %c5_143 = arith.constant 5 : index
    %c0_144 = arith.constant 0 : index
    %c0_145 = arith.constant 0 : index
    %148 = vector.load %arg7[%c5_143, %c0_144, %c0_145] : memref<9x8x8xbf16, #tpu.memory_space<vmem>>, vector<1x8x8xbf16>
    %149 = vector.shape_cast %148 : vector<1x8x8xbf16> to vector<8x8xbf16>
    %cst_146 = arith.constant dense<0.000000e+00> : vector<64x8xf32>
    %150 = tpu.matmul %147, %149, %cst_146 {dimension_numbers = #tpu.dot_dimension_numbers<[1], [0], [0], [1], [0, 0, 1, 1], [], []>} : vector<64x8xbf16>, vector<8x8xbf16>, vector<64x8xf32> -> vector<64x8xf32>
    %151 = arith.addf %144, %150 : vector<64x8xf32>
    %c2_147 = arith.constant 2 : index
    %c7_148 = arith.constant 7 : index
    %c0_149 = arith.constant 0 : index
    %152 = vector.load %arg11[%c2_147, %c7_148, %c0_149] : memref<10x24x8xf32, #tpu.memory_space<vmem>>, vector<8x8x8xf32>
    %153 = vector.shape_cast %152 : vector<8x8x8xf32> to vector<64x8xf32>
    %154 = arith.truncf %153 : vector<64x8xf32> to vector<64x8xbf16>
    %c6_150 = arith.constant 6 : index
    %c0_151 = arith.constant 0 : index
    %c0_152 = arith.constant 0 : index
    %155 = vector.load %arg7[%c6_150, %c0_151, %c0_152] : memref<9x8x8xbf16, #tpu.memory_space<vmem>>, vector<1x8x8xbf16>
    %156 = vector.shape_cast %155 : vector<1x8x8xbf16> to vector<8x8xbf16>
    %cst_153 = arith.constant dense<0.000000e+00> : vector<64x8xf32>
    %157 = tpu.matmul %154, %156, %cst_153 {dimension_numbers = #tpu.dot_dimension_numbers<[1], [0], [0], [1], [0, 0, 1, 1], [], []>} : vector<64x8xbf16>, vector<8x8xbf16>, vector<64x8xf32> -> vector<64x8xf32>
    %158 = arith.addf %151, %157 : vector<64x8xf32>
    %c2_154 = arith.constant 2 : index
    %c8_155 = arith.constant 8 : index
    %c0_156 = arith.constant 0 : index
    %159 = vector.load %arg11[%c2_154, %c8_155, %c0_156] : memref<10x24x8xf32, #tpu.memory_space<vmem>>, vector<8x8x8xf32>
    %160 = vector.shape_cast %159 : vector<8x8x8xf32> to vector<64x8xf32>
    %161 = arith.truncf %160 : vector<64x8xf32> to vector<64x8xbf16>
    %c7_157 = arith.constant 7 : index
    %c0_158 = arith.constant 0 : index
    %c0_159 = arith.constant 0 : index
    %162 = vector.load %arg7[%c7_157, %c0_158, %c0_159] : memref<9x8x8xbf16, #tpu.memory_space<vmem>>, vector<1x8x8xbf16>
    %163 = vector.shape_cast %162 : vector<1x8x8xbf16> to vector<8x8xbf16>
    %cst_160 = arith.constant dense<0.000000e+00> : vector<64x8xf32>
    %164 = tpu.matmul %161, %163, %cst_160 {dimension_numbers = #tpu.dot_dimension_numbers<[1], [0], [0], [1], [0, 0, 1, 1], [], []>} : vector<64x8xbf16>, vector<8x8xbf16>, vector<64x8xf32> -> vector<64x8xf32>
    %165 = arith.addf %158, %164 : vector<64x8xf32>
    %c2_161 = arith.constant 2 : index
    %c9_162 = arith.constant 9 : index
    %c0_163 = arith.constant 0 : index
    %166 = vector.load %arg11[%c2_161, %c9_162, %c0_163] : memref<10x24x8xf32, #tpu.memory_space<vmem>>, vector<8x8x8xf32>
    %167 = vector.shape_cast %166 : vector<8x8x8xf32> to vector<64x8xf32>
    %168 = arith.truncf %167 : vector<64x8xf32> to vector<64x8xbf16>
    %c8_164 = arith.constant 8 : index
    %c0_165 = arith.constant 0 : index
    %c0_166 = arith.constant 0 : index
    %169 = vector.load %arg7[%c8_164, %c0_165, %c0_166] : memref<9x8x8xbf16, #tpu.memory_space<vmem>>, vector<1x8x8xbf16>
    %170 = vector.shape_cast %169 : vector<1x8x8xbf16> to vector<8x8xbf16>
    %cst_167 = arith.constant dense<0.000000e+00> : vector<64x8xf32>
    %171 = tpu.matmul %168, %170, %cst_167 {dimension_numbers = #tpu.dot_dimension_numbers<[1], [0], [0], [1], [0, 0, 1, 1], [], []>} : vector<64x8xbf16>, vector<8x8xbf16>, vector<64x8xf32> -> vector<64x8xf32>
    %172 = arith.addf %165, %171 : vector<64x8xf32>
    %173 = vector.shape_cast %172 : vector<64x8xf32> to vector<8x8x8xf32>
    %174 = arith.addf %173, %90 : vector<8x8x8xf32>
    %c0_168 = arith.constant 0 : index
    %c0_169 = arith.constant 0 : index
    %c0_170 = arith.constant 0 : index
    %c0_171 = arith.constant 0 : index
    %175 = vector.load %arg9[%c0_168, %c0_169, %c0_170, %c0_171] : memref<1x8x8x8xf32, #tpu.memory_space<vmem>>, vector<1x8x8x8xf32>
    %176 = vector.shape_cast %175 : vector<1x8x8x8xf32> to vector<8x8x8xf32>
    %177 = vector.shape_cast %174 : vector<8x8x8xf32> to vector<1x8x8x8xf32>
    tpu.vector_store %arg9[%c0_168, %c0_169, %c0_170, %c0_171], %177 {strides = array<i32>} : memref<1x8x8x8xf32, #tpu.memory_space<vmem>>, vector<1x8x8x8xf32>,
    return
  }
  func.func @transform_0(%arg0: i32) -> (i32, i32, i32, i32) {
    %c0_i32 = arith.constant 0 : i32
    %c0_i32_0 = arith.constant 0 : i32
    %c0_i32_1 = arith.constant 0 : i32
    %c0_i32_2 = arith.constant 0 : i32
    return %arg0, %c0_i32, %c0_i32_0, %c0_i32_1 : i32, i32, i32, i32
  }
  func.func @transform_1(%arg0: i32) -> (i32, i32) {
    %c0_i32 = arith.constant 0 : i32
    %c0_i32_0 = arith.constant 0 : i32
    %c0_i32_1 = arith.constant 0 : i32
    return %c0_i32, %c0_i32_0 : i32, i32
  }
  func.func @transform_2(%arg0: i32) -> (i32, i32) {
    %c0_i32 = arith.constant 0 : i32
    %c0_i32_0 = arith.constant 0 : i32
    %c0_i32_1 = arith.constant 0 : i32
    return %c0_i32, %c0_i32_0 : i32, i32
  }
  func.func @transform_3(%arg0: i32) -> (i32, i32, i32) {
    %c0_i32 = arith.constant 0 : i32
    %c0_i32_0 = arith.constant 0 : i32
    %c0_i32_1 = arith.constant 0 : i32
    %c0_i32_2 = arith.constant 0 : i32
    return %c0_i32, %c0_i32_0, %c0_i32_1 : i32, i32, i32
  }
  func.func @transform_4(%arg0: i32) -> (i32, i32) {
    %c0_i32 = arith.constant 0 : i32
    %c0_i32_0 = arith.constant 0 : i32
    %c0_i32_1 = arith.constant 0 : i32
    return %c0_i32, %c0_i32_0 : i32, i32
  }
  func.func @transform_5(%arg0: i32) -> (i32, i32) {
    %c0_i32 = arith.constant 0 : i32
    %c0_i32_0 = arith.constant 0 : i32
    %c0_i32_1 = arith.constant 0 : i32
    return %c0_i32, %c0_i32_0 : i32, i32
  }
  func.func @transform_6(%arg0: i32) -> (i32, i32, i32) {
    %c0_i32 = arith.constant 0 : i32
    %c0_i32_0 = arith.constant 0 : i32
    %c0_i32_1 = arith.constant 0 : i32
    %c0_i32_2 = arith.constant 0 : i32
    return %c0_i32, %c0_i32_0, %c0_i32_1 : i32, i32, i32
  }
  func.func @transform_7(%arg0: i32) -> (i32, i32) {
    %c0_i32 = arith.constant 0 : i32
    %c0_i32_0 = arith.constant 0 : i32
    %c0_i32_1 = arith.constant 0 : i32
    return %c0_i32, %c0_i32_0 : i32, i32
  }
  func.func @transform_8(%arg0: i32) -> (i32, i32, i32, i32) {
    %c0_i32 = arith.constant 0 : i32
    %c0_i32_0 = arith.constant 0 : i32
    %c0_i32_1 = arith.constant 0 : i32
    %c0_i32_2 = arith.constant 0 : i32
    return %arg0, %c0_i32, %c0_i32_0, %c0_i32_1 : i32, i32, i32, i32
  }
}

</mosaic_0001>

<llo_original>
// kernel: tpu_custom_call.1
$region0: #{tpu_custom_call.1}
  #allocation0 [shape = 'u32[]', space=smem, size = 0x4, offset = 0x4, fixed_abs, tag = 'smem constant byte address 0x4 - core index']
  #allocation1 [shape = 'u32[144,128]{1,0:T(1,128)}', space=vmem, size = 0x12000, scoped, tag = 'internal scratch']
  #allocation2 [shape = 'f32[18,32,4]{2,1,0:T(8,128)}', space=vmem, size = 0x48000, scoped, tag = 'scratch operand']
  #allocation3 [shape = 'f32[10,24,8]{2,1,0:T(8,128)}', space=vmem, size = 0x1e000, scoped, tag = 'scratch operand']
  %s0 = inlined_call_operand.vmem [shape: f32[2,16,16,4], index: 0, kind: input, shape index: {}]
  %s1 = inlined_call_operand.vmem [shape: f32[1,4], index: 1, kind: input, shape index: {}]
  %s2 = inlined_call_operand.vmem [shape: f32[1,4], index: 2, kind: input, shape index: {}]
  %s3 = inlined_call_operand.vmem [shape: bf16[9,4,8], index: 3, kind: input, shape index: {}]
  %s4 = inlined_call_operand.vmem [shape: f32[1,8], index: 4, kind: input, shape index: {}]
  %s5 = inlined_call_operand.vmem [shape: f32[1,8], index: 5, kind: input, shape index: {}]
  %s6 = inlined_call_operand.vmem [shape: bf16[9,8,8], index: 6, kind: input, shape index: {}]
  %s7 = inlined_call_operand.vmem [shape: bf16[4,8], index: 7, kind: input, shape index: {}]
  %s8 = inlined_call_operand.hbm [shape: f32[2,8,8,8], index: 8, kind: output, shape index: {}]
  %s9 = sld [smem:[#allocation0]]
  $region65: #{tpu_custom_call.1} parent=0
    _
  %s11 = ssub.s32 1, %s9
  %s12 = scalar_select 0, %s11, %s9
  $region1: #{tpu_custom_call.1} parent=0
    #allocation4 [shape = 'u8[65536]{0}', space=vmem, size = 0x10000, scoped, tag = 'output window, operand 0']
    #allocation5 [shape = 's32[2]{0}', space=sflag, size = 0x8, scoped, tag = 'scoped memory for tpu_custom_call.1']
    %13 = vsyncpa [#allocation5], 0
    %s14 = scalar_lea.sflag [#allocation5], 1
    %15 = vsyncpa %s14, 0
    loop: start=0, step=1, limit=4
    $region2: #{tpu_custom_call.1} parent=1 // loop_pre_header
      _
    $region3: #{tpu_custom_call.1} parent=1 // loop_header
      %s17 = sphi 0, %s21
      %p18 = scmp.ge.s32.totalorder %s17, 4
      %s27 = sphi 0, %s29
      %s30 = sphi 0, %s27
      %s31 = sphi 0, %s30
      %s47 = sphi 0, %s31
      %s51 = sphi 0, %s51
      %s53 = sphi 0, %s51
      %s54 = sphi 0, %s53
      %s68 = sphi 0, %s54
      %s72 = sphi 0, %s72
      %s74 = sphi 0, %s72
      %s75 = sphi 0, %s74
      %s89 = sphi 0, %s75
      %s93 = sphi 0, %s93
      %s95 = sphi 0, %s93
      %s96 = sphi 0, %s95
      %s110 = sphi 0, %s96
      %s114 = sphi 0, %s114
      %s116 = sphi 0, %s114
      %s117 = sphi 0, %s116
      %s131 = sphi 0, %s117
      %s135 = sphi 0, %s135
      %s137 = sphi 0, %s135
      %s138 = sphi 0, %s137
      %s152 = sphi 0, %s138
      %s156 = sphi 0, %s156
      %s158 = sphi 0, %s156
      %s159 = sphi 0, %s158
      %s173 = sphi 0, %s159
      %s177 = sphi 0, %s177
      %s179 = sphi 0, %s177
      %s180 = sphi 0, %s179
      %s194 = sphi 0, %s180
      %s200 = sphi 0, %s202
      %s203 = sphi 0, %s200
      %s204 = sphi 0, %s203
      %s220 = sphi 0, %s204
    $region4: #{tpu_custom_call.1} parent=1 // loop_header_branch
      %20 = sbr.rel (%p18) target = $region8
    $region5: #{tpu_custom_call.1} parent=1 // loop_body
      %s22 = ssub.s32 %s17, 1
      %s23 = ssub.s32 %s17, 2
      %s24 = sadd.s32 %s17, 1
      %s25 = ssub.s32 %s17, %s24
      %p26 = scmp.eq.s32.totalorder %s25, 0
      %s28 = sadd.s32 %s27, 1
      %s29 = scalar_select %p26, %s27, %s28
      %p32 = pneg %p26
      %p33 = scmp.eq.s32.totalorder %s17, 1
      %p34 = por %p32, %p33
      %p35 = scmp.ne.s32.totalorder %s27, %s30
      %p36 = scmp.eq.s32.totalorder %s17, 0
      %p37 = por %p35, %p36
      %p38 = scmp.ne.s32.totalorder %s27, %s30
      %p39 = scmp.eq.s32.totalorder %s22, 1
      %p40 = por %p38, %p39
      %p41 = scmp.ne.s32.totalorder %s30, %s31
      %p42 = scmp.eq.s32.totalorder %s22, 0
      %p43 = por %p41, %p42
      %p44 = scmp.ne.s32.totalorder %s30, %s31
      %p45 = scmp.eq.s32.totalorder %s23, 1
      %p46 = por %p44, %p45
      %p48 = scmp.ne.s32.totalorder %s31, %s47
      %p49 = scmp.eq.s32.totalorder %s23, 0
      %p50 = por %p48, %p49
      %s52 = sadd.s32 %s51, 1
      %p55 = scmp.eq.s32.totalorder %s17, 1
      %p56 = scmp.ne.s32.totalorder %s51, %s53
      %p57 = scmp.eq.s32.totalorder %s17, 0
      %p58 = por %p56, %p57
      %p59 = scmp.ne.s32.totalorder %s51, %s53
      %p60 = scmp.eq.s32.totalorder %s22, 1
      %p61 = por %p59, %p60
      %p62 = scmp.ne.s32.totalorder %s53, %s54
      %p63 = scmp.eq.s32.totalorder %s22, 0
      %p64 = por %p62, %p63
      %p65 = scmp.ne.s32.totalorder %s53, %s54
      %p66 = scmp.eq.s32.totalorder %s23, 1
      %p67 = por %p65, %p66
      %p69 = scmp.ne.s32.totalorder %s54, %s68
      %p70 = scmp.eq.s32.totalorder %s23, 0
      %p71 = por %p69, %p70
      %s73 = sadd.s32 %s72, 1
      %p76 = scmp.eq.s32.totalorder %s17, 1
      %p77 = scmp.ne.s32.totalorder %s72, %s74
      %p78 = scmp.eq.s32.totalorder %s17, 0
      %p79 = por %p77, %p78
      %p80 = scmp.ne.s32.totalorder %s72, %s74
      %p81 = scmp.eq.s32.totalorder %s22, 1
      %p82 = por %p80, %p81
      %p83 = scmp.ne.s32.totalorder %s74, %s75
      %p84 = scmp.eq.s32.totalorder %s22, 0
      %p85 = por %p83, %p84
      %p86 = scmp.ne.s32.totalorder %s74, %s75
      %p87 = scmp.eq.s32.totalorder %s23, 1
      %p88 = por %p86, %p87
      %p90 = scmp.ne.s32.totalorder %s75, %s89
      %p91 = scmp.eq.s32.totalorder %s23, 0
      %p92 = por %p90, %p91
      %s94 = sadd.s32 %s93, 1
      %p97 = scmp.eq.s32.totalorder %s17, 1
      %p98 = scmp.ne.s32.totalorder %s93, %s95
      %p99 = scmp.eq.s32.totalorder %s17, 0
      %p100 = por %p98, %p99
      %p101 = scmp.ne.s32.totalorder %s93, %s95
      %p102 = scmp.eq.s32.totalorder %s22, 1
      %p103 = por %p101, %p102
      %p104 = scmp.ne.s32.totalorder %s95, %s96
      %p105 = scmp.eq.s32.totalorder %s22, 0
      %p106 = por %p104, %p105
      %p107 = scmp.ne.s32.totalorder %s95, %s96
      %p108 = scmp.eq.s32.totalorder %s23, 1
      %p109 = por %p107, %p108
      %p111 = scmp.ne.s32.totalorder %s96, %s110
      %p112 = scmp.eq.s32.totalorder %s23, 0
      %p113 = por %p111, %p112
      %s115 = sadd.s32 %s114, 1
      %p118 = scmp.eq.s32.totalorder %s17, 1
      %p119 = scmp.ne.s32.totalorder %s114, %s116
      %p120 = scmp.eq.s32.totalorder %s17, 0
      %p121 = por %p119, %p120
      %p122 = scmp.ne.s32.totalorder %s114, %s116
      %p123 = scmp.eq.s32.totalorder %s22, 1
      %p124 = por %p122, %p123
      %p125 = scmp.ne.s32.totalorder %s116, %s117
      %p126 = scmp.eq.s32.totalorder %s22, 0
      %p127 = por %p125, %p126
      %p128 = scmp.ne.s32.totalorder %s116, %s117
      %p129 = scmp.eq.s32.totalorder %s23, 1
      %p130 = por %p128, %p129
      %p132 = scmp.ne.s32.totalorder %s117, %s131
      %p133 = scmp.eq.s32.totalorder %s23, 0
      %p134 = por %p132, %p133
      %s136 = sadd.s32 %s135, 1
      %p139 = scmp.eq.s32.totalorder %s17, 1
      %p140 = scmp.ne.s32.totalorder %s135, %s137
      %p141 = scmp.eq.s32.totalorder %s17, 0
      %p142 = por %p140, %p141
      %p143 = scmp.ne.s32.totalorder %s135, %s137
      %p144 = scmp.eq.s32.totalorder %s22, 1
      %p145 = por %p143, %p144
      %p146 = scmp.ne.s32.totalorder %s137, %s138
      %p147 = scmp.eq.s32.totalorder %s22, 0
      %p148 = por %p146, %p147
      %p149 = scmp.ne.s32.totalorder %s137, %s138
      %p150 = scmp.eq.s32.totalorder %s23, 1
      %p151 = por %p149, %p150
      %p153 = scmp.ne.s32.totalorder %s138, %s152
      %p154 = scmp.eq.s32.totalorder %s23, 0
      %p155 = por %p153, %p154
      %s157 = sadd.s32 %s156, 1
      %p160 = scmp.eq.s32.totalorder %s17, 1
      %p161 = scmp.ne.s32.totalorder %s156, %s158
      %p162 = scmp.eq.s32.totalorder %s17, 0
      %p163 = por %p161, %p162
      %p164 = scmp.ne.s32.totalorder %s156, %s158
      %p165 = scmp.eq.s32.totalorder %s22, 1
      %p166 = por %p164, %p165
      %p167 = scmp.ne.s32.totalorder %s158, %s159
      %p168 = scmp.eq.s32.totalorder %s22, 0
      %p169 = por %p167, %p168
      %p170 = scmp.ne.s32.totalorder %s158, %s159
      %p171 = scmp.eq.s32.totalorder %s23, 1
      %p172 = por %p170, %p171
      %p174 = scmp.ne.s32.totalorder %s159, %s173
      %p175 = scmp.eq.s32.totalorder %s23, 0
      %p176 = por %p174, %p175
      %s178 = sadd.s32 %s177, 1
      %p181 = scmp.eq.s32.totalorder %s17, 1
      %p182 = scmp.ne.s32.totalorder %s177, %s179
      %p183 = scmp.eq.s32.totalorder %s17, 0
      %p184 = por %p182, %p183
      %p185 = scmp.ne.s32.totalorder %s177, %s179
      %p186 = scmp.eq.s32.totalorder %s22, 1
      %p187 = por %p185, %p186
      %p188 = scmp.ne.s32.totalorder %s179, %s180
      %p189 = scmp.eq.s32.totalorder %s22, 0
      %p190 = por %p188, %p189
      %p191 = scmp.ne.s32.totalorder %s179, %s180
      %p192 = scmp.eq.s32.totalorder %s23, 1
      %p193 = por %p191, %p192
      %p195 = scmp.ne.s32.totalorder %s180, %s194
      %p196 = scmp.eq.s32.totalorder %s23, 0
      %p197 = por %p195, %p196
      %s198 = ssub.s32 %s17, %s24
      %p199 = scmp.eq.s32.totalorder %s198, 0
      %s201 = sadd.s32 %s200, 1
      %s202 = scalar_select %p199, %s200, %s201
      %p205 = pneg %p199
      %p206 = scmp.eq.s32.totalorder %s17, 1
      %p207 = por %p205, %p206
      %p208 = scmp.ne.s32.totalorder %s200, %s203
      %p209 = scmp.eq.s32.totalorder %s17, 0
      %p210 = por %p208, %p209
      %p211 = scmp.ne.s32.totalorder %s200, %s203
      %p212 = scmp.eq.s32.totalorder %s22, 1
      %p213 = por %p211, %p212
      %p214 = scmp.ne.s32.totalorder %s203, %s204
      %p215 = scmp.eq.s32.totalorder %s22, 0
      %p216 = por %p214, %p215
      %p217 = scmp.ne.s32.totalorder %s203, %s204
      %p218 = scmp.eq.s32.totalorder %s23, 1
      %p219 = por %p217, %p218
      %p221 = scmp.ne.s32.totalorder %s204, %s220
      %p222 = scmp.eq.s32.totalorder %s23, 0
      %p223 = por %p221, %p222
      %p224 = scmp.le.s32.totalorder 1, %s17
      %p225 = scmp.lt.s32.totalorder %s17, 3
      %p226 = pnand %p224, %p225
      %p227 = pneg %p226
      // Predicated region
      $region9: #{tpu_custom_call.1} parent=5 // pred_check
        _
      $region10: #{tpu_custom_call.1} parent=5 // pred_check_branch
        %229 = sbr.rel (%p226) target = $region12
      $region11: #{tpu_custom_call.1} parent=5 // pred_region
        %s230 = ssub.s32 %s17, 1
        // Predicated region
        $region13: #{tpu_custom_call.1} parent=11 // pred_check
          %p231 = pneg %p64
        $region14: #{tpu_custom_call.1} parent=11 // pred_check_branch
          %233 = sbr.rel (%p231) target = $region16
        $region15: #{tpu_custom_call.1} parent=11 // pred_region
          _
        $region16: #{tpu_custom_call.1} parent=11 // pred_fallthru
          _
        // Predicated region
        $region17: #{tpu_custom_call.1} parent=11 // pred_check
          %p234 = pneg %p85
        $region18: #{tpu_custom_call.1} parent=11 // pred_check_branch
          %236 = sbr.rel (%p234) target = $region20
        $region19: #{tpu_custom_call.1} parent=11 // pred_region
          _
        $region20: #{tpu_custom_call.1} parent=11 // pred_fallthru
          _
        // Predicated region
        $region21: #{tpu_custom_call.1} parent=11 // pred_check
          %p237 = pneg %p106
        $region22: #{tpu_custom_call.1} parent=11 // pred_check_branch
          %239 = sbr.rel (%p237) target = $region24
        $region23: #{tpu_custom_call.1} parent=11 // pred_region
          _
        $region24: #{tpu_custom_call.1} parent=11 // pred_fallthru
          _
        // Predicated region
        $region25: #{tpu_custom_call.1} parent=11 // pred_check
          %p240 = pneg %p127
        $region26: #{tpu_custom_call.1} parent=11 // pred_check_branch
          %242 = sbr.rel (%p240) target = $region28
        $region27: #{tpu_custom_call.1} parent=11 // pred_region
          _
        $region28: #{tpu_custom_call.1} parent=11 // pred_fallthru
          _
        // Predicated region
        $region29: #{tpu_custom_call.1} parent=11 // pred_check
          %p243 = pneg %p148
        $region30: #{tpu_custom_call.1} parent=11 // pred_check_branch
          %245 = sbr.rel (%p243) target = $region32
        $region31: #{tpu_custom_call.1} parent=11 // pred_region
          _
        $region32: #{tpu_custom_call.1} parent=11 // pred_fallthru
          _
        // Predicated region
        $region33: #{tpu_custom_call.1} parent=11 // pred_check
          %p246 = pneg %p169
        $region34: #{tpu_custom_call.1} parent=11 // pred_check_branch
          %248 = sbr.rel (%p246) target = $region36
        $region35: #{tpu_custom_call.1} parent=11 // pred_region
          _
        $region36: #{tpu_custom_call.1} parent=11 // pred_fallthru
          _
        // Predicated region
        $region37: #{tpu_custom_call.1} parent=11 // pred_check
          %p249 = pneg %p190
        $region38: #{tpu_custom_call.1} parent=11 // pred_check_branch
          %251 = sbr.rel (%p249) target = $region40
        $region39: #{tpu_custom_call.1} parent=11 // pred_region
          _
        $region40: #{tpu_custom_call.1} parent=11 // pred_fallthru
          _
      $region12: #{tpu_custom_call.1} parent=5 // pred_fallthru
        _
      %p252 = scmp.lt.s32.totalorder %s17, 2
      // Predicated region
      $region41: #{tpu_custom_call.1} parent=5 // pred_check
        %p253 = pneg %p252
      $region42: #{tpu_custom_call.1} parent=5 // pred_check_branch
        %255 = sbr.rel (%p253) target = $region44
      $region43: #{tpu_custom_call.1} parent=5 // pred_region
        // Predicated region
        $region45: #{tpu_custom_call.1} parent=43 // pred_check
          %p256 = pneg %p37
        $region46: #{tpu_custom_call.1} parent=43 // pred_check_branch
          %258 = sbr.rel (%p256) target = $region48
        $region47: #{tpu_custom_call.1} parent=43 // pred_region
          %p259 = scmp.lt.s32.totalorder %s17, 1
          %s260 = scalar_select %p259, %s17, 1
          %s261 = smul.addr %s260, 32
          %s262 = smul.addr %s261, 8
          %s263 = scalar_lea.vmem %s0, %s262
        $region48: #{tpu_custom_call.1} parent=43 // pred_fallthru
          _
      $region44: #{tpu_custom_call.1} parent=5 // pred_fallthru
        _
      %p264 = scmp.le.s32.totalorder 1, %s17
      %p265 = scmp.lt.s32.totalorder %s17, 3
      %p266 = pnand %p264, %p265
      %p267 = pneg %p266
      // Predicated region
      $region49: #{tpu_custom_call.1} parent=5 // pred_check
        _
      $region50: #{tpu_custom_call.1} parent=5 // pred_check_branch
        %269 = sbr.rel (%p266) target = $region52
      $region51: #{tpu_custom_call.1} parent=5 // pred_region
        %s270 = ssub.s32 %s17, 1
        %p271 = scmp.lt.s32.totalorder %s22, 1
        %s272 = scalar_select %p271, %s22, 1
        %s273 = smul.addr %s272, 32
        %s274 = smul.addr %s273, 8
        %s275 = scalar_lea.vmem %s0, %s274
        %p276 = pneg %p43
        %p277 = pneg %p40
        %p278 = pneg %p64
        %p279 = pneg %p61
        %p280 = pneg %p85
        %p281 = pneg %p82
        %p282 = pneg %p106
        %p283 = pneg %p103
        %p284 = pneg %p127
        %p285 = pneg %p124
        %p286 = pneg %p148
        %p287 = pneg %p145
        %p288 = pneg %p169
        %p289 = pneg %p166
        %p290 = pneg %p190
        %p291 = pneg %p187
        %p292 = pneg %p216
        %p293 = pneg %p213
        %s294 = sand.u32 %s203, 1
        %s295 = scalar_lea.sflag [#allocation5], %s294
        %s296 = sand.u32 %s203, 1
        %s297 = smul.addr %s296, 64
        %s298 = scalar_lea.vmem [#allocation4], %s297
        %p299 = scmp.lt.s32.totalorder %s22, 1
        %s300 = scalar_select %p299, %s22, 1
        %s301 = smul.addr %s300, 32
        %s302 = smul.addr %s301, 8
        %s303 = scalar_lea.vmem %s0, %s302
        %v305 = vld [vmem:[%s303] sm:$0xff]
        %v306 = vld [vmem:[%s303 + $0x8] sm:$0xff]
        %v307 = vld [vmem:[%s303 + $0x10] sm:$0xff]
        %v308 = vld [vmem:[%s303 + $0x18] sm:$0xff]
        %v309 = vld [vmem:[%s303 + $0x20] sm:$0xff]
        %v310 = vld [vmem:[%s303 + $0x28] sm:$0xff]
        %v311 = vld [vmem:[%s303 + $0x30] sm:$0xff]
        %v312 = vld [vmem:[%s303 + $0x38] sm:$0xff]
        %v313 = vld [vmem:[%s303 + $0x40] sm:$0xff]
        %v314 = vld [vmem:[%s303 + $0x48] sm:$0xff]
        %v315 = vld [vmem:[%s303 + $0x50] sm:$0xff]
        %v316 = vld [vmem:[%s303 + $0x58] sm:$0xff]
        %v317 = vld [vmem:[%s303 + $0x60] sm:$0xff]
        %v318 = vld [vmem:[%s303 + $0x68] sm:$0xff]
        %v319 = vld [vmem:[%s303 + $0x70] sm:$0xff]
        %v320 = vld [vmem:[%s303 + $0x78] sm:$0xff]
        %v321 = vld [vmem:[%s303 + $0x80] sm:$0xff]
        %v322 = vld [vmem:[%s303 + $0x88] sm:$0xff]
        %v323 = vld [vmem:[%s303 + $0x90] sm:$0xff]
        %v324 = vld [vmem:[%s303 + $0x98] sm:$0xff]
        %v325 = vld [vmem:[%s303 + $0xa0] sm:$0xff]
        %v326 = vld [vmem:[%s303 + $0xa8] sm:$0xff]
        %v327 = vld [vmem:[%s303 + $0xb0] sm:$0xff]
        %v328 = vld [vmem:[%s303 + $0xb8] sm:$0xff]
        %v329 = vld [vmem:[%s303 + $0xc0] sm:$0xff]
        %v330 = vld [vmem:[%s303 + $0xc8] sm:$0xff]
        %v331 = vld [vmem:[%s303 + $0xd0] sm:$0xff]
        %v332 = vld [vmem:[%s303 + $0xd8] sm:$0xff]
        %v333 = vld [vmem:[%s303 + $0xe0] sm:$0xff]
        %v334 = vld [vmem:[%s303 + $0xe8] sm:$0xff]
        %v335 = vld [vmem:[%s303 + $0xf0] sm:$0xff]
        %v336 = vld [vmem:[%s303 + $0xf8] sm:$0xff]
        %v337 = vld [vmem:[%s1] sm:$0x1]
        %v339 = vlaneseq
        %v340 = vshrl.u32 %v339, 7
        %v341 = vsub.s32 0, %v340
        %v342 = vrot.slane %v337, %v341
        %v344 = vmul.f32 %v305, %v342
        %v345 = vmul.f32 %v306, %v342
        %v346 = vmul.f32 %v307, %v342
        %v347 = vmul.f32 %v308, %v342
        %v348 = vmul.f32 %v309, %v342
        %v349 = vmul.f32 %v310, %v342
        %v350 = vmul.f32 %v311, %v342
        %v351 = vmul.f32 %v312, %v342
        %v352 = vmul.f32 %v313, %v342
        %v353 = vmul.f32 %v314, %v342
        %v354 = vmul.f32 %v315, %v342
        %v355 = vmul.f32 %v316, %v342
        %v356 = vmul.f32 %v317, %v342
        %v357 = vmul.f32 %v318, %v342
        %v358 = vmul.f32 %v319, %v342
        %v359 = vmul.f32 %v320, %v342
        %v360 = vmul.f32 %v321, %v342
        %v361 = vmul.f32 %v322, %v342
        %v362 = vmul.f32 %v323, %v342
        %v363 = vmul.f32 %v324, %v342
        %v364 = vmul.f32 %v325, %v342
        %v365 = vmul.f32 %v326, %v342
        %v366 = vmul.f32 %v327, %v342
        %v367 = vmul.f32 %v328, %v342
        %v368 = vmul.f32 %v329, %v342
        %v369 = vmul.f32 %v330, %v342
        %v370 = vmul.f32 %v331, %v342
        %v371 = vmul.f32 %v332, %v342
        %v372 = vmul.f32 %v333, %v342
        %v373 = vmul.f32 %v334, %v342
        %v374 = vmul.f32 %v335, %v342
        %v375 = vmul.f32 %v336, %v342
        %v376 = vld [vmem:[%s2] sm:$0x1]
        %v378 = vlaneseq
        %v379 = vshrl.u32 %v378, 7
        %v380 = vsub.s32 0, %v379
        %v381 = vrot.slane %v376, %v380
        %v383 = vadd.f32 %v344, %v381
        %v384 = vadd.f32 %v345, %v381
        %v385 = vadd.f32 %v346, %v381
        %v386 = vadd.f32 %v347, %v381
        %v387 = vadd.f32 %v348, %v381
        %v388 = vadd.f32 %v349, %v381
        %v389 = vadd.f32 %v350, %v381
        %v390 = vadd.f32 %v351, %v381
        %v391 = vadd.f32 %v352, %v381
        %v392 = vadd.f32 %v353, %v381
        %v393 = vadd.f32 %v354, %v381
        %v394 = vadd.f32 %v355, %v381
        %v395 = vadd.f32 %v356, %v381
        %v396 = vadd.f32 %v357, %v381
        %v397 = vadd.f32 %v358, %v381
        %v398 = vadd.f32 %v359, %v381
        %v399 = vadd.f32 %v360, %v381
        %v400 = vadd.f32 %v361, %v381
        %v401 = vadd.f32 %v362, %v381
        %v402 = vadd.f32 %v363, %v381
        %v403 = vadd.f32 %v364, %v381
        %v404 = vadd.f32 %v365, %v381
        %v405 = vadd.f32 %v366, %v381
        %v406 = vadd.f32 %v367, %v381
        %v407 = vadd.f32 %v368, %v381
        %v408 = vadd.f32 %v369, %v381
        %v409 = vadd.f32 %v370, %v381
        %v410 = vadd.f32 %v371, %v381
        %v411 = vadd.f32 %v372, %v381
        %v412 = vadd.f32 %v373, %v381
        %v413 = vadd.f32 %v374, %v381
        %v414 = vadd.f32 %v375, %v381
        %vm415 = vcmp.gt.f32.partialorder %v383, 0.0
        %vm416 = vcmp.gt.f32.partialorder %v384, 0.0
        %vm417 = vcmp.gt.f32.partialorder %v385, 0.0
        %vm418 = vcmp.gt.f32.partialorder %v386, 0.0
        %vm419 = vcmp.gt.f32.partialorder %v387, 0.0
        %vm420 = vcmp.gt.f32.partialorder %v388, 0.0
        %vm421 = vcmp.gt.f32.partialorder %v389, 0.0
        %vm422 = vcmp.gt.f32.partialorder %v390, 0.0
        %vm423 = vcmp.gt.f32.partialorder %v391, 0.0
        %vm424 = vcmp.gt.f32.partialorder %v392, 0.0
        %vm425 = vcmp.gt.f32.partialorder %v393, 0.0
        %vm426 = vcmp.gt.f32.partialorder %v394, 0.0
        %vm427 = vcmp.gt.f32.partialorder %v395, 0.0
        %vm428 = vcmp.gt.f32.partialorder %v396, 0.0
        %vm429 = vcmp.gt.f32.partialorder %v397, 0.0
        %vm430 = vcmp.gt.f32.partialorder %v398, 0.0
        %vm431 = vcmp.gt.f32.partialorder %v399, 0.0
        %vm432 = vcmp.gt.f32.partialorder %v400, 0.0
        %vm433 = vcmp.gt.f32.partialorder %v401, 0.0
        %vm434 = vcmp.gt.f32.partialorder %v402, 0.0
        %vm435 = vcmp.gt.f32.partialorder %v403, 0.0
        %vm436 = vcmp.gt.f32.partialorder %v404, 0.0
        %vm437 = vcmp.gt.f32.partialorder %v405, 0.0
        %vm438 = vcmp.gt.f32.partialorder %v406, 0.0
        %vm439 = vcmp.gt.f32.partialorder %v407, 0.0
        %vm440 = vcmp.gt.f32.partialorder %v408, 0.0
        %vm441 = vcmp.gt.f32.partialorder %v409, 0.0
        %vm442 = vcmp.gt.f32.partialorder %v410, 0.0
        %vm443 = vcmp.gt.f32.partialorder %v411, 0.0
        %vm444 = vcmp.gt.f32.partialorder %v412, 0.0
        %vm445 = vcmp.gt.f32.partialorder %v413, 0.0
        %vm446 = vcmp.gt.f32.partialorder %v414, 0.0
        %v447 = vmul.f32 %v383, 0.1
        %v448 = vmul.f32 %v384, 0.1
        %v449 = vmul.f32 %v385, 0.1
        %v450 = vmul.f32 %v386, 0.1
        %v451 = vmul.f32 %v387, 0.1
        %v452 = vmul.f32 %v388, 0.1
        %v453 = vmul.f32 %v389, 0.1
        %v454 = vmul.f32 %v390, 0.1
        %v455 = vmul.f32 %v391, 0.1
        %v456 = vmul.f32 %v392, 0.1
        %v457 = vmul.f32 %v393, 0.1
        %v458 = vmul.f32 %v394, 0.1
        %v459 = vmul.f32 %v395, 0.1
        %v460 = vmul.f32 %v396, 0.1
        %v461 = vmul.f32 %v397, 0.1
        %v462 = vmul.f32 %v398, 0.1
        %v463 = vmul.f32 %v399, 0.1
        %v464 = vmul.f32 %v400, 0.1
        %v465 = vmul.f32 %v401, 0.1
        %v466 = vmul.f32 %v402, 0.1
        %v467 = vmul.f32 %v403, 0.1
        %v468 = vmul.f32 %v404, 0.1
        %v469 = vmul.f32 %v405, 0.1
        %v470 = vmul.f32 %v406, 0.1
        %v471 = vmul.f32 %v407, 0.1
        %v472 = vmul.f32 %v408, 0.1
        %v473 = vmul.f32 %v409, 0.1
        %v474 = vmul.f32 %v410, 0.1
        %v475 = vmul.f32 %v411, 0.1
        %v476 = vmul.f32 %v412, 0.1
        %v477 = vmul.f32 %v413, 0.1
        %v478 = vmul.f32 %v414, 0.1
        %v479 = vsel %vm415, %v383, %v447
        %v480 = vsel %vm416, %v384, %v448
        %v481 = vsel %vm417, %v385, %v449
        %v482 = vsel %vm418, %v386, %v450
        %v483 = vsel %vm419, %v387, %v451
        %v484 = vsel %vm420, %v388, %v452
        %v485 = vsel %vm421, %v389, %v453
        %v486 = vsel %vm422, %v390, %v454
        %v487 = vsel %vm423, %v391, %v455
        %v488 = vsel %vm424, %v392, %v456
        %v489 = vsel %vm425, %v393, %v457
        %v490 = vsel %vm426, %v394, %v458
        %v491 = vsel %vm427, %v395, %v459
        %v492 = vsel %vm428, %v396, %v460
        %v493 = vsel %vm429, %v397, %v461
        %v494 = vsel %vm430, %v398, %v462
        %v495 = vsel %vm431, %v399, %v463
        %v496 = vsel %vm432, %v400, %v464
        %v497 = vsel %vm433, %v401, %v465
        %v498 = vsel %vm434, %v402, %v466
        %v499 = vsel %vm435, %v403, %v467
        %v500 = vsel %vm436, %v404, %v468
        %v501 = vsel %vm437, %v405, %v469
        %v502 = vsel %vm438, %v406, %v470
        %v503 = vsel %vm439, %v407, %v471
        %v504 = vsel %vm440, %v408, %v472
        %v505 = vsel %vm441, %v409, %v473
        %v506 = vsel %vm442, %v410, %v474
        %v507 = vsel %vm443, %v411, %v475
        %v508 = vsel %vm444, %v412, %v476
        %v509 = vsel %vm445, %v413, %v477
        %v510 = vsel %vm446, %v414, %v478
        %vm511 = vcmask 24576
        %512 = vst.msk [vmem:[#allocation2 + $0x7] sm:$0x1] %vm511, 0.0
        %513 = vst.msk [vmem:[#allocation2 + $0x27] sm:$0x1] %vm511, 0.0
        %514 = vst.msk [vmem:[#allocation2 + $0x47] sm:$0x1] %vm511, 0.0
        %515 = vst.msk [vmem:[#allocation2 + $0x67] sm:$0x1] %vm511, 0.0
        %516 = vst.msk [vmem:[#allocation2 + $0x87] sm:$0x1] %vm511, 0.0
        %517 = vst.msk [vmem:[#allocation2 + $0xa7] sm:$0x1] %vm511, 0.0
        %518 = vst.msk [vmem:[#allocation2 + $0xc7] sm:$0x1] %vm511, 0.0
        %519 = vst.msk [vmem:[#allocation2 + $0xe7] sm:$0x1] %vm511, 0.0
        %520 = vst.msk [vmem:[#allocation2 + $0x107] sm:$0x1] %vm511, 0.0
        %521 = vst.msk [vmem:[#allocation2 + $0x127] sm:$0x1] %vm511, 0.0
        %522 = vst.msk [vmem:[#allocation2 + $0x147] sm:$0x1] %vm511, 0.0
        %523 = vst.msk [vmem:[#allocation2 + $0x167] sm:$0x1] %vm511, 0.0
        %524 = vst.msk [vmem:[#allocation2 + $0x187] sm:$0x1] %vm511, 0.0
        %525 = vst.msk [vmem:[#allocation2 + $0x1a7] sm:$0x1] %vm511, 0.0
        %526 = vst.msk [vmem:[#allocation2 + $0x1c7] sm:$0x1] %vm511, 0.0
        %527 = vst.msk [vmem:[#allocation2 + $0x1e7] sm:$0x1] %vm511, 0.0
        %528 = vst.msk [vmem:[#allocation2 + $0x207] sm:$0x1] %vm511, 0.0
        %529 = vst.msk [vmem:[#allocation2 + $0x227] sm:$0x1] %vm511, 0.0
        %530 = vst.msk [vmem:[#allocation2 + $0x18] sm:$0x1] %vm511, 0.0
        %531 = vst.msk [vmem:[#allocation2 + $0x38] sm:$0x1] %vm511, 0.0
        %532 = vst.msk [vmem:[#allocation2 + $0x58] sm:$0x1] %vm511, 0.0
        %533 = vst.msk [vmem:[#allocation2 + $0x78] sm:$0x1] %vm511, 0.0
        %534 = vst.msk [vmem:[#allocation2 + $0x98] sm:$0x1] %vm511, 0.0
        %535 = vst.msk [vmem:[#allocation2 + $0xb8] sm:$0x1] %vm511, 0.0
        %536 = vst.msk [vmem:[#allocation2 + $0xd8] sm:$0x1] %vm511, 0.0
        %537 = vst.msk [vmem:[#allocation2 + $0xf8] sm:$0x1] %vm511, 0.0
        %538 = vst.msk [vmem:[#allocation2 + $0x118] sm:$0x1] %vm511, 0.0
        %539 = vst.msk [vmem:[#allocation2 + $0x138] sm:$0x1] %vm511, 0.0
        %540 = vst.msk [vmem:[#allocation2 + $0x158] sm:$0x1] %vm511, 0.0
        %541 = vst.msk [vmem:[#allocation2 + $0x178] sm:$0x1] %vm511, 0.0
        %542 = vst.msk [vmem:[#allocation2 + $0x198] sm:$0x1] %vm511, 0.0
        %543 = vst.msk [vmem:[#allocation2 + $0x1b8] sm:$0x1] %vm511, 0.0
        %544 = vst.msk [vmem:[#allocation2 + $0x1d8] sm:$0x1] %vm511, 0.0
        %545 = vst.msk [vmem:[#allocation2 + $0x1f8] sm:$0x1] %vm511, 0.0
        %546 = vst.msk [vmem:[#allocation2 + $0x218] sm:$0x1] %vm511, 0.0
        %547 = vst.msk [vmem:[#allocation2 + $0x238] sm:$0x1] %vm511, 0.0
        %vm548 = vcmask 31744
        %549 = vst.msk [vmem:[#allocation2 + $0x8] sm:$0xff] %vm548, 0.0
        %550 = vst.msk [vmem:[#allocation2 + $0x10] sm:$0xff] %vm548, 0.0
        %s551 = scalar_lea.vmem [#allocation2], 544
        %552 = vst.msk [vmem:[%s551 + $0x8] sm:$0xff] %vm548, 0.0
        %553 = vst.msk [vmem:[%s551 + $0x10] sm:$0xff] %vm548, 0.0
        %s554 = scalar_lea.vmem [#allocation2], 32
        %555 = vst.msk [vmem:[%s554 + $0x8] sm:$0xff] %vm548, %v479
        %556 = vst.msk [vmem:[%s554 + $0x10] sm:$0xff] %vm548, %v480
        %557 = vst.msk [vmem:[%s554 + $0x28] sm:$0xff] %vm548, %v481
        %558 = vst.msk [vmem:[%s554 + $0x30] sm:$0xff] %vm548, %v482
        %559 = vst.msk [vmem:[%s554 + $0x48] sm:$0xff] %vm548, %v483
        %560 = vst.msk [vmem:[%s554 + $0x50] sm:$0xff] %vm548, %v484
        %561 = vst.msk [vmem:[%s554 + $0x68] sm:$0xff] %vm548, %v485
        %562 = vst.msk [vmem:[%s554 + $0x70] sm:$0xff] %vm548, %v486
        %563 = vst.msk [vmem:[%s554 + $0x88] sm:$0xff] %vm548, %v487
        %564 = vst.msk [vmem:[%s554 + $0x90] sm:$0xff] %vm548, %v488
        %565 = vst.msk [vmem:[%s554 + $0xa8] sm:$0xff] %vm548, %v489
        %566 = vst.msk [vmem:[%s554 + $0xb0] sm:$0xff] %vm548, %v490
        %567 = vst.msk [vmem:[%s554 + $0xc8] sm:$0xff] %vm548, %v491
        %568 = vst.msk [vmem:[%s554 + $0xd0] sm:$0xff] %vm548, %v492
        %569 = vst.msk [vmem:[%s554 + $0xe8] sm:$0xff] %vm548, %v493
        %570 = vst.msk [vmem:[%s554 + $0xf0] sm:$0xff] %vm548, %v494
        %571 = vst.msk [vmem:[%s554 + $0x108] sm:$0xff] %vm548, %v495
        %572 = vst.msk [vmem:[%s554 + $0x110] sm:$0xff] %vm548, %v496
        %573 = vst.msk [vmem:[%s554 + $0x128] sm:$0xff] %vm548, %v497
        %574 = vst.msk [vmem:[%s554 + $0x130] sm:$0xff] %vm548, %v498
        %575 = vst.msk [vmem:[%s554 + $0x148] sm:$0xff] %vm548, %v499
        %576 = vst.msk [vmem:[%s554 + $0x150] sm:$0xff] %vm548, %v500
        %577 = vst.msk [vmem:[%s554 + $0x168] sm:$0xff] %vm548, %v501
        %578 = vst.msk [vmem:[%s554 + $0x170] sm:$0xff] %vm548, %v502
        %579 = vst.msk [vmem:[%s554 + $0x188] sm:$0xff] %vm548, %v503
        %580 = vst.msk [vmem:[%s554 + $0x190] sm:$0xff] %vm548, %v504
        %581 = vst.msk [vmem:[%s554 + $0x1a8] sm:$0xff] %vm548, %v505
        %582 = vst.msk [vmem:[%s554 + $0x1b0] sm:$0xff] %vm548, %v506
        %583 = vst.msk [vmem:[%s554 + $0x1c8] sm:$0xff] %vm548, %v507
        %584 = vst.msk [vmem:[%s554 + $0x1d0] sm:$0xff] %vm548, %v508
        %585 = vst.msk [vmem:[%s554 + $0x1e8] sm:$0xff] %vm548, %v509
        %586 = vst.msk [vmem:[%s554 + $0x1f0] sm:$0xff] %vm548, %v510
        %s587 = scalar_lea.vmem [#allocation2], 7
        %v588 = vld [vmem:[%s587] ss:$2 sm:$0xff]
        %s589 = scalar_lea.vmem [#allocation2], 71
        %v590 = vld [vmem:[%s589] ss:$2 sm:$0xff]
        %s591 = scalar_lea.vmem [#allocation2], 135
        %v592 = vld [vmem:[%s591] ss:$2 sm:$0xff]
        %s593 = scalar_lea.vmem [#allocation2], 199
        %v594 = vld [vmem:[%s593] ss:$2 sm:$0xff]
        %s595 = scalar_lea.vmem [#allocation2], 263
        %v596 = vld [vmem:[%s595] ss:$2 sm:$0xff]
        %s597 = scalar_lea.vmem [#allocation2], 327
        %v598 = vld [vmem:[%s597] ss:$2 sm:$0xff]
        %s599 = scalar_lea.vmem [#allocation2], 391
        %v600 = vld [vmem:[%s599] ss:$2 sm:$0xff]
        %s601 = scalar_lea.vmem [#allocation2], 455
        %v602 = vld [vmem:[%s601] ss:$2 sm:$0xff]
        %v603 = vpack.c.bf16 %v590, %v588
        %v604 = vpack.c.bf16 %v594, %v592
        %v605 = vpack.c.bf16 %v598, %v596
        %v606 = vpack.c.bf16 %v602, %v600
        %v607 = vld [vmem:[%s3] sm:$0x3]
        %s608 = scalar_lea.vmem [#allocation2], 8
        %v609 = vld [vmem:[%s608] ss:$2 sm:$0xff]
        %s610 = scalar_lea.vmem [#allocation2], 72
        %v611 = vld [vmem:[%s610] ss:$2 sm:$0xff]
        %s612 = scalar_lea.vmem [#allocation2], 136
        %v613 = vld [vmem:[%s612] ss:$2 sm:$0xff]
        %s614 = scalar_lea.vmem [#allocation2], 200
        %v615 = vld [vmem:[%s614] ss:$2 sm:$0xff]
        %s616 = scalar_lea.vmem [#allocation2], 264
        %v617 = vld [vmem:[%s616] ss:$2 sm:$0xff]
        %s618 = scalar_lea.vmem [#allocation2], 328
        %v619 = vld [vmem:[%s618] ss:$2 sm:$0xff]
        %s620 = scalar_lea.vmem [#allocation2], 392
        %v621 = vld [vmem:[%s620] ss:$2 sm:$0xff]
        %s622 = scalar_lea.vmem [#allocation2], 456
        %v623 = vld [vmem:[%s622] ss:$2 sm:$0xff]
        %v624 = vpack.c.bf16 %v611, %v609
        %v625 = vpack.c.bf16 %v615, %v613
        %v626 = vpack.c.bf16 %v619, %v617
        %v627 = vpack.c.bf16 %v623, %v621
        %s628 = scalar_lea.vmem %s3, 2
        %v629 = vld [vmem:[%s628] sm:$0x3]
        %v631 = vsel %vm548, %v624, 0
        %v634 = vsel %vm548, %v625, 0
        %v637 = vsel %vm548, %v626, 0
        %v640 = vsel %vm548, %v627, 0
        %vm642 = vcmask 1041408
        %v644 = vsel %vm642, %v629, 0
        %646 = vmatprep.subr.bf16.mxu0 0
        %647 = vmatpush1.bf16.msra.mxu0 0
        %648 = vmatprep.subr.bf16.mxu0 0
        %649 = vmatpush1.bf16.msra.mxu0 0
        %650 = vmatprep.subr.bf16.mxu0 0
        %651 = vmatpush1.bf16.msra.mxu0 0
        %652 = vmatprep.subr.bf16.mxu0 0
        %653 = vmatpush1.bf16.msra.mxu0 0
        %654 = vmatprep.subr.bf16.mxu0 0
        %655 = vmatpush1.bf16.msra.mxu0 0
        %656 = vmatprep.subr.bf16.mxu0 0
        %657 = vmatpush1.bf16.msra.mxu0 0
        %658 = vmatprep.subr.bf16.mxu0 0
        %659 = vmatpush1.bf16.msra.mxu0 0
        %660 = vmatprep.subr.bf16.mxu0 0
        %661 = vmatpush1.bf16.msra.mxu0 %v644
        %662 = vmatprep.subr.bf16.mxu0 0
        %663 = vmatpush2.bf16.msra.mxu0 0
        %664 = vmatprep.subr.bf16.mxu0 0
        %665 = vmatpush2.bf16.msra.mxu0 0
        %666 = vmatprep.subr.bf16.mxu0 0
        %667 = vmatpush2.bf16.msra.mxu0 0
        %668 = vmatprep.subr.bf16.mxu0 0
        %669 = vmatpush2.bf16.msra.mxu0 0
        %670 = vmatprep.subr.bf16.mxu0 0
        %671 = vmatpush2.bf16.msra.mxu0 0
        %672 = vmatprep.subr.bf16.mxu0 0
        %673 = vmatpush2.bf16.msra.mxu0 0
        %674 = vmatprep.subr.bf16.mxu0 0
        %675 = vmatpush2.bf16.msra.mxu0 0
        %676 = vmatprep.subr.bf16.mxu0 0
        %677 = vmatpush2.bf16.msra.mxu0 0
        %678 = vmatprep.mubr.bf16.mxu0 0
        %679 = vmatmul.mubr.bf16.gmra.mxu0 %v631
        %v680 = vpop.f32.mrf.mxu0
        %v681 = vadd.f32 0.0, %v680
        %v682 = vpop.f32.mrf.mxu0
        %v683 = vpop.f32.mrf.mxu0
        %v684 = vadd.f32 0.0, %v683
        %v685 = vpop.f32.mrf.mxu0
        %686 = vmatprep.mubr.bf16.mxu0 0
        %687 = vmatmul.mubr.bf16.gmra.mxu0 %v634
        %v688 = vpop.f32.mrf.mxu0
        %v689 = vadd.f32 0.0, %v688
        %v690 = vpop.f32.mrf.mxu0
        %v691 = vpop.f32.mrf.mxu0
        %v692 = vadd.f32 0.0, %v691
        %v693 = vpop.f32.mrf.mxu0
        %694 = vmatprep.mubr.bf16.mxu0 0
        %695 = vmatmul.mubr.bf16.gmra.mxu0 %v637
        %v696 = vpop.f32.mrf.mxu0
        %v697 = vadd.f32 0.0, %v696
        %v698 = vpop.f32.mrf.mxu0
        %v699 = vpop.f32.mrf.mxu0
        %v700 = vadd.f32 0.0, %v699
        %v701 = vpop.f32.mrf.mxu0
        %702 = vmatprep.mubr.bf16.mxu0 0
        %703 = vmatmul.mubr.bf16.gmra.mxu0 %v640
        %v704 = vpop.f32.mrf.mxu0
        %v705 = vadd.f32 0.0, %v704
        %v706 = vpop.f32.mrf.mxu0
        %v707 = vpop.f32.mrf.mxu0
        %v708 = vadd.f32 0.0, %v707
        %v709 = vpop.f32.mrf.mxu0
        %710 = vdwg.mxu0
        %v712 = vsel %vm548, %v603, 0
        %v715 = vsel %vm548, %v604, 0
        %v718 = vsel %vm548, %v605, 0
        %v721 = vsel %vm548, %v606, 0
        %v724 = vsel %vm642, %v607, 0
        %726 = vmatprep.subr.bf16.mxu0 0
        %727 = vmatpush1.bf16.msra.mxu0 0
        %728 = vmatprep.subr.bf16.mxu0 0
        %729 = vmatpush1.bf16.msra.mxu0 0
        %730 = vmatprep.subr.bf16.mxu0 0
        %731 = vmatpush1.bf16.msra.mxu0 0
        %732 = vmatprep.subr.bf16.mxu0 0
        %733 = vmatpush1.bf16.msra.mxu0 0
        %734 = vmatprep.subr.bf16.mxu0 0
        %735 = vmatpush1.bf16.msra.mxu0 0
        %736 = vmatprep.subr.bf16.mxu0 0
        %737 = vmatpush1.bf16.msra.mxu0 0
        %738 = vmatprep.subr.bf16.mxu0 0
        %739 = vmatpush1.bf16.msra.mxu0 0
        %740 = vmatprep.subr.bf16.mxu0 0
        %741 = vmatpush1.bf16.msra.mxu0 %v724
        %742 = vmatprep.subr.bf16.mxu0 0
        %743 = vmatpush2.bf16.msra.mxu0 0
        %744 = vmatprep.subr.bf16.mxu0 0
        %745 = vmatpush2.bf16.msra.mxu0 0
        %746 = vmatprep.subr.bf16.mxu0 0
        %747 = vmatpush2.bf16.msra.mxu0 0
        %748 = vmatprep.subr.bf16.mxu0 0
        %749 = vmatpush2.bf16.msra.mxu0 0
        %750 = vmatprep.subr.bf16.mxu0 0
        %751 = vmatpush2.bf16.msra.mxu0 0
        %752 = vmatprep.subr.bf16.mxu0 0
        %753 = vmatpush2.bf16.msra.mxu0 0
        %754 = vmatprep.subr.bf16.mxu0 0
        %755 = vmatpush2.bf16.msra.mxu0 0
        %756 = vmatprep.subr.bf16.mxu0 0
        %757 = vmatpush2.bf16.msra.mxu0 0
        %758 = vmatprep.mubr.bf16.mxu0 0
        %759 = vmatmul.mubr.bf16.gmra.mxu0 %v712
        %v760 = vpop.f32.mrf.mxu0
        %v761 = vadd.f32 %v681, %v760
        %v762 = vpop.f32.mrf.mxu0
        %v763 = vpop.f32.mrf.mxu0
        %v764 = vadd.f32 %v684, %v763
        %v765 = vpop.f32.mrf.mxu0
        %766 = vmatprep.mubr.bf16.mxu0 0
        %767 = vmatmul.mubr.bf16.gmra.mxu0 %v715
        %v768 = vpop.f32.mrf.mxu0
        %v769 = vadd.f32 %v689, %v768
        %v770 = vpop.f32.mrf.mxu0
        %v771 = vpop.f32.mrf.mxu0
        %v772 = vadd.f32 %v692, %v771
        %v773 = vpop.f32.mrf.mxu0
        %774 = vmatprep.mubr.bf16.mxu0 0
        %775 = vmatmul.mubr.bf16.gmra.mxu0 %v718
        %v776 = vpop.f32.mrf.mxu0
        %v777 = vadd.f32 %v697, %v776
        %v778 = vpop.f32.mrf.mxu0
        %v779 = vpop.f32.mrf.mxu0
        %v780 = vadd.f32 %v700, %v779
        %v781 = vpop.f32.mrf.mxu0
        %782 = vmatprep.mubr.bf16.mxu0 0
        %783 = vmatmul.mubr.bf16.gmra.mxu0 %v721
        %v784 = vpop.f32.mrf.mxu0
        %v785 = vadd.f32 %v705, %v784
        %v786 = vpop.f32.mrf.mxu0
        %v787 = vpop.f32.mrf.mxu0
        %v788 = vadd.f32 %v708, %v787
        %v789 = vpop.f32.mrf.mxu0
        %790 = vdwg.mxu0
        %s791 = scalar_lea.vmem [#allocation2], 9
        %v792 = vld [vmem:[%s791] ss:$2 sm:$0xff]
        %s793 = scalar_lea.vmem [#allocation2], 73
        %v794 = vld [vmem:[%s793] ss:$2 sm:$0xff]
        %s795 = scalar_lea.vmem [#allocation2], 137
        %v796 = vld [vmem:[%s795] ss:$2 sm:$0xff]
        %s797 = scalar_lea.vmem [#allocation2], 201
        %v798 = vld [vmem:[%s797] ss:$2 sm:$0xff]
        %s799 = scalar_lea.vmem [#allocation2], 265
        %v800 = vld [vmem:[%s799] ss:$2 sm:$0xff]
        %s801 = scalar_lea.vmem [#allocation2], 329
        %v802 = vld [vmem:[%s801] ss:$2 sm:$0xff]
        %s803 = scalar_lea.vmem [#allocation2], 393
        %v804 = vld [vmem:[%s803] ss:$2 sm:$0xff]
        %s805 = scalar_lea.vmem [#allocation2], 457
        %v806 = vld [vmem:[%s805] ss:$2 sm:$0xff]
        %v807 = vpack.c.bf16 %v794, %v792
        %v808 = vpack.c.bf16 %v798, %v796
        %v809 = vpack.c.bf16 %v802, %v800
        %v810 = vpack.c.bf16 %v806, %v804
        %s811 = scalar_lea.vmem %s3, 4
        %v812 = vld [vmem:[%s811] sm:$0x3]
        %v814 = vsel %vm548, %v807, 0
        %v817 = vsel %vm548, %v808, 0
        %v820 = vsel %vm548, %v809, 0
        %v823 = vsel %vm548, %v810, 0
        %v826 = vsel %vm642, %v812, 0
        %828 = vmatprep.subr.bf16.mxu0 0
        %829 = vmatpush1.bf16.msra.mxu0 0
        %830 = vmatprep.subr.bf16.mxu0 0
        %831 = vmatpush1.bf16.msra.mxu0 0
        %832 = vmatprep.subr.bf16.mxu0 0
        %833 = vmatpush1.bf16.msra.mxu0 0
        %834 = vmatprep.subr.bf16.mxu0 0
        %835 = vmatpush1.bf16.msra.mxu0 0
        %836 = vmatprep.subr.bf16.mxu0 0
        %837 = vmatpush1.bf16.msra.mxu0 0
        %838 = vmatprep.subr.bf16.mxu0 0
        %839 = vmatpush1.bf16.msra.mxu0 0
        %840 = vmatprep.subr.bf16.mxu0 0
        %841 = vmatpush1.bf16.msra.mxu0 0
        %842 = vmatprep.subr.bf16.mxu0 0
        %843 = vmatpush1.bf16.msra.mxu0 %v826
        %844 = vmatprep.subr.bf16.mxu0 0
        %845 = vmatpush2.bf16.msra.mxu0 0
        %846 = vmatprep.subr.bf16.mxu0 0
        %847 = vmatpush2.bf16.msra.mxu0 0
        %848 = vmatprep.subr.bf16.mxu0 0
        %849 = vmatpush2.bf16.msra.mxu0 0
        %850 = vmatprep.subr.bf16.mxu0 0
        %851 = vmatpush2.bf16.msra.mxu0 0
        %852 = vmatprep.subr.bf16.mxu0 0
        %853 = vmatpush2.bf16.msra.mxu0 0
        %854 = vmatprep.subr.bf16.mxu0 0
        %855 = vmatpush2.bf16.msra.mxu0 0
        %856 = vmatprep.subr.bf16.mxu0 0
        %857 = vmatpush2.bf16.msra.mxu0 0
        %858 = vmatprep.subr.bf16.mxu0 0
        %859 = vmatpush2.bf16.msra.mxu0 0
        %860 = vmatprep.mubr.bf16.mxu0 0
        %861 = vmatmul.mubr.bf16.gmra.mxu0 %v814
        %v862 = vpop.f32.mrf.mxu0
        %v863 = vadd.f32 0.0, %v862
        %v864 = vpop.f32.mrf.mxu0
        %v865 = vpop.f32.mrf.mxu0
        %v866 = vadd.f32 0.0, %v865
        %v867 = vpop.f32.mrf.mxu0
        %868 = vmatprep.mubr.bf16.mxu0 0
        %869 = vmatmul.mubr.bf16.gmra.mxu0 %v817
        %v870 = vpop.f32.mrf.mxu0
        %v871 = vadd.f32 0.0, %v870
        %v872 = vpop.f32.mrf.mxu0
        %v873 = vpop.f32.mrf.mxu0
        %v874 = vadd.f32 0.0, %v873
        %v875 = vpop.f32.mrf.mxu0
        %876 = vmatprep.mubr.bf16.mxu0 0
        %877 = vmatmul.mubr.bf16.gmra.mxu0 %v820
        %v878 = vpop.f32.mrf.mxu0
        %v879 = vadd.f32 0.0, %v878
        %v880 = vpop.f32.mrf.mxu0
        %v881 = vpop.f32.mrf.mxu0
        %v882 = vadd.f32 0.0, %v881
        %v883 = vpop.f32.mrf.mxu0
        %884 = vmatprep.mubr.bf16.mxu0 0
        %885 = vmatmul.mubr.bf16.gmra.mxu0 %v823
        %v886 = vpop.f32.mrf.mxu0
        %v887 = vadd.f32 0.0, %v886
        %v888 = vpop.f32.mrf.mxu0
        %v889 = vpop.f32.mrf.mxu0
        %v890 = vadd.f32 0.0, %v889
        %v891 = vpop.f32.mrf.mxu0
        %892 = vdwg.mxu0
        %v893 = vadd.f32 %v761, %v863
        %v894 = vadd.f32 %v764, %v866
        %v895 = vadd.f32 %v769, %v871
        %v896 = vadd.f32 %v772, %v874
        %v897 = vadd.f32 %v777, %v879
        %v898 = vadd.f32 %v780, %v882
        %v899 = vadd.f32 %v785, %v887
        %v900 = vadd.f32 %v788, %v890
        %s901 = scalar_lea.vmem %s554, 7 [#allocation2]
        %v902 = vld [vmem:[%s901] ss:$2 sm:$0xff]
        %s903 = scalar_lea.vmem %s554, 71 [#allocation2]
        %v904 = vld [vmem:[%s903] ss:$2 sm:$0xff]
        %s905 = scalar_lea.vmem %s554, 135 [#allocation2]
        %v906 = vld [vmem:[%s905] ss:$2 sm:$0xff]
        %s907 = scalar_lea.vmem %s554, 199 [#allocation2]
        %v908 = vld [vmem:[%s907] ss:$2 sm:$0xff]
        %s909 = scalar_lea.vmem %s554, 263 [#allocation2]
        %v910 = vld [vmem:[%s909] ss:$2 sm:$0xff]
        %s911 = scalar_lea.vmem %s554, 327 [#allocation2]
        %v912 = vld [vmem:[%s911] ss:$2 sm:$0xff]
        %s913 = scalar_lea.vmem %s554, 391 [#allocation2]
        %v914 = vld [vmem:[%s913] ss:$2 sm:$0xff]
        %s915 = scalar_lea.vmem %s554, 455 [#allocation2]
        %v916 = vld [vmem:[%s915] ss:$2 sm:$0xff]
        %v917 = vpack.c.bf16 %v904, %v902
        %v918 = vpack.c.bf16 %v908, %v906
        %v919 = vpack.c.bf16 %v912, %v910
        %v920 = vpack.c.bf16 %v916, %v914
        %s921 = scalar_lea.vmem %s3, 6
        %v922 = vld [vmem:[%s921] sm:$0x3]
        %v924 = vsel %vm548, %v917, 0
        %v927 = vsel %vm548, %v918, 0
        %v930 = vsel %vm548, %v919, 0
        %v933 = vsel %vm548, %v920, 0
        %v936 = vsel %vm642, %v922, 0
        %938 = vmatprep.subr.bf16.mxu0 0
        %939 = vmatpush1.bf16.msra.mxu0 0
        %940 = vmatprep.subr.bf16.mxu0 0
        %941 = vmatpush1.bf16.msra.mxu0 0
        %942 = vmatprep.subr.bf16.mxu0 0
        %943 = vmatpush1.bf16.msra.mxu0 0
        %944 = vmatprep.subr.bf16.mxu0 0
        %945 = vmatpush1.bf16.msra.mxu0 0
        %946 = vmatprep.subr.bf16.mxu0 0
        %947 = vmatpush1.bf16.msra.mxu0 0
        %948 = vmatprep.subr.bf16.mxu0 0
        %949 = vmatpush1.bf16.msra.mxu0 0
        %950 = vmatprep.subr.bf16.mxu0 0
        %951 = vmatpush1.bf16.msra.mxu0 0
        %952 = vmatprep.subr.bf16.mxu0 0
        %953 = vmatpush1.bf16.msra.mxu0 %v936
        %954 = vmatprep.subr.bf16.mxu0 0
        %955 = vmatpush2.bf16.msra.mxu0 0
        %956 = vmatprep.subr.bf16.mxu0 0
        %957 = vmatpush2.bf16.msra.mxu0 0
        %958 = vmatprep.subr.bf16.mxu0 0
        %959 = vmatpush2.bf16.msra.mxu0 0
        %960 = vmatprep.subr.bf16.mxu0 0
        %961 = vmatpush2.bf16.msra.mxu0 0
        %962 = vmatprep.subr.bf16.mxu0 0
        %963 = vmatpush2.bf16.msra.mxu0 0
        %964 = vmatprep.subr.bf16.mxu0 0
        %965 = vmatpush2.bf16.msra.mxu0 0
        %966 = vmatprep.subr.bf16.mxu0 0
        %967 = vmatpush2.bf16.msra.mxu0 0
        %968 = vmatprep.subr.bf16.mxu0 0
        %969 = vmatpush2.bf16.msra.mxu0 0
        %970 = vmatprep.mubr.bf16.mxu0 0
        %971 = vmatmul.mubr.bf16.gmra.mxu0 %v924
        %v972 = vpop.f32.mrf.mxu0
        %v973 = vadd.f32 0.0, %v972
        %v974 = vpop.f32.mrf.mxu0
        %v975 = vpop.f32.mrf.mxu0
        %v976 = vadd.f32 0.0, %v975
        %v977 = vpop.f32.mrf.mxu0
        %978 = vmatprep.mubr.bf16.mxu0 0
        %979 = vmatmul.mubr.bf16.gmra.mxu0 %v927
        %v980 = vpop.f32.mrf.mxu0
        %v981 = vadd.f32 0.0, %v980
        %v982 = vpop.f32.mrf.mxu0
        %v983 = vpop.f32.mrf.mxu0
        %v984 = vadd.f32 0.0, %v983
        %v985 = vpop.f32.mrf.mxu0
        %986 = vmatprep.mubr.bf16.mxu0 0
        %987 = vmatmul.mubr.bf16.gmra.mxu0 %v930
        %v988 = vpop.f32.mrf.mxu0
        %v989 = vadd.f32 0.0, %v988
        %v990 = vpop.f32.mrf.mxu0
        %v991 = vpop.f32.mrf.mxu0
        %v992 = vadd.f32 0.0, %v991
        %v993 = vpop.f32.mrf.mxu0
        %994 = vmatprep.mubr.bf16.mxu0 0
        %995 = vmatmul.mubr.bf16.gmra.mxu0 %v933
        %v996 = vpop.f32.mrf.mxu0
        %v997 = vadd.f32 0.0, %v996
        %v998 = vpop.f32.mrf.mxu0
        %v999 = vpop.f32.mrf.mxu0
        %v1000 = vadd.f32 0.0, %v999
        %v1001 = vpop.f32.mrf.mxu0
        %1002 = vdwg.mxu0
        %v1003 = vadd.f32 %v893, %v973
        %v1004 = vadd.f32 %v894, %v976
        %v1005 = vadd.f32 %v895, %v981
        %v1006 = vadd.f32 %v896, %v984
        %v1007 = vadd.f32 %v897, %v989
        %v1008 = vadd.f32 %v898, %v992
        %v1009 = vadd.f32 %v899, %v997
        %v1010 = vadd.f32 %v900, %v1000
        %s1011 = scalar_lea.vmem %s554, 8 [#allocation2]
        %v1012 = vld [vmem:[%s1011] ss:$2 sm:$0xff]
        %s1013 = scalar_lea.vmem %s554, 72 [#allocation2]
        %v1014 = vld [vmem:[%s1013] ss:$2 sm:$0xff]
        %s1015 = scalar_lea.vmem %s554, 136 [#allocation2]
        %v1016 = vld [vmem:[%s1015] ss:$2 sm:$0xff]
        %s1017 = scalar_lea.vmem %s554, 200 [#allocation2]
        %v1018 = vld [vmem:[%s1017] ss:$2 sm:$0xff]
        %s1019 = scalar_lea.vmem %s554, 264 [#allocation2]
        %v1020 = vld [vmem:[%s1019] ss:$2 sm:$0xff]
        %s1021 = scalar_lea.vmem %s554, 328 [#allocation2]
        %v1022 = vld [vmem:[%s1021] ss:$2 sm:$0xff]
        %s1023 = scalar_lea.vmem %s554, 392 [#allocation2]
        %v1024 = vld [vmem:[%s1023] ss:$2 sm:$0xff]
        %s1025 = scalar_lea.vmem %s554, 456 [#allocation2]
        %v1026 = vld [vmem:[%s1025] ss:$2 sm:$0xff]
        %v1027 = vpack.c.bf16 %v1014, %v1012
        %v1028 = vpack.c.bf16 %v1018, %v1016
        %v1029 = vpack.c.bf16 %v1022, %v1020
        %v1030 = vpack.c.bf16 %v1026, %v1024
        %s1031 = scalar_lea.vmem %s3, 8
        %v1032 = vld [vmem:[%s1031] sm:$0x3]
        %v1034 = vsel %vm548, %v1027, 0
        %v1037 = vsel %vm548, %v1028, 0
        %v1040 = vsel %vm548, %v1029, 0
        %v1043 = vsel %vm548, %v1030, 0
        %v1046 = vsel %vm642, %v1032, 0
        %1048 = vmatprep.subr.bf16.mxu0 0
        %1049 = vmatpush1.bf16.msra.mxu0 0
        %1050 = vmatprep.subr.bf16.mxu0 0
        %1051 = vmatpush1.bf16.msra.mxu0 0
        %1052 = vmatprep.subr.bf16.mxu0 0
        %1053 = vmatpush1.bf16.msra.mxu0 0
        %1054 = vmatprep.subr.bf16.mxu0 0
        %1055 = vmatpush1.bf16.msra.mxu0 0
        %1056 = vmatprep.subr.bf16.mxu0 0
        %1057 = vmatpush1.bf16.msra.mxu0 0
        %1058 = vmatprep.subr.bf16.mxu0 0
        %1059 = vmatpush1.bf16.msra.mxu0 0
        %1060 = vmatprep.subr.bf16.mxu0 0
        %1061 = vmatpush1.bf16.msra.mxu0 0
        %1062 = vmatprep.subr.bf16.mxu0 0
        %1063 = vmatpush1.bf16.msra.mxu0 %v1046
        %1064 = vmatprep.subr.bf16.mxu0 0
        %1065 = vmatpush2.bf16.msra.mxu0 0
        %1066 = vmatprep.subr.bf16.mxu0 0
        %1067 = vmatpush2.bf16.msra.mxu0 0
        %1068 = vmatprep.subr.bf16.mxu0 0
        %1069 = vmatpush2.bf16.msra.mxu0 0
        %1070 = vmatprep.subr.bf16.mxu0 0
        %1071 = vmatpush2.bf16.msra.mxu0 0
        %1072 = vmatprep.subr.bf16.mxu0 0
        %1073 = vmatpush2.bf16.msra.mxu0 0
        %1074 = vmatprep.subr.bf16.mxu0 0
        %1075 = vmatpush2.bf16.msra.mxu0 0
        %1076 = vmatprep.subr.bf16.mxu0 0
        %1077 = vmatpush2.bf16.msra.mxu0 0
        %1078 = vmatprep.subr.bf16.mxu0 0
        %1079 = vmatpush2.bf16.msra.mxu0 0
        %1080 = vmatprep.mubr.bf16.mxu0 0
        %1081 = vmatmul.mubr.bf16.gmra.mxu0 %v1034
        %v1082 = vpop.f32.mrf.mxu0
        %v1083 = vadd.f32 0.0, %v1082
        %v1084 = vpop.f32.mrf.mxu0
        %v1085 = vpop.f32.mrf.mxu0
        %v1086 = vadd.f32 0.0, %v1085
        %v1087 = vpop.f32.mrf.mxu0
        %1088 = vmatprep.mubr.bf16.mxu0 0
        %1089 = vmatmul.mubr.bf16.gmra.mxu0 %v1037
        %v1090 = vpop.f32.mrf.mxu0
        %v1091 = vadd.f32 0.0, %v1090
        %v1092 = vpop.f32.mrf.mxu0
        %v1093 = vpop.f32.mrf.mxu0
        %v1094 = vadd.f32 0.0, %v1093
        %v1095 = vpop.f32.mrf.mxu0
        %1096 = vmatprep.mubr.bf16.mxu0 0
        %1097 = vmatmul.mubr.bf16.gmra.mxu0 %v1040
        %v1098 = vpop.f32.mrf.mxu0
        %v1099 = vadd.f32 0.0, %v1098
        %v1100 = vpop.f32.mrf.mxu0
        %v1101 = vpop.f32.mrf.mxu0
        %v1102 = vadd.f32 0.0, %v1101
        %v1103 = vpop.f32.mrf.mxu0
        %1104 = vmatprep.mubr.bf16.mxu0 0
        %1105 = vmatmul.mubr.bf16.gmra.mxu0 %v1043
        %v1106 = vpop.f32.mrf.mxu0
        %v1107 = vadd.f32 0.0, %v1106
        %v1108 = vpop.f32.mrf.mxu0
        %v1109 = vpop.f32.mrf.mxu0
        %v1110 = vadd.f32 0.0, %v1109
        %v1111 = vpop.f32.mrf.mxu0
        %1112 = vdwg.mxu0
        %v1113 = vadd.f32 %v1003, %v1083
        %v1114 = vadd.f32 %v1004, %v1086
        %v1115 = vadd.f32 %v1005, %v1091
        %v1116 = vadd.f32 %v1006, %v1094
        %v1117 = vadd.f32 %v1007, %v1099
        %v1118 = vadd.f32 %v1008, %v1102
        %v1119 = vadd.f32 %v1009, %v1107
        %v1120 = vadd.f32 %v1010, %v1110
        %s1121 = scalar_lea.vmem %s554, 9 [#allocation2]
        %v1122 = vld [vmem:[%s1121] ss:$2 sm:$0xff]
        %s1123 = scalar_lea.vmem %s554, 73 [#allocation2]
        %v1124 = vld [vmem:[%s1123] ss:$2 sm:$0xff]
        %s1125 = scalar_lea.vmem %s554, 137 [#allocation2]
        %v1126 = vld [vmem:[%s1125] ss:$2 sm:$0xff]
        %s1127 = scalar_lea.vmem %s554, 201 [#allocation2]
        %v1128 = vld [vmem:[%s1127] ss:$2 sm:$0xff]
        %s1129 = scalar_lea.vmem %s554, 265 [#allocation2]
        %v1130 = vld [vmem:[%s1129] ss:$2 sm:$0xff]
        %s1131 = scalar_lea.vmem %s554, 329 [#allocation2]
        %v1132 = vld [vmem:[%s1131] ss:$2 sm:$0xff]
        %s1133 = scalar_lea.vmem %s554, 393 [#allocation2]
        %v1134 = vld [vmem:[%s1133] ss:$2 sm:$0xff]
        %s1135 = scalar_lea.vmem %s554, 457 [#allocation2]
        %v1136 = vld [vmem:[%s1135] ss:$2 sm:$0xff]
        %v1137 = vpack.c.bf16 %v1124, %v1122
        %v1138 = vpack.c.bf16 %v1128, %v1126
        %v1139 = vpack.c.bf16 %v1132, %v1130
        %v1140 = vpack.c.bf16 %v1136, %v1134
        %s1141 = scalar_lea.vmem %s3, 10
        %v1142 = vld [vmem:[%s1141] sm:$0x3]
        %v1144 = vsel %vm548, %v1137, 0
        %v1147 = vsel %vm548, %v1138, 0
        %v1150 = vsel %vm548, %v1139, 0
        %v1153 = vsel %vm548, %v1140, 0
        %v1156 = vsel %vm642, %v1142, 0
        %1158 = vmatprep.subr.bf16.mxu0 0
        %1159 = vmatpush1.bf16.msra.mxu0 0
        %1160 = vmatprep.subr.bf16.mxu0 0
        %1161 = vmatpush1.bf16.msra.mxu0 0
        %1162 = vmatprep.subr.bf16.mxu0 0
        %1163 = vmatpush1.bf16.msra.mxu0 0
        %1164 = vmatprep.subr.bf16.mxu0 0
        %1165 = vmatpush1.bf16.msra.mxu0 0
        %1166 = vmatprep.subr.bf16.mxu0 0
        %1167 = vmatpush1.bf16.msra.mxu0 0
        %1168 = vmatprep.subr.bf16.mxu0 0
        %1169 = vmatpush1.bf16.msra.mxu0 0
        %1170 = vmatprep.subr.bf16.mxu0 0
        %1171 = vmatpush1.bf16.msra.mxu0 0
        %1172 = vmatprep.subr.bf16.mxu0 0
        %1173 = vmatpush1.bf16.msra.mxu0 %v1156
        %1174 = vmatprep.subr.bf16.mxu0 0
        %1175 = vmatpush2.bf16.msra.mxu0 0
        %1176 = vmatprep.subr.bf16.mxu0 0
        %1177 = vmatpush2.bf16.msra.mxu0 0
        %1178 = vmatprep.subr.bf16.mxu0 0
        %1179 = vmatpush2.bf16.msra.mxu0 0
        %1180 = vmatprep.subr.bf16.mxu0 0
        %1181 = vmatpush2.bf16.msra.mxu0 0
        %1182 = vmatprep.subr.bf16.mxu0 0
        %1183 = vmatpush2.bf16.msra.mxu0 0
        %1184 = vmatprep.subr.bf16.mxu0 0
        %1185 = vmatpush2.bf16.msra.mxu0 0
        %1186 = vmatprep.subr.bf16.mxu0 0
        %1187 = vmatpush2.bf16.msra.mxu0 0
        %1188 = vmatprep.subr.bf16.mxu0 0
        %1189 = vmatpush2.bf16.msra.mxu0 0
        %1190 = vmatprep.mubr.bf16.mxu0 0
        %1191 = vmatmul.mubr.bf16.gmra.mxu0 %v1144
        %v1192 = vpop.f32.mrf.mxu0
        %v1193 = vadd.f32 0.0, %v1192
        %v1194 = vpop.f32.mrf.mxu0
        %v1195 = vpop.f32.mrf.mxu0
        %v1196 = vadd.f32 0.0, %v1195
        %v1197 = vpop.f32.mrf.mxu0
        %1198 = vmatprep.mubr.bf16.mxu0 0
        %1199 = vmatmul.mubr.bf16.gmra.mxu0 %v1147
        %v1200 = vpop.f32.mrf.mxu0
        %v1201 = vadd.f32 0.0, %v1200
        %v1202 = vpop.f32.mrf.mxu0
        %v1203 = vpop.f32.mrf.mxu0
        %v1204 = vadd.f32 0.0, %v1203
        %v1205 = vpop.f32.mrf.mxu0
        %1206 = vmatprep.mubr.bf16.mxu0 0
        %1207 = vmatmul.mubr.bf16.gmra.mxu0 %v1150
        %v1208 = vpop.f32.mrf.mxu0
        %v1209 = vadd.f32 0.0, %v1208
        %v1210 = vpop.f32.mrf.mxu0
        %v1211 = vpop.f32.mrf.mxu0
        %v1212 = vadd.f32 0.0, %v1211
        %v1213 = vpop.f32.mrf.mxu0
        %1214 = vmatprep.mubr.bf16.mxu0 0
        %1215 = vmatmul.mubr.bf16.gmra.mxu0 %v1153
        %v1216 = vpop.f32.mrf.mxu0
        %v1217 = vadd.f32 0.0, %v1216
        %v1218 = vpop.f32.mrf.mxu0
        %v1219 = vpop.f32.mrf.mxu0
        %v1220 = vadd.f32 0.0, %v1219
        %v1221 = vpop.f32.mrf.mxu0
        %1222 = vdwg.mxu0
        %v1223 = vadd.f32 %v1113, %v1193
        %v1224 = vadd.f32 %v1114, %v1196
        %v1225 = vadd.f32 %v1115, %v1201
        %v1226 = vadd.f32 %v1116, %v1204
        %v1227 = vadd.f32 %v1117, %v1209
        %v1228 = vadd.f32 %v1118, %v1212
        %v1229 = vadd.f32 %v1119, %v1217
        %v1230 = vadd.f32 %v1120, %v1220
        %s1231 = scalar_lea.vmem [#allocation2], 64
        %s1232 = scalar_lea.vmem %s1231, 7 [#allocation2]
        %v1233 = vld [vmem:[%s1232] ss:$2 sm:$0xff]
        %s1234 = scalar_lea.vmem %s1231, 71 [#allocation2]
        %v1235 = vld [vmem:[%s1234] ss:$2 sm:$0xff]
        %s1236 = scalar_lea.vmem %s1231, 135 [#allocation2]
        %v1237 = vld [vmem:[%s1236] ss:$2 sm:$0xff]
        %s1238 = scalar_lea.vmem %s1231, 199 [#allocation2]
        %v1239 = vld [vmem:[%s1238] ss:$2 sm:$0xff]
        %s1240 = scalar_lea.vmem %s1231, 263 [#allocation2]
        %v1241 = vld [vmem:[%s1240] ss:$2 sm:$0xff]
        %s1242 = scalar_lea.vmem %s1231, 327 [#allocation2]
        %v1243 = vld [vmem:[%s1242] ss:$2 sm:$0xff]
        %s1244 = scalar_lea.vmem %s1231, 391 [#allocation2]
        %v1245 = vld [vmem:[%s1244] ss:$2 sm:$0xff]
        %s1246 = scalar_lea.vmem %s1231, 455 [#allocation2]
        %v1247 = vld [vmem:[%s1246] ss:$2 sm:$0xff]
        %v1248 = vpack.c.bf16 %v1235, %v1233
        %v1249 = vpack.c.bf16 %v1239, %v1237
        %v1250 = vpack.c.bf16 %v1243, %v1241
        %v1251 = vpack.c.bf16 %v1247, %v1245
        %s1252 = scalar_lea.vmem %s3, 12
        %v1253 = vld [vmem:[%s1252] sm:$0x3]
        %v1255 = vsel %vm548, %v1248, 0
        %v1258 = vsel %vm548, %v1249, 0
        %v1261 = vsel %vm548, %v1250, 0
        %v1264 = vsel %vm548, %v1251, 0
        %v1267 = vsel %vm642, %v1253, 0
        %1269 = vmatprep.subr.bf16.mxu0 0
        %1270 = vmatpush1.bf16.msra.mxu0 0
        %1271 = vmatprep.subr.bf16.mxu0 0
        %1272 = vmatpush1.bf16.msra.mxu0 0
        %1273 = vmatprep.subr.bf16.mxu0 0
        %1274 = vmatpush1.bf16.msra.mxu0 0
        %1275 = vmatprep.subr.bf16.mxu0 0
        %1276 = vmatpush1.bf16.msra.mxu0 0
        %1277 = vmatprep.subr.bf16.mxu0 0
        %1278 = vmatpush1.bf16.msra.mxu0 0
        %1279 = vmatprep.subr.bf16.mxu0 0
        %1280 = vmatpush1.bf16.msra.mxu0 0
        %1281 = vmatprep.subr.bf16.mxu0 0
        %1282 = vmatpush1.bf16.msra.mxu0 0
        %1283 = vmatprep.subr.bf16.mxu0 0
        %1284 = vmatpush1.bf16.msra.mxu0 %v1267
        %1285 = vmatprep.subr.bf16.mxu0 0
        %1286 = vmatpush2.bf16.msra.mxu0 0
        %1287 = vmatprep.subr.bf16.mxu0 0
        %1288 = vmatpush2.bf16.msra.mxu0 0
        %1289 = vmatprep.subr.bf16.mxu0 0
        %1290 = vmatpush2.bf16.msra.mxu0 0
        %1291 = vmatprep.subr.bf16.mxu0 0
        %1292 = vmatpush2.bf16.msra.mxu0 0
        %1293 = vmatprep.subr.bf16.mxu0 0
        %1294 = vmatpush2.bf16.msra.mxu0 0
        %1295 = vmatprep.subr.bf16.mxu0 0
        %1296 = vmatpush2.bf16.msra.mxu0 0
        %1297 = vmatprep.subr.bf16.mxu0 0
        %1298 = vmatpush2.bf16.msra.mxu0 0
        %1299 = vmatprep.subr.bf16.mxu0 0
        %1300 = vmatpush2.bf16.msra.mxu0 0
        %1301 = vmatprep.mubr.bf16.mxu0 0
        %1302 = vmatmul.mubr.bf16.gmra.mxu0 %v1255
        %v1303 = vpop.f32.mrf.mxu0
        %v1304 = vadd.f32 0.0, %v1303
        %v1305 = vpop.f32.mrf.mxu0
        %v1306 = vpop.f32.mrf.mxu0
        %v1307 = vadd.f32 0.0, %v1306
        %v1308 = vpop.f32.mrf.mxu0
        %1309 = vmatprep.mubr.bf16.mxu0 0
        %1310 = vmatmul.mubr.bf16.gmra.mxu0 %v1258
        %v1311 = vpop.f32.mrf.mxu0
        %v1312 = vadd.f32 0.0, %v1311
        %v1313 = vpop.f32.mrf.mxu0
        %v1314 = vpop.f32.mrf.mxu0
        %v1315 = vadd.f32 0.0, %v1314
        %v1316 = vpop.f32.mrf.mxu0
        %1317 = vmatprep.mubr.bf16.mxu0 0
        %1318 = vmatmul.mubr.bf16.gmra.mxu0 %v1261
        %v1319 = vpop.f32.mrf.mxu0
        %v1320 = vadd.f32 0.0, %v1319
        %v1321 = vpop.f32.mrf.mxu0
        %v1322 = vpop.f32.mrf.mxu0
        %v1323 = vadd.f32 0.0, %v1322
        %v1324 = vpop.f32.mrf.mxu0
        %1325 = vmatprep.mubr.bf16.mxu0 0
        %1326 = vmatmul.mubr.bf16.gmra.mxu0 %v1264
        %v1327 = vpop.f32.mrf.mxu0
        %v1328 = vadd.f32 0.0, %v1327
        %v1329 = vpop.f32.mrf.mxu0
        %v1330 = vpop.f32.mrf.mxu0
        %v1331 = vadd.f32 0.0, %v1330
        %v1332 = vpop.f32.mrf.mxu0
        %1333 = vdwg.mxu0
        %v1334 = vadd.f32 %v1223, %v1304
        %v1335 = vadd.f32 %v1224, %v1307
        %v1336 = vadd.f32 %v1225, %v1312
        %v1337 = vadd.f32 %v1226, %v1315
        %v1338 = vadd.f32 %v1227, %v1320
        %v1339 = vadd.f32 %v1228, %v1323
        %v1340 = vadd.f32 %v1229, %v1328
        %v1341 = vadd.f32 %v1230, %v1331
        %s1342 = scalar_lea.vmem %s1231, 8 [#allocation2]
        %v1343 = vld [vmem:[%s1342] ss:$2 sm:$0xff]
        %s1344 = scalar_lea.vmem %s1231, 72 [#allocation2]
        %v1345 = vld [vmem:[%s1344] ss:$2 sm:$0xff]
        %s1346 = scalar_lea.vmem %s1231, 136 [#allocation2]
        %v1347 = vld [vmem:[%s1346] ss:$2 sm:$0xff]
        %s1348 = scalar_lea.vmem %s1231, 200 [#allocation2]
        %v1349 = vld [vmem:[%s1348] ss:$2 sm:$0xff]
        %s1350 = scalar_lea.vmem %s1231, 264 [#allocation2]
        %v1351 = vld [vmem:[%s1350] ss:$2 sm:$0xff]
        %s1352 = scalar_lea.vmem %s1231, 328 [#allocation2]
        %v1353 = vld [vmem:[%s1352] ss:$2 sm:$0xff]
        %s1354 = scalar_lea.vmem %s1231, 392 [#allocation2]
        %v1355 = vld [vmem:[%s1354] ss:$2 sm:$0xff]
        %s1356 = scalar_lea.vmem %s1231, 456 [#allocation2]
        %v1357 = vld [vmem:[%s1356] ss:$2 sm:$0xff]
        %v1358 = vpack.c.bf16 %v1345, %v1343
        %v1359 = vpack.c.bf16 %v1349, %v1347
        %v1360 = vpack.c.bf16 %v1353, %v1351
        %v1361 = vpack.c.bf16 %v1357, %v1355
        %s1362 = scalar_lea.vmem %s3, 14
        %v1363 = vld [vmem:[%s1362] sm:$0x3]
        %v1365 = vsel %vm548, %v1358, 0
        %v1368 = vsel %vm548, %v1359, 0
        %v1371 = vsel %vm548, %v1360, 0
        %v1374 = vsel %vm548, %v1361, 0
        %v1377 = vsel %vm642, %v1363, 0
        %1379 = vmatprep.subr.bf16.mxu0 0
        %1380 = vmatpush1.bf16.msra.mxu0 0
        %1381 = vmatprep.subr.bf16.mxu0 0
        %1382 = vmatpush1.bf16.msra.mxu0 0
        %1383 = vmatprep.subr.bf16.mxu0 0
        %1384 = vmatpush1.bf16.msra.mxu0 0
        %1385 = vmatprep.subr.bf16.mxu0 0
        %1386 = vmatpush1.bf16.msra.mxu0 0
        %1387 = vmatprep.subr.bf16.mxu0 0
        %1388 = vmatpush1.bf16.msra.mxu0 0
        %1389 = vmatprep.subr.bf16.mxu0 0
        %1390 = vmatpush1.bf16.msra.mxu0 0
        %1391 = vmatprep.subr.bf16.mxu0 0
        %1392 = vmatpush1.bf16.msra.mxu0 0
        %1393 = vmatprep.subr.bf16.mxu0 0
        %1394 = vmatpush1.bf16.msra.mxu0 %v1377
        %1395 = vmatprep.subr.bf16.mxu0 0
        %1396 = vmatpush2.bf16.msra.mxu0 0
        %1397 = vmatprep.subr.bf16.mxu0 0
        %1398 = vmatpush2.bf16.msra.mxu0 0
        %1399 = vmatprep.subr.bf16.mxu0 0
        %1400 = vmatpush2.bf16.msra.mxu0 0
        %1401 = vmatprep.subr.bf16.mxu0 0
        %1402 = vmatpush2.bf16.msra.mxu0 0
        %1403 = vmatprep.subr.bf16.mxu0 0
        %1404 = vmatpush2.bf16.msra.mxu0 0
        %1405 = vmatprep.subr.bf16.mxu0 0
        %1406 = vmatpush2.bf16.msra.mxu0 0
        %1407 = vmatprep.subr.bf16.mxu0 0
        %1408 = vmatpush2.bf16.msra.mxu0 0
        %1409 = vmatprep.subr.bf16.mxu0 0
        %1410 = vmatpush2.bf16.msra.mxu0 0
        %1411 = vmatprep.mubr.bf16.mxu0 0
        %1412 = vmatmul.mubr.bf16.gmra.mxu0 %v1365
        %v1413 = vpop.f32.mrf.mxu0
        %v1414 = vadd.f32 0.0, %v1413
        %v1415 = vpop.f32.mrf.mxu0
        %v1416 = vpop.f32.mrf.mxu0
        %v1417 = vadd.f32 0.0, %v1416
        %v1418 = vpop.f32.mrf.mxu0
        %1419 = vmatprep.mubr.bf16.mxu0 0
        %1420 = vmatmul.mubr.bf16.gmra.mxu0 %v1368
        %v1421 = vpop.f32.mrf.mxu0
        %v1422 = vadd.f32 0.0, %v1421
        %v1423 = vpop.f32.mrf.mxu0
        %v1424 = vpop.f32.mrf.mxu0
        %v1425 = vadd.f32 0.0, %v1424
        %v1426 = vpop.f32.mrf.mxu0
        %1427 = vmatprep.mubr.bf16.mxu0 0
        %1428 = vmatmul.mubr.bf16.gmra.mxu0 %v1371
        %v1429 = vpop.f32.mrf.mxu0
        %v1430 = vadd.f32 0.0, %v1429
        %v1431 = vpop.f32.mrf.mxu0
        %v1432 = vpop.f32.mrf.mxu0
        %v1433 = vadd.f32 0.0, %v1432
        %v1434 = vpop.f32.mrf.mxu0
        %1435 = vmatprep.mubr.bf16.mxu0 0
        %1436 = vmatmul.mubr.bf16.gmra.mxu0 %v1374
        %v1437 = vpop.f32.mrf.mxu0
        %v1438 = vadd.f32 0.0, %v1437
        %v1439 = vpop.f32.mrf.mxu0
        %v1440 = vpop.f32.mrf.mxu0
        %v1441 = vadd.f32 0.0, %v1440
        %v1442 = vpop.f32.mrf.mxu0
        %1443 = vdwg.mxu0
        %v1444 = vadd.f32 %v1334, %v1414
        %v1445 = vadd.f32 %v1335, %v1417
        %v1446 = vadd.f32 %v1336, %v1422
        %v1447 = vadd.f32 %v1337, %v1425
        %v1448 = vadd.f32 %v1338, %v1430
        %v1449 = vadd.f32 %v1339, %v1433
        %v1450 = vadd.f32 %v1340, %v1438
        %v1451 = vadd.f32 %v1341, %v1441
        %s1452 = scalar_lea.vmem %s1231, 9 [#allocation2]
        %v1453 = vld [vmem:[%s1452] ss:$2 sm:$0xff]
        %s1454 = scalar_lea.vmem %s1231, 73 [#allocation2]
        %v1455 = vld [vmem:[%s1454] ss:$2 sm:$0xff]
        %s1456 = scalar_lea.vmem %s1231, 137 [#allocation2]
        %v1457 = vld [vmem:[%s1456] ss:$2 sm:$0xff]
        %s1458 = scalar_lea.vmem %s1231, 201 [#allocation2]
        %v1459 = vld [vmem:[%s1458] ss:$2 sm:$0xff]
        %s1460 = scalar_lea.vmem %s1231, 265 [#allocation2]
        %v1461 = vld [vmem:[%s1460] ss:$2 sm:$0xff]
        %s1462 = scalar_lea.vmem %s1231, 329 [#allocation2]
        %v1463 = vld [vmem:[%s1462] ss:$2 sm:$0xff]
        %s1464 = scalar_lea.vmem %s1231, 393 [#allocation2]
        %v1465 = vld [vmem:[%s1464] ss:$2 sm:$0xff]
        %s1466 = scalar_lea.vmem %s1231, 457 [#allocation2]
        %v1467 = vld [vmem:[%s1466] ss:$2 sm:$0xff]
        %v1468 = vpack.c.bf16 %v1455, %v1453
        %v1469 = vpack.c.bf16 %v1459, %v1457
        %v1470 = vpack.c.bf16 %v1463, %v1461
        %v1471 = vpack.c.bf16 %v1467, %v1465
        %s1472 = scalar_lea.vmem %s3, 16
        %v1473 = vld [vmem:[%s1472] sm:$0x3]
        %v1475 = vsel %vm548, %v1468, 0
        %v1478 = vsel %vm548, %v1469, 0
        %v1481 = vsel %vm548, %v1470, 0
        %v1484 = vsel %vm548, %v1471, 0
        %v1487 = vsel %vm642, %v1473, 0
        %1489 = vmatprep.subr.bf16.mxu0 0
        %1490 = vmatpush1.bf16.msra.mxu0 0
        %1491 = vmatprep.subr.bf16.mxu0 0
        %1492 = vmatpush1.bf16.msra.mxu0 0
        %1493 = vmatprep.subr.bf16.mxu0 0
        %1494 = vmatpush1.bf16.msra.mxu0 0
        %1495 = vmatprep.subr.bf16.mxu0 0
        %1496 = vmatpush1.bf16.msra.mxu0 0
        %1497 = vmatprep.subr.bf16.mxu0 0
        %1498 = vmatpush1.bf16.msra.mxu0 0
        %1499 = vmatprep.subr.bf16.mxu0 0
        %1500 = vmatpush1.bf16.msra.mxu0 0
        %1501 = vmatprep.subr.bf16.mxu0 0
        %1502 = vmatpush1.bf16.msra.mxu0 0
        %1503 = vmatprep.subr.bf16.mxu0 0
        %1504 = vmatpush1.bf16.msra.mxu0 %v1487
        %1505 = vmatprep.subr.bf16.mxu0 0
        %1506 = vmatpush2.bf16.msra.mxu0 0
        %1507 = vmatprep.subr.bf16.mxu0 0
        %1508 = vmatpush2.bf16.msra.mxu0 0
        %1509 = vmatprep.subr.bf16.mxu0 0
        %1510 = vmatpush2.bf16.msra.mxu0 0
        %1511 = vmatprep.subr.bf16.mxu0 0
        %1512 = vmatpush2.bf16.msra.mxu0 0
        %1513 = vmatprep.subr.bf16.mxu0 0
        %1514 = vmatpush2.bf16.msra.mxu0 0
        %1515 = vmatprep.subr.bf16.mxu0 0
        %1516 = vmatpush2.bf16.msra.mxu0 0
        %1517 = vmatprep.subr.bf16.mxu0 0
        %1518 = vmatpush2.bf16.msra.mxu0 0
        %1519 = vmatprep.subr.bf16.mxu0 0
        %1520 = vmatpush2.bf16.msra.mxu0 0
        %1521 = vmatprep.mubr.bf16.mxu0 0
        %1522 = vmatmul.mubr.bf16.gmra.mxu0 %v1475
        %v1523 = vpop.f32.mrf.mxu0
        %v1524 = vadd.f32 0.0, %v1523
        %v1525 = vpop.f32.mrf.mxu0
        %v1526 = vpop.f32.mrf.mxu0
        %v1527 = vadd.f32 0.0, %v1526
        %v1528 = vpop.f32.mrf.mxu0
        %1529 = vmatprep.mubr.bf16.mxu0 0
        %1530 = vmatmul.mubr.bf16.gmra.mxu0 %v1478
        %v1531 = vpop.f32.mrf.mxu0
        %v1532 = vadd.f32 0.0, %v1531
        %v1533 = vpop.f32.mrf.mxu0
        %v1534 = vpop.f32.mrf.mxu0
        %v1535 = vadd.f32 0.0, %v1534
        %v1536 = vpop.f32.mrf.mxu0
        %1537 = vmatprep.mubr.bf16.mxu0 0
        %1538 = vmatmul.mubr.bf16.gmra.mxu0 %v1481
        %v1539 = vpop.f32.mrf.mxu0
        %v1540 = vadd.f32 0.0, %v1539
        %v1541 = vpop.f32.mrf.mxu0
        %v1542 = vpop.f32.mrf.mxu0
        %v1543 = vadd.f32 0.0, %v1542
        %v1544 = vpop.f32.mrf.mxu0
        %1545 = vmatprep.mubr.bf16.mxu0 0
        %1546 = vmatmul.mubr.bf16.gmra.mxu0 %v1484
        %v1547 = vpop.f32.mrf.mxu0
        %v1548 = vadd.f32 0.0, %v1547
        %v1549 = vpop.f32.mrf.mxu0
        %v1550 = vpop.f32.mrf.mxu0
        %v1551 = vadd.f32 0.0, %v1550
        %v1552 = vpop.f32.mrf.mxu0
        %1553 = vdwg.mxu0
        %v1554 = vadd.f32 %v1444, %v1524
        %v1555 = vadd.f32 %v1445, %v1527
        %v1556 = vadd.f32 %v1446, %v1532
        %v1557 = vadd.f32 %v1447, %v1535
        %v1558 = vadd.f32 %v1448, %v1540
        %v1559 = vadd.f32 %v1449, %v1543
        %v1560 = vadd.f32 %v1450, %v1548
        %v1561 = vadd.f32 %v1451, %v1551
        %v1562 = vld [vmem:[%s7] sm:$0x3]
        %v1564 = vsel %vm642, %v1562, 0
        %1566 = vmatprep.subr.bf16.mxu0 0
        %1567 = vmatpush1.bf16.msra.mxu0 0
        %1568 = vmatprep.subr.bf16.mxu0 0
        %1569 = vmatpush1.bf16.msra.mxu0 0
        %1570 = vmatprep.subr.bf16.mxu0 0
        %1571 = vmatpush1.bf16.msra.mxu0 0
        %1572 = vmatprep.subr.bf16.mxu0 0
        %1573 = vmatpush1.bf16.msra.mxu0 0
        %1574 = vmatprep.subr.bf16.mxu0 0
        %1575 = vmatpush1.bf16.msra.mxu0 0
        %1576 = vmatprep.subr.bf16.mxu0 0
        %1577 = vmatpush1.bf16.msra.mxu0 0
        %1578 = vmatprep.subr.bf16.mxu0 0
        %1579 = vmatpush1.bf16.msra.mxu0 0
        %1580 = vmatprep.subr.bf16.mxu0 0
        %1581 = vmatpush1.bf16.msra.mxu0 %v1564
        %1582 = vmatprep.subr.bf16.mxu0 0
        %1583 = vmatpush2.bf16.msra.mxu0 0
        %1584 = vmatprep.subr.bf16.mxu0 0
        %1585 = vmatpush2.bf16.msra.mxu0 0
        %1586 = vmatprep.subr.bf16.mxu0 0
        %1587 = vmatpush2.bf16.msra.mxu0 0
        %1588 = vmatprep.subr.bf16.mxu0 0
        %1589 = vmatpush2.bf16.msra.mxu0 0
        %1590 = vmatprep.subr.bf16.mxu0 0
        %1591 = vmatpush2.bf16.msra.mxu0 0
        %1592 = vmatprep.subr.bf16.mxu0 0
        %1593 = vmatpush2.bf16.msra.mxu0 0
        %1594 = vmatprep.subr.bf16.mxu0 0
        %1595 = vmatpush2.bf16.msra.mxu0 0
        %1596 = vmatprep.subr.bf16.mxu0 0
        %1597 = vmatpush2.bf16.msra.mxu0 0
        %1598 = vmatprep.mubr.bf16.mxu0 0
        %1599 = vmatmul.mubr.bf16.gmra.mxu0 %v1034
        %v1600 = vpop.f32.mrf.mxu0
        %v1601 = vadd.f32 0.0, %v1600
        %v1602 = vpop.f32.mrf.mxu0
        %v1603 = vpop.f32.mrf.mxu0
        %v1604 = vadd.f32 0.0, %v1603
        %v1605 = vpop.f32.mrf.mxu0
        %1606 = vmatprep.mubr.bf16.mxu0 0
        %1607 = vmatmul.mubr.bf16.gmra.mxu0 %v1037
        %v1608 = vpop.f32.mrf.mxu0
        %v1609 = vadd.f32 0.0, %v1608
        %v1610 = vpop.f32.mrf.mxu0
        %v1611 = vpop.f32.mrf.mxu0
        %v1612 = vadd.f32 0.0, %v1611
        %v1613 = vpop.f32.mrf.mxu0
        %1614 = vmatprep.mubr.bf16.mxu0 0
        %1615 = vmatmul.mubr.bf16.gmra.mxu0 %v1040
        %v1616 = vpop.f32.mrf.mxu0
        %v1617 = vadd.f32 0.0, %v1616
        %v1618 = vpop.f32.mrf.mxu0
        %v1619 = vpop.f32.mrf.mxu0
        %v1620 = vadd.f32 0.0, %v1619
        %v1621 = vpop.f32.mrf.mxu0
        %1622 = vmatprep.mubr.bf16.mxu0 0
        %1623 = vmatmul.mubr.bf16.gmra.mxu0 %v1043
        %v1624 = vpop.f32.mrf.mxu0
        %v1625 = vadd.f32 0.0, %v1624
        %v1626 = vpop.f32.mrf.mxu0
        %v1627 = vpop.f32.mrf.mxu0
        %v1628 = vadd.f32 0.0, %v1627
        %v1629 = vpop.f32.mrf.mxu0
        %1630 = vdwg.mxu0
        %v1631 = vld [vmem:[%s4] sm:$0x1]
        %v1633 = vlaneseq
        %v1634 = vshrl.u32 %v1633, 7
        %v1635 = vsub.s32 0, %v1634
        %v1636 = vrot.slane %v1631, %v1635
        %v1638 = vmul.f32 %v1554, %v1636
        %v1639 = vmul.f32 %v1555, %v1636
        %v1640 = vmul.f32 %v1556, %v1636
        %v1641 = vmul.f32 %v1557, %v1636
        %v1642 = vmul.f32 %v1558, %v1636
        %v1643 = vmul.f32 %v1559, %v1636
        %v1644 = vmul.f32 %v1560, %v1636
        %v1645 = vmul.f32 %v1561, %v1636
        %v1646 = vld [vmem:[%s5] sm:$0x1]
        %v1648 = vlaneseq
        %v1649 = vshrl.u32 %v1648, 7
        %v1650 = vsub.s32 0, %v1649
        %v1651 = vrot.slane %v1646, %v1650
        %v1653 = vadd.f32 %v1638, %v1651
        %v1654 = vadd.f32 %v1639, %v1651
        %v1655 = vadd.f32 %v1640, %v1651
        %v1656 = vadd.f32 %v1641, %v1651
        %v1657 = vadd.f32 %v1642, %v1651
        %v1658 = vadd.f32 %v1643, %v1651
        %v1659 = vadd.f32 %v1644, %v1651
        %v1660 = vadd.f32 %v1645, %v1651
        %vm1661 = vcmp.gt.f32.partialorder %v1653, 0.0
        %vm1662 = vcmp.gt.f32.partialorder %v1654, 0.0
        %vm1663 = vcmp.gt.f32.partialorder %v1655, 0.0
        %vm1664 = vcmp.gt.f32.partialorder %v1656, 0.0
        %vm1665 = vcmp.gt.f32.partialorder %v1657, 0.0
        %vm1666 = vcmp.gt.f32.partialorder %v1658, 0.0
        %vm1667 = vcmp.gt.f32.partialorder %v1659, 0.0
        %vm1668 = vcmp.gt.f32.partialorder %v1660, 0.0
        %v1669 = vmul.f32 %v1653, 0.1
        %v1670 = vmul.f32 %v1654, 0.1
        %v1671 = vmul.f32 %v1655, 0.1
        %v1672 = vmul.f32 %v1656, 0.1
        %v1673 = vmul.f32 %v1657, 0.1
        %v1674 = vmul.f32 %v1658, 0.1
        %v1675 = vmul.f32 %v1659, 0.1
        %v1676 = vmul.f32 %v1660, 0.1
        %v1677 = vsel %vm1661, %v1653, %v1669
        %v1678 = vsel %vm1662, %v1654, %v1670
        %v1679 = vsel %vm1663, %v1655, %v1671
        %v1680 = vsel %vm1664, %v1656, %v1672
        %v1681 = vsel %vm1665, %v1657, %v1673
        %v1682 = vsel %vm1666, %v1658, %v1674
        %v1683 = vsel %vm1667, %v1659, %v1675
        %v1684 = vsel %vm1668, %v1660, %v1676
        %vm1685 = vcmask 57344
        %1686 = vst.msk [vmem:[#allocation3 + $0x7] sm:$0x1] %vm1685, 0.0
        %1687 = vst.msk [vmem:[#allocation3 + $0x1f] sm:$0x1] %vm1685, 0.0
        %1688 = vst.msk [vmem:[#allocation3 + $0x37] sm:$0x1] %vm1685, 0.0
        %1689 = vst.msk [vmem:[#allocation3 + $0x4f] sm:$0x1] %vm1685, 0.0
        %1690 = vst.msk [vmem:[#allocation3 + $0x67] sm:$0x1] %vm1685, 0.0
        %1691 = vst.msk [vmem:[#allocation3 + $0x7f] sm:$0x1] %vm1685, 0.0
        %1692 = vst.msk [vmem:[#allocation3 + $0x97] sm:$0x1] %vm1685, 0.0
        %1693 = vst.msk [vmem:[#allocation3 + $0xaf] sm:$0x1] %vm1685, 0.0
        %1694 = vst.msk [vmem:[#allocation3 + $0xc7] sm:$0x1] %vm1685, 0.0
        %1695 = vst.msk [vmem:[#allocation3 + $0xdf] sm:$0x1] %vm1685, 0.0
        %1696 = vst.msk [vmem:[#allocation3 + $0x10] sm:$0x1] %vm1685, 0.0
        %1697 = vst.msk [vmem:[#allocation3 + $0x28] sm:$0x1] %vm1685, 0.0
        %1698 = vst.msk [vmem:[#allocation3 + $0x40] sm:$0x1] %vm1685, 0.0
        %1699 = vst.msk [vmem:[#allocation3 + $0x58] sm:$0x1] %vm1685, 0.0
        %1700 = vst.msk [vmem:[#allocation3 + $0x70] sm:$0x1] %vm1685, 0.0
        %1701 = vst.msk [vmem:[#allocation3 + $0x88] sm:$0x1] %vm1685, 0.0
        %1702 = vst.msk [vmem:[#allocation3 + $0xa0] sm:$0x1] %vm1685, 0.0
        %1703 = vst.msk [vmem:[#allocation3 + $0xb8] sm:$0x1] %vm1685, 0.0
        %1704 = vst.msk [vmem:[#allocation3 + $0xd0] sm:$0x1] %vm1685, 0.0
        %1705 = vst.msk [vmem:[#allocation3 + $0xe8] sm:$0x1] %vm1685, 0.0
        %vm1706 = vcmask 64512
        %1707 = vst.msk [vmem:[#allocation3 + $0x8] sm:$0xff] %vm1706, 0.0
        %s1708 = scalar_lea.vmem [#allocation3], 216
        %1709 = vst.msk [vmem:[%s1708 + $0x8] sm:$0xff] %vm1706, 0.0
        %s1710 = scalar_lea.vmem [#allocation3], 24
        %1711 = vst.msk [vmem:[%s1710 + $0x8] sm:$0xff] %vm1706, %v1677
        %1712 = vst.msk [vmem:[%s1710 + $0x20] sm:$0xff] %vm1706, %v1678
        %1713 = vst.msk [vmem:[%s1710 + $0x38] sm:$0xff] %vm1706, %v1679
        %1714 = vst.msk [vmem:[%s1710 + $0x50] sm:$0xff] %vm1706, %v1680
        %1715 = vst.msk [vmem:[%s1710 + $0x68] sm:$0xff] %vm1706, %v1681
        %1716 = vst.msk [vmem:[%s1710 + $0x80] sm:$0xff] %vm1706, %v1682
        %1717 = vst.msk [vmem:[%s1710 + $0x98] sm:$0xff] %vm1706, %v1683
        %1718 = vst.msk [vmem:[%s1710 + $0xb0] sm:$0xff] %vm1706, %v1684
        %v1719 = vld [vmem:[#allocation3 + $0x7] sm:$0xff]
        %v1720 = vld [vmem:[#allocation3 + $0x1f] sm:$0xff]
        %v1721 = vld [vmem:[#allocation3 + $0x37] sm:$0xff]
        %v1722 = vld [vmem:[#allocation3 + $0x4f] sm:$0xff]
        %v1723 = vld [vmem:[#allocation3 + $0x67] sm:$0xff]
        %v1724 = vld [vmem:[#allocation3 + $0x7f] sm:$0xff]
        %v1725 = vld [vmem:[#allocation3 + $0x97] sm:$0xff]
        %v1726 = vld [vmem:[#allocation3 + $0xaf] sm:$0xff]
        %v1727 = vpack.c.bf16 %v1720, %v1719
        %v1728 = vpack.c.bf16 %v1722, %v1721
        %v1729 = vpack.c.bf16 %v1724, %v1723
        %v1730 = vpack.c.bf16 %v1726, %v1725
        %v1731 = vld [vmem:[%s6] sm:$0xf]
        %v1732 = vld [vmem:[#allocation3 + $0x8] sm:$0xff]
        %v1733 = vld [vmem:[#allocation3 + $0x20] sm:$0xff]
        %v1734 = vld [vmem:[#allocation3 + $0x38] sm:$0xff]
        %v1735 = vld [vmem:[#allocation3 + $0x50] sm:$0xff]
        %v1736 = vld [vmem:[#allocation3 + $0x68] sm:$0xff]
        %v1737 = vld [vmem:[#allocation3 + $0x80] sm:$0xff]
        %v1738 = vld [vmem:[#allocation3 + $0x98] sm:$0xff]
        %v1739 = vld [vmem:[#allocation3 + $0xb0] sm:$0xff]
        %v1740 = vpack.c.bf16 %v1733, %v1732
        %v1741 = vpack.c.bf16 %v1735, %v1734
        %v1742 = vpack.c.bf16 %v1737, %v1736
        %v1743 = vpack.c.bf16 %v1739, %v1738
        %s1744 = scalar_lea.vmem %s6, 4
        %v1745 = vld [vmem:[%s1744] sm:$0xf]
        %v1747 = vsel %vm1706, %v1740, 0
        %v1750 = vsel %vm1706, %v1741, 0
        %v1753 = vsel %vm1706, %v1742, 0
        %v1756 = vsel %vm1706, %v1743, 0
        %vm1758 = vcmask 1043456
        %v1760 = vsel %vm1758, %v1745, 0
        %1762 = vmatprep.subr.bf16.mxu0 0
        %1763 = vmatpush1.bf16.msra.mxu0 0
        %1764 = vmatprep.subr.bf16.mxu0 0
        %1765 = vmatpush1.bf16.msra.mxu0 0
        %1766 = vmatprep.subr.bf16.mxu0 0
        %1767 = vmatpush1.bf16.msra.mxu0 0
        %1768 = vmatprep.subr.bf16.mxu0 0
        %1769 = vmatpush1.bf16.msra.mxu0 0
        %1770 = vmatprep.subr.bf16.mxu0 0
        %1771 = vmatpush1.bf16.msra.mxu0 0
        %1772 = vmatprep.subr.bf16.mxu0 0
        %1773 = vmatpush1.bf16.msra.mxu0 0
        %1774 = vmatprep.subr.bf16.mxu0 0
        %1775 = vmatpush1.bf16.msra.mxu0 0
        %1776 = vmatprep.subr.bf16.mxu0 0
        %1777 = vmatpush1.bf16.msra.mxu0 %v1760
        %1778 = vmatprep.subr.bf16.mxu0 0
        %1779 = vmatpush2.bf16.msra.mxu0 0
        %1780 = vmatprep.subr.bf16.mxu0 0
        %1781 = vmatpush2.bf16.msra.mxu0 0
        %1782 = vmatprep.subr.bf16.mxu0 0
        %1783 = vmatpush2.bf16.msra.mxu0 0
        %1784 = vmatprep.subr.bf16.mxu0 0
        %1785 = vmatpush2.bf16.msra.mxu0 0
        %1786 = vmatprep.subr.bf16.mxu0 0
        %1787 = vmatpush2.bf16.msra.mxu0 0
        %1788 = vmatprep.subr.bf16.mxu0 0
        %1789 = vmatpush2.bf16.msra.mxu0 0
        %1790 = vmatprep.subr.bf16.mxu0 0
        %1791 = vmatpush2.bf16.msra.mxu0 0
        %1792 = vmatprep.subr.bf16.mxu0 0
        %1793 = vmatpush2.bf16.msra.mxu0 0
        %1794 = vmatprep.mubr.bf16.mxu0 0
        %1795 = vmatmul.mubr.bf16.gmra.mxu0 %v1747
        %v1796 = vpop.f32.mrf.mxu0
        %v1797 = vadd.f32 0.0, %v1796
        %v1798 = vpop.f32.mrf.mxu0
        %v1799 = vpop.f32.mrf.mxu0
        %v1800 = vadd.f32 0.0, %v1799
        %v1801 = vpop.f32.mrf.mxu0
        %1802 = vmatprep.mubr.bf16.mxu0 0
        %1803 = vmatmul.mubr.bf16.gmra.mxu0 %v1750
        %v1804 = vpop.f32.mrf.mxu0
        %v1805 = vadd.f32 0.0, %v1804
        %v1806 = vpop.f32.mrf.mxu0
        %v1807 = vpop.f32.mrf.mxu0
        %v1808 = vadd.f32 0.0, %v1807
        %v1809 = vpop.f32.mrf.mxu0
        %1810 = vmatprep.mubr.bf16.mxu0 0
        %1811 = vmatmul.mubr.bf16.gmra.mxu0 %v1753
        %v1812 = vpop.f32.mrf.mxu0
        %v1813 = vadd.f32 0.0, %v1812
        %v1814 = vpop.f32.mrf.mxu0
        %v1815 = vpop.f32.mrf.mxu0
        %v1816 = vadd.f32 0.0, %v1815
        %v1817 = vpop.f32.mrf.mxu0
        %1818 = vmatprep.mubr.bf16.mxu0 0
        %1819 = vmatmul.mubr.bf16.gmra.mxu0 %v1756
        %v1820 = vpop.f32.mrf.mxu0
        %v1821 = vadd.f32 0.0, %v1820
        %v1822 = vpop.f32.mrf.mxu0
        %v1823 = vpop.f32.mrf.mxu0
        %v1824 = vadd.f32 0.0, %v1823
        %v1825 = vpop.f32.mrf.mxu0
        %1826 = vdwg.mxu0
        %v1828 = vsel %vm1706, %v1727, 0
        %v1831 = vsel %vm1706, %v1728, 0
        %v1834 = vsel %vm1706, %v1729, 0
        %v1837 = vsel %vm1706, %v1730, 0
        %v1840 = vsel %vm1758, %v1731, 0
        %1842 = vmatprep.subr.bf16.mxu0 0
        %1843 = vmatpush1.bf16.msra.mxu0 0
        %1844 = vmatprep.subr.bf16.mxu0 0
        %1845 = vmatpush1.bf16.msra.mxu0 0
        %1846 = vmatprep.subr.bf16.mxu0 0
        %1847 = vmatpush1.bf16.msra.mxu0 0
        %1848 = vmatprep.subr.bf16.mxu0 0
        %1849 = vmatpush1.bf16.msra.mxu0 0
        %1850 = vmatprep.subr.bf16.mxu0 0
        %1851 = vmatpush1.bf16.msra.mxu0 0
        %1852 = vmatprep.subr.bf16.mxu0 0
        %1853 = vmatpush1.bf16.msra.mxu0 0
        %1854 = vmatprep.subr.bf16.mxu0 0
        %1855 = vmatpush1.bf16.msra.mxu0 0
        %1856 = vmatprep.subr.bf16.mxu0 0
        %1857 = vmatpush1.bf16.msra.mxu0 %v1840
        %1858 = vmatprep.subr.bf16.mxu0 0
        %1859 = vmatpush2.bf16.msra.mxu0 0
        %1860 = vmatprep.subr.bf16.mxu0 0
        %1861 = vmatpush2.bf16.msra.mxu0 0
        %1862 = vmatprep.subr.bf16.mxu0 0
        %1863 = vmatpush2.bf16.msra.mxu0 0
        %1864 = vmatprep.subr.bf16.mxu0 0
        %1865 = vmatpush2.bf16.msra.mxu0 0
        %1866 = vmatprep.subr.bf16.mxu0 0
        %1867 = vmatpush2.bf16.msra.mxu0 0
        %1868 = vmatprep.subr.bf16.mxu0 0
        %1869 = vmatpush2.bf16.msra.mxu0 0
        %1870 = vmatprep.subr.bf16.mxu0 0
        %1871 = vmatpush2.bf16.msra.mxu0 0
        %1872 = vmatprep.subr.bf16.mxu0 0
        %1873 = vmatpush2.bf16.msra.mxu0 0
        %1874 = vmatprep.mubr.bf16.mxu0 0
        %1875 = vmatmul.mubr.bf16.gmra.mxu0 %v1828
        %v1876 = vpop.f32.mrf.mxu0
        %v1877 = vadd.f32 %v1797, %v1876
        %v1878 = vpop.f32.mrf.mxu0
        %v1879 = vpop.f32.mrf.mxu0
        %v1880 = vadd.f32 %v1800, %v1879
        %v1881 = vpop.f32.mrf.mxu0
        %1882 = vmatprep.mubr.bf16.mxu0 0
        %1883 = vmatmul.mubr.bf16.gmra.mxu0 %v1831
        %v1884 = vpop.f32.mrf.mxu0
        %v1885 = vadd.f32 %v1805, %v1884
        %v1886 = vpop.f32.mrf.mxu0
        %v1887 = vpop.f32.mrf.mxu0
        %v1888 = vadd.f32 %v1808, %v1887
        %v1889 = vpop.f32.mrf.mxu0
        %1890 = vmatprep.mubr.bf16.mxu0 0
        %1891 = vmatmul.mubr.bf16.gmra.mxu0 %v1834
        %v1892 = vpop.f32.mrf.mxu0
        %v1893 = vadd.f32 %v1813, %v1892
        %v1894 = vpop.f32.mrf.mxu0
        %v1895 = vpop.f32.mrf.mxu0
        %v1896 = vadd.f32 %v1816, %v1895
        %v1897 = vpop.f32.mrf.mxu0
        %1898 = vmatprep.mubr.bf16.mxu0 0
        %1899 = vmatmul.mubr.bf16.gmra.mxu0 %v1837
        %v1900 = vpop.f32.mrf.mxu0
        %v1901 = vadd.f32 %v1821, %v1900
        %v1902 = vpop.f32.mrf.mxu0
        %v1903 = vpop.f32.mrf.mxu0
        %v1904 = vadd.f32 %v1824, %v1903
        %v1905 = vpop.f32.mrf.mxu0
        %1906 = vdwg.mxu0
        %v1907 = vld [vmem:[#allocation3 + $0x9] sm:$0xff]
        %v1908 = vld [vmem:[#allocation3 + $0x21] sm:$0xff]
        %v1909 = vld [vmem:[#allocation3 + $0x39] sm:$0xff]
        %v1910 = vld [vmem:[#allocation3 + $0x51] sm:$0xff]
        %v1911 = vld [vmem:[#allocation3 + $0x69] sm:$0xff]
        %v1912 = vld [vmem:[#allocation3 + $0x81] sm:$0xff]
        %v1913 = vld [vmem:[#allocation3 + $0x99] sm:$0xff]
        %v1914 = vld [vmem:[#allocation3 + $0xb1] sm:$0xff]
        %v1915 = vpack.c.bf16 %v1908, %v1907
        %v1916 = vpack.c.bf16 %v1910, %v1909
        %v1917 = vpack.c.bf16 %v1912, %v1911
        %v1918 = vpack.c.bf16 %v1914, %v1913
        %s1919 = scalar_lea.vmem %s6, 8
        %v1920 = vld [vmem:[%s1919] sm:$0xf]
        %v1922 = vsel %vm1706, %v1915, 0
        %v1925 = vsel %vm1706, %v1916, 0
        %v1928 = vsel %vm1706, %v1917, 0
        %v1931 = vsel %vm1706, %v1918, 0
        %v1934 = vsel %vm1758, %v1920, 0
        %1936 = vmatprep.subr.bf16.mxu0 0
        %1937 = vmatpush1.bf16.msra.mxu0 0
        %1938 = vmatprep.subr.bf16.mxu0 0
        %1939 = vmatpush1.bf16.msra.mxu0 0
        %1940 = vmatprep.subr.bf16.mxu0 0
        %1941 = vmatpush1.bf16.msra.mxu0 0
        %1942 = vmatprep.subr.bf16.mxu0 0
        %1943 = vmatpush1.bf16.msra.mxu0 0
        %1944 = vmatprep.subr.bf16.mxu0 0
        %1945 = vmatpush1.bf16.msra.mxu0 0
        %1946 = vmatprep.subr.bf16.mxu0 0
        %1947 = vmatpush1.bf16.msra.mxu0 0
        %1948 = vmatprep.subr.bf16.mxu0 0
        %1949 = vmatpush1.bf16.msra.mxu0 0
        %1950 = vmatprep.subr.bf16.mxu0 0
        %1951 = vmatpush1.bf16.msra.mxu0 %v1934
        %1952 = vmatprep.subr.bf16.mxu0 0
        %1953 = vmatpush2.bf16.msra.mxu0 0
        %1954 = vmatprep.subr.bf16.mxu0 0
        %1955 = vmatpush2.bf16.msra.mxu0 0
        %1956 = vmatprep.subr.bf16.mxu0 0
        %1957 = vmatpush2.bf16.msra.mxu0 0
        %1958 = vmatprep.subr.bf16.mxu0 0
        %1959 = vmatpush2.bf16.msra.mxu0 0
        %1960 = vmatprep.subr.bf16.mxu0 0
        %1961 = vmatpush2.bf16.msra.mxu0 0
        %1962 = vmatprep.subr.bf16.mxu0 0
        %1963 = vmatpush2.bf16.msra.mxu0 0
        %1964 = vmatprep.subr.bf16.mxu0 0
        %1965 = vmatpush2.bf16.msra.mxu0 0
        %1966 = vmatprep.subr.bf16.mxu0 0
        %1967 = vmatpush2.bf16.msra.mxu0 0
        %1968 = vmatprep.mubr.bf16.mxu0 0
        %1969 = vmatmul.mubr.bf16.gmra.mxu0 %v1922
        %v1970 = vpop.f32.mrf.mxu0
        %v1971 = vadd.f32 0.0, %v1970
        %v1972 = vpop.f32.mrf.mxu0
        %v1973 = vpop.f32.mrf.mxu0
        %v1974 = vadd.f32 0.0, %v1973
        %v1975 = vpop.f32.mrf.mxu0
        %1976 = vmatprep.mubr.bf16.mxu0 0
        %1977 = vmatmul.mubr.bf16.gmra.mxu0 %v1925
        %v1978 = vpop.f32.mrf.mxu0
        %v1979 = vadd.f32 0.0, %v1978
        %v1980 = vpop.f32.mrf.mxu0
        %v1981 = vpop.f32.mrf.mxu0
        %v1982 = vadd.f32 0.0, %v1981
        %v1983 = vpop.f32.mrf.mxu0
        %1984 = vmatprep.mubr.bf16.mxu0 0
        %1985 = vmatmul.mubr.bf16.gmra.mxu0 %v1928
        %v1986 = vpop.f32.mrf.mxu0
        %v1987 = vadd.f32 0.0, %v1986
        %v1988 = vpop.f32.mrf.mxu0
        %v1989 = vpop.f32.mrf.mxu0
        %v1990 = vadd.f32 0.0, %v1989
        %v1991 = vpop.f32.mrf.mxu0
        %1992 = vmatprep.mubr.bf16.mxu0 0
        %1993 = vmatmul.mubr.bf16.gmra.mxu0 %v1931
        %v1994 = vpop.f32.mrf.mxu0
        %v1995 = vadd.f32 0.0, %v1994
        %v1996 = vpop.f32.mrf.mxu0
        %v1997 = vpop.f32.mrf.mxu0
        %v1998 = vadd.f32 0.0, %v1997
        %v1999 = vpop.f32.mrf.mxu0
        %2000 = vdwg.mxu0
        %v2001 = vadd.f32 %v1877, %v1971
        %v2002 = vadd.f32 %v1880, %v1974
        %v2003 = vadd.f32 %v1885, %v1979
        %v2004 = vadd.f32 %v1888, %v1982
        %v2005 = vadd.f32 %v1893, %v1987
        %v2006 = vadd.f32 %v1896, %v1990
        %v2007 = vadd.f32 %v1901, %v1995
        %v2008 = vadd.f32 %v1904, %v1998
        %v2009 = vld [vmem:[%s1710 + $0x7] sm:$0xff]
        %v2010 = vld [vmem:[%s1710 + $0x1f] sm:$0xff]
        %v2011 = vld [vmem:[%s1710 + $0x37] sm:$0xff]
        %v2012 = vld [vmem:[%s1710 + $0x4f] sm:$0xff]
        %v2013 = vld [vmem:[%s1710 + $0x67] sm:$0xff]
        %v2014 = vld [vmem:[%s1710 + $0x7f] sm:$0xff]
        %v2015 = vld [vmem:[%s1710 + $0x97] sm:$0xff]
        %v2016 = vld [vmem:[%s1710 + $0xaf] sm:$0xff]
        %v2017 = vpack.c.bf16 %v2010, %v2009
        %v2018 = vpack.c.bf16 %v2012, %v2011
        %v2019 = vpack.c.bf16 %v2014, %v2013
        %v2020 = vpack.c.bf16 %v2016, %v2015
        %s2021 = scalar_lea.vmem %s6, 12
        %v2022 = vld [vmem:[%s2021] sm:$0xf]
        %v2024 = vsel %vm1706, %v2017, 0
        %v2027 = vsel %vm1706, %v2018, 0
        %v2030 = vsel %vm1706, %v2019, 0
        %v2033 = vsel %vm1706, %v2020, 0
        %v2036 = vsel %vm1758, %v2022, 0
        %2038 = vmatprep.subr.bf16.mxu0 0
        %2039 = vmatpush1.bf16.msra.mxu0 0
        %2040 = vmatprep.subr.bf16.mxu0 0
        %2041 = vmatpush1.bf16.msra.mxu0 0
        %2042 = vmatprep.subr.bf16.mxu0 0
        %2043 = vmatpush1.bf16.msra.mxu0 0
        %2044 = vmatprep.subr.bf16.mxu0 0
        %2045 = vmatpush1.bf16.msra.mxu0 0
        %2046 = vmatprep.subr.bf16.mxu0 0
        %2047 = vmatpush1.bf16.msra.mxu0 0
        %2048 = vmatprep.subr.bf16.mxu0 0
        %2049 = vmatpush1.bf16.msra.mxu0 0
        %2050 = vmatprep.subr.bf16.mxu0 0
        %2051 = vmatpush1.bf16.msra.mxu0 0
        %2052 = vmatprep.subr.bf16.mxu0 0
        %2053 = vmatpush1.bf16.msra.mxu0 %v2036
        %2054 = vmatprep.subr.bf16.mxu0 0
        %2055 = vmatpush2.bf16.msra.mxu0 0
        %2056 = vmatprep.subr.bf16.mxu0 0
        %2057 = vmatpush2.bf16.msra.mxu0 0
        %2058 = vmatprep.subr.bf16.mxu0 0
        %2059 = vmatpush2.bf16.msra.mxu0 0
        %2060 = vmatprep.subr.bf16.mxu0 0
        %2061 = vmatpush2.bf16.msra.mxu0 0
        %2062 = vmatprep.subr.bf16.mxu0 0
        %2063 = vmatpush2.bf16.msra.mxu0 0
        %2064 = vmatprep.subr.bf16.mxu0 0
        %2065 = vmatpush2.bf16.msra.mxu0 0
        %2066 = vmatprep.subr.bf16.mxu0 0
        %2067 = vmatpush2.bf16.msra.mxu0 0
        %2068 = vmatprep.subr.bf16.mxu0 0
        %2069 = vmatpush2.bf16.msra.mxu0 0
        %2070 = vmatprep.mubr.bf16.mxu0 0
        %2071 = vmatmul.mubr.bf16.gmra.mxu0 %v2024
        %v2072 = vpop.f32.mrf.mxu0
        %v2073 = vadd.f32 0.0, %v2072
        %v2074 = vpop.f32.mrf.mxu0
        %v2075 = vpop.f32.mrf.mxu0
        %v2076 = vadd.f32 0.0, %v2075
        %v2077 = vpop.f32.mrf.mxu0
        %2078 = vmatprep.mubr.bf16.mxu0 0
        %2079 = vmatmul.mubr.bf16.gmra.mxu0 %v2027
        %v2080 = vpop.f32.mrf.mxu0
        %v2081 = vadd.f32 0.0, %v2080
        %v2082 = vpop.f32.mrf.mxu0
        %v2083 = vpop.f32.mrf.mxu0
        %v2084 = vadd.f32 0.0, %v2083
        %v2085 = vpop.f32.mrf.mxu0
        %2086 = vmatprep.mubr.bf16.mxu0 0
        %2087 = vmatmul.mubr.bf16.gmra.mxu0 %v2030
        %v2088 = vpop.f32.mrf.mxu0
        %v2089 = vadd.f32 0.0, %v2088
        %v2090 = vpop.f32.mrf.mxu0
        %v2091 = vpop.f32.mrf.mxu0
        %v2092 = vadd.f32 0.0, %v2091
        %v2093 = vpop.f32.mrf.mxu0
        %2094 = vmatprep.mubr.bf16.mxu0 0
        %2095 = vmatmul.mubr.bf16.gmra.mxu0 %v2033
        %v2096 = vpop.f32.mrf.mxu0
        %v2097 = vadd.f32 0.0, %v2096
        %v2098 = vpop.f32.mrf.mxu0
        %v2099 = vpop.f32.mrf.mxu0
        %v2100 = vadd.f32 0.0, %v2099
        %v2101 = vpop.f32.mrf.mxu0
        %2102 = vdwg.mxu0
        %v2103 = vadd.f32 %v2001, %v2073
        %v2104 = vadd.f32 %v2002, %v2076
        %v2105 = vadd.f32 %v2003, %v2081
        %v2106 = vadd.f32 %v2004, %v2084
        %v2107 = vadd.f32 %v2005, %v2089
        %v2108 = vadd.f32 %v2006, %v2092
        %v2109 = vadd.f32 %v2007, %v2097
        %v2110 = vadd.f32 %v2008, %v2100
        %v2111 = vld [vmem:[%s1710 + $0x8] sm:$0xff]
        %v2112 = vld [vmem:[%s1710 + $0x20] sm:$0xff]
        %v2113 = vld [vmem:[%s1710 + $0x38] sm:$0xff]
        %v2114 = vld [vmem:[%s1710 + $0x50] sm:$0xff]
        %v2115 = vld [vmem:[%s1710 + $0x68] sm:$0xff]
        %v2116 = vld [vmem:[%s1710 + $0x80] sm:$0xff]
        %v2117 = vld [vmem:[%s1710 + $0x98] sm:$0xff]
        %v2118 = vld [vmem:[%s1710 + $0xb0] sm:$0xff]
        %v2119 = vpack.c.bf16 %v2112, %v2111
        %v2120 = vpack.c.bf16 %v2114, %v2113
        %v2121 = vpack.c.bf16 %v2116, %v2115
        %v2122 = vpack.c.bf16 %v2118, %v2117
        %s2123 = scalar_lea.vmem %s6, 16
        %v2124 = vld [vmem:[%s2123] sm:$0xf]
        %v2126 = vsel %vm1706, %v2119, 0
        %v2129 = vsel %vm1706, %v2120, 0
        %v2132 = vsel %vm1706, %v2121, 0
        %v2135 = vsel %vm1706, %v2122, 0
        %v2138 = vsel %vm1758, %v2124, 0
        %2140 = vmatprep.subr.bf16.mxu0 0
        %2141 = vmatpush1.bf16.msra.mxu0 0
        %2142 = vmatprep.subr.bf16.mxu0 0
        %2143 = vmatpush1.bf16.msra.mxu0 0
        %2144 = vmatprep.subr.bf16.mxu0 0
        %2145 = vmatpush1.bf16.msra.mxu0 0
        %2146 = vmatprep.subr.bf16.mxu0 0
        %2147 = vmatpush1.bf16.msra.mxu0 0
        %2148 = vmatprep.subr.bf16.mxu0 0
        %2149 = vmatpush1.bf16.msra.mxu0 0
        %2150 = vmatprep.subr.bf16.mxu0 0
        %2151 = vmatpush1.bf16.msra.mxu0 0
        %2152 = vmatprep.subr.bf16.mxu0 0
        %2153 = vmatpush1.bf16.msra.mxu0 0
        %2154 = vmatprep.subr.bf16.mxu0 0
        %2155 = vmatpush1.bf16.msra.mxu0 %v2138
        %2156 = vmatprep.subr.bf16.mxu0 0
        %2157 = vmatpush2.bf16.msra.mxu0 0
        %2158 = vmatprep.subr.bf16.mxu0 0
        %2159 = vmatpush2.bf16.msra.mxu0 0
        %2160 = vmatprep.subr.bf16.mxu0 0
        %2161 = vmatpush2.bf16.msra.mxu0 0
        %2162 = vmatprep.subr.bf16.mxu0 0
        %2163 = vmatpush2.bf16.msra.mxu0 0
        %2164 = vmatprep.subr.bf16.mxu0 0
        %2165 = vmatpush2.bf16.msra.mxu0 0
        %2166 = vmatprep.subr.bf16.mxu0 0
        %2167 = vmatpush2.bf16.msra.mxu0 0
        %2168 = vmatprep.subr.bf16.mxu0 0
        %2169 = vmatpush2.bf16.msra.mxu0 0
        %2170 = vmatprep.subr.bf16.mxu0 0
        %2171 = vmatpush2.bf16.msra.mxu0 0
        %2172 = vmatprep.mubr.bf16.mxu0 0
        %2173 = vmatmul.mubr.bf16.gmra.mxu0 %v2126
        %v2174 = vpop.f32.mrf.mxu0
        %v2175 = vadd.f32 0.0, %v2174
        %v2176 = vpop.f32.mrf.mxu0
        %v2177 = vpop.f32.mrf.mxu0
        %v2178 = vadd.f32 0.0, %v2177
        %v2179 = vpop.f32.mrf.mxu0
        %2180 = vmatprep.mubr.bf16.mxu0 0
        %2181 = vmatmul.mubr.bf16.gmra.mxu0 %v2129
        %v2182 = vpop.f32.mrf.mxu0
        %v2183 = vadd.f32 0.0, %v2182
        %v2184 = vpop.f32.mrf.mxu0
        %v2185 = vpop.f32.mrf.mxu0
        %v2186 = vadd.f32 0.0, %v2185
        %v2187 = vpop.f32.mrf.mxu0
        %2188 = vmatprep.mubr.bf16.mxu0 0
        %2189 = vmatmul.mubr.bf16.gmra.mxu0 %v2132
        %v2190 = vpop.f32.mrf.mxu0
        %v2191 = vadd.f32 0.0, %v2190
        %v2192 = vpop.f32.mrf.mxu0
        %v2193 = vpop.f32.mrf.mxu0
        %v2194 = vadd.f32 0.0, %v2193
        %v2195 = vpop.f32.mrf.mxu0
        %2196 = vmatprep.mubr.bf16.mxu0 0
        %2197 = vmatmul.mubr.bf16.gmra.mxu0 %v2135
        %v2198 = vpop.f32.mrf.mxu0
        %v2199 = vadd.f32 0.0, %v2198
        %v2200 = vpop.f32.mrf.mxu0
        %v2201 = vpop.f32.mrf.mxu0
        %v2202 = vadd.f32 0.0, %v2201
        %v2203 = vpop.f32.mrf.mxu0
        %2204 = vdwg.mxu0
        %v2205 = vadd.f32 %v2103, %v2175
        %v2206 = vadd.f32 %v2104, %v2178
        %v2207 = vadd.f32 %v2105, %v2183
        %v2208 = vadd.f32 %v2106, %v2186
        %v2209 = vadd.f32 %v2107, %v2191
        %v2210 = vadd.f32 %v2108, %v2194
        %v2211 = vadd.f32 %v2109, %v2199
        %v2212 = vadd.f32 %v2110, %v2202
        %v2213 = vld [vmem:[%s1710 + $0x9] sm:$0xff]
        %v2214 = vld [vmem:[%s1710 + $0x21] sm:$0xff]
        %v2215 = vld [vmem:[%s1710 + $0x39] sm:$0xff]
        %v2216 = vld [vmem:[%s1710 + $0x51] sm:$0xff]
        %v2217 = vld [vmem:[%s1710 + $0x69] sm:$0xff]
        %v2218 = vld [vmem:[%s1710 + $0x81] sm:$0xff]
        %v2219 = vld [vmem:[%s1710 + $0x99] sm:$0xff]
        %v2220 = vld [vmem:[%s1710 + $0xb1] sm:$0xff]
        %v2221 = vpack.c.bf16 %v2214, %v2213
        %v2222 = vpack.c.bf16 %v2216, %v2215
        %v2223 = vpack.c.bf16 %v2218, %v2217
        %v2224 = vpack.c.bf16 %v2220, %v2219
        %s2225 = scalar_lea.vmem %s6, 20
        %v2226 = vld [vmem:[%s2225] sm:$0xf]
        %v2228 = vsel %vm1706, %v2221, 0
        %v2231 = vsel %vm1706, %v2222, 0
        %v2234 = vsel %vm1706, %v2223, 0
        %v2237 = vsel %vm1706, %v2224, 0
        %v2240 = vsel %vm1758, %v2226, 0
        %2242 = vmatprep.subr.bf16.mxu0 0
        %2243 = vmatpush1.bf16.msra.mxu0 0
        %2244 = vmatprep.subr.bf16.mxu0 0
        %2245 = vmatpush1.bf16.msra.mxu0 0
        %2246 = vmatprep.subr.bf16.mxu0 0
        %2247 = vmatpush1.bf16.msra.mxu0 0
        %2248 = vmatprep.subr.bf16.mxu0 0
        %2249 = vmatpush1.bf16.msra.mxu0 0
        %2250 = vmatprep.subr.bf16.mxu0 0
        %2251 = vmatpush1.bf16.msra.mxu0 0
        %2252 = vmatprep.subr.bf16.mxu0 0
        %2253 = vmatpush1.bf16.msra.mxu0 0
        %2254 = vmatprep.subr.bf16.mxu0 0
        %2255 = vmatpush1.bf16.msra.mxu0 0
        %2256 = vmatprep.subr.bf16.mxu0 0
        %2257 = vmatpush1.bf16.msra.mxu0 %v2240
        %2258 = vmatprep.subr.bf16.mxu0 0
        %2259 = vmatpush2.bf16.msra.mxu0 0
        %2260 = vmatprep.subr.bf16.mxu0 0
        %2261 = vmatpush2.bf16.msra.mxu0 0
        %2262 = vmatprep.subr.bf16.mxu0 0
        %2263 = vmatpush2.bf16.msra.mxu0 0
        %2264 = vmatprep.subr.bf16.mxu0 0
        %2265 = vmatpush2.bf16.msra.mxu0 0
        %2266 = vmatprep.subr.bf16.mxu0 0
        %2267 = vmatpush2.bf16.msra.mxu0 0
        %2268 = vmatprep.subr.bf16.mxu0 0
        %2269 = vmatpush2.bf16.msra.mxu0 0
        %2270 = vmatprep.subr.bf16.mxu0 0
        %2271 = vmatpush2.bf16.msra.mxu0 0
        %2272 = vmatprep.subr.bf16.mxu0 0
        %2273 = vmatpush2.bf16.msra.mxu0 0
        %2274 = vmatprep.mubr.bf16.mxu0 0
        %2275 = vmatmul.mubr.bf16.gmra.mxu0 %v2228
        %v2276 = vpop.f32.mrf.mxu0
        %v2277 = vadd.f32 0.0, %v2276
        %v2278 = vpop.f32.mrf.mxu0
        %v2279 = vpop.f32.mrf.mxu0
        %v2280 = vadd.f32 0.0, %v2279
        %v2281 = vpop.f32.mrf.mxu0
        %2282 = vmatprep.mubr.bf16.mxu0 0
        %2283 = vmatmul.mubr.bf16.gmra.mxu0 %v2231
        %v2284 = vpop.f32.mrf.mxu0
        %v2285 = vadd.f32 0.0, %v2284
        %v2286 = vpop.f32.mrf.mxu0
        %v2287 = vpop.f32.mrf.mxu0
        %v2288 = vadd.f32 0.0, %v2287
        %v2289 = vpop.f32.mrf.mxu0
        %2290 = vmatprep.mubr.bf16.mxu0 0
        %2291 = vmatmul.mubr.bf16.gmra.mxu0 %v2234
        %v2292 = vpop.f32.mrf.mxu0
        %v2293 = vadd.f32 0.0, %v2292
        %v2294 = vpop.f32.mrf.mxu0
        %v2295 = vpop.f32.mrf.mxu0
        %v2296 = vadd.f32 0.0, %v2295
        %v2297 = vpop.f32.mrf.mxu0
        %2298 = vmatprep.mubr.bf16.mxu0 0
        %2299 = vmatmul.mubr.bf16.gmra.mxu0 %v2237
        %v2300 = vpop.f32.mrf.mxu0
        %v2301 = vadd.f32 0.0, %v2300
        %v2302 = vpop.f32.mrf.mxu0
        %v2303 = vpop.f32.mrf.mxu0
        %v2304 = vadd.f32 0.0, %v2303
        %v2305 = vpop.f32.mrf.mxu0
        %2306 = vdwg.mxu0
        %v2307 = vadd.f32 %v2205, %v2277
        %v2308 = vadd.f32 %v2206, %v2280
        %v2309 = vadd.f32 %v2207, %v2285
        %v2310 = vadd.f32 %v2208, %v2288
        %v2311 = vadd.f32 %v2209, %v2293
        %v2312 = vadd.f32 %v2210, %v2296
        %v2313 = vadd.f32 %v2211, %v2301
        %v2314 = vadd.f32 %v2212, %v2304
        %s2315 = scalar_lea.vmem [#allocation3], 48
        %v2316 = vld [vmem:[%s2315 + $0x7] sm:$0xff]
        %v2317 = vld [vmem:[%s2315 + $0x1f] sm:$0xff]
        %v2318 = vld [vmem:[%s2315 + $0x37] sm:$0xff]
        %v2319 = vld [vmem:[%s2315 + $0x4f] sm:$0xff]
        %v2320 = vld [vmem:[%s2315 + $0x67] sm:$0xff]
        %v2321 = vld [vmem:[%s2315 + $0x7f] sm:$0xff]
        %v2322 = vld [vmem:[%s2315 + $0x97] sm:$0xff]
        %v2323 = vld [vmem:[%s2315 + $0xaf] sm:$0xff]
        %v2324 = vpack.c.bf16 %v2317, %v2316
        %v2325 = vpack.c.bf16 %v2319, %v2318
        %v2326 = vpack.c.bf16 %v2321, %v2320
        %v2327 = vpack.c.bf16 %v2323, %v2322
        %s2328 = scalar_lea.vmem %s6, 24
        %v2329 = vld [vmem:[%s2328] sm:$0xf]
        %v2331 = vsel %vm1706, %v2324, 0
        %v2334 = vsel %vm1706, %v2325, 0
        %v2337 = vsel %vm1706, %v2326, 0
        %v2340 = vsel %vm1706, %v2327, 0
        %v2343 = vsel %vm1758, %v2329, 0
        %2345 = vmatprep.subr.bf16.mxu0 0
        %2346 = vmatpush1.bf16.msra.mxu0 0
        %2347 = vmatprep.subr.bf16.mxu0 0
        %2348 = vmatpush1.bf16.msra.mxu0 0
        %2349 = vmatprep.subr.bf16.mxu0 0
        %2350 = vmatpush1.bf16.msra.mxu0 0
        %2351 = vmatprep.subr.bf16.mxu0 0
        %2352 = vmatpush1.bf16.msra.mxu0 0
        %2353 = vmatprep.subr.bf16.mxu0 0
        %2354 = vmatpush1.bf16.msra.mxu0 0
        %2355 = vmatprep.subr.bf16.mxu0 0
        %2356 = vmatpush1.bf16.msra.mxu0 0
        %2357 = vmatprep.subr.bf16.mxu0 0
        %2358 = vmatpush1.bf16.msra.mxu0 0
        %2359 = vmatprep.subr.bf16.mxu0 0
        %2360 = vmatpush1.bf16.msra.mxu0 %v2343
        %2361 = vmatprep.subr.bf16.mxu0 0
        %2362 = vmatpush2.bf16.msra.mxu0 0
        %2363 = vmatprep.subr.bf16.mxu0 0
        %2364 = vmatpush2.bf16.msra.mxu0 0
        %2365 = vmatprep.subr.bf16.mxu0 0
        %2366 = vmatpush2.bf16.msra.mxu0 0
        %2367 = vmatprep.subr.bf16.mxu0 0
        %2368 = vmatpush2.bf16.msra.mxu0 0
        %2369 = vmatprep.subr.bf16.mxu0 0
        %2370 = vmatpush2.bf16.msra.mxu0 0
        %2371 = vmatprep.subr.bf16.mxu0 0
        %2372 = vmatpush2.bf16.msra.mxu0 0
        %2373 = vmatprep.subr.bf16.mxu0 0
        %2374 = vmatpush2.bf16.msra.mxu0 0
        %2375 = vmatprep.subr.bf16.mxu0 0
        %2376 = vmatpush2.bf16.msra.mxu0 0
        %2377 = vmatprep.mubr.bf16.mxu0 0
        %2378 = vmatmul.mubr.bf16.gmra.mxu0 %v2331
        %v2379 = vpop.f32.mrf.mxu0
        %v2380 = vadd.f32 0.0, %v2379
        %v2381 = vpop.f32.mrf.mxu0
        %v2382 = vpop.f32.mrf.mxu0
        %v2383 = vadd.f32 0.0, %v2382
        %v2384 = vpop.f32.mrf.mxu0
        %2385 = vmatprep.mubr.bf16.mxu0 0
        %2386 = vmatmul.mubr.bf16.gmra.mxu0 %v2334
        %v2387 = vpop.f32.mrf.mxu0
        %v2388 = vadd.f32 0.0, %v2387
        %v2389 = vpop.f32.mrf.mxu0
        %v2390 = vpop.f32.mrf.mxu0
        %v2391 = vadd.f32 0.0, %v2390
        %v2392 = vpop.f32.mrf.mxu0
        %2393 = vmatprep.mubr.bf16.mxu0 0
        %2394 = vmatmul.mubr.bf16.gmra.mxu0 %v2337
        %v2395 = vpop.f32.mrf.mxu0
        %v2396 = vadd.f32 0.0, %v2395
        %v2397 = vpop.f32.mrf.mxu0
        %v2398 = vpop.f32.mrf.mxu0
        %v2399 = vadd.f32 0.0, %v2398
        %v2400 = vpop.f32.mrf.mxu0
        %2401 = vmatprep.mubr.bf16.mxu0 0
        %2402 = vmatmul.mubr.bf16.gmra.mxu0 %v2340
        %v2403 = vpop.f32.mrf.mxu0
        %v2404 = vadd.f32 0.0, %v2403
        %v2405 = vpop.f32.mrf.mxu0
        %v2406 = vpop.f32.mrf.mxu0
        %v2407 = vadd.f32 0.0, %v2406
        %v2408 = vpop.f32.mrf.mxu0
        %2409 = vdwg.mxu0
        %v2410 = vadd.f32 %v2307, %v2380
        %v2411 = vadd.f32 %v2308, %v2383
        %v2412 = vadd.f32 %v2309, %v2388
        %v2413 = vadd.f32 %v2310, %v2391
        %v2414 = vadd.f32 %v2311, %v2396
        %v2415 = vadd.f32 %v2312, %v2399
        %v2416 = vadd.f32 %v2313, %v2404
        %v2417 = vadd.f32 %v2314, %v2407
        %v2418 = vld [vmem:[%s2315 + $0x8] sm:$0xff]
        %v2419 = vld [vmem:[%s2315 + $0x20] sm:$0xff]
        %v2420 = vld [vmem:[%s2315 + $0x38] sm:$0xff]
        %v2421 = vld [vmem:[%s2315 + $0x50] sm:$0xff]
        %v2422 = vld [vmem:[%s2315 + $0x68] sm:$0xff]
        %v2423 = vld [vmem:[%s2315 + $0x80] sm:$0xff]
        %v2424 = vld [vmem:[%s2315 + $0x98] sm:$0xff]
        %v2425 = vld [vmem:[%s2315 + $0xb0] sm:$0xff]
        %v2426 = vpack.c.bf16 %v2419, %v2418
        %v2427 = vpack.c.bf16 %v2421, %v2420
        %v2428 = vpack.c.bf16 %v2423, %v2422
        %v2429 = vpack.c.bf16 %v2425, %v2424
        %s2430 = scalar_lea.vmem %s6, 28
        %v2431 = vld [vmem:[%s2430] sm:$0xf]
        %v2433 = vsel %vm1706, %v2426, 0
        %v2436 = vsel %vm1706, %v2427, 0
        %v2439 = vsel %vm1706, %v2428, 0
        %v2442 = vsel %vm1706, %v2429, 0
        %v2445 = vsel %vm1758, %v2431, 0
        %2447 = vmatprep.subr.bf16.mxu0 0
        %2448 = vmatpush1.bf16.msra.mxu0 0
        %2449 = vmatprep.subr.bf16.mxu0 0
        %2450 = vmatpush1.bf16.msra.mxu0 0
        %2451 = vmatprep.subr.bf16.mxu0 0
        %2452 = vmatpush1.bf16.msra.mxu0 0
        %2453 = vmatprep.subr.bf16.mxu0 0
        %2454 = vmatpush1.bf16.msra.mxu0 0
        %2455 = vmatprep.subr.bf16.mxu0 0
        %2456 = vmatpush1.bf16.msra.mxu0 0
        %2457 = vmatprep.subr.bf16.mxu0 0
        %2458 = vmatpush1.bf16.msra.mxu0 0
        %2459 = vmatprep.subr.bf16.mxu0 0
        %2460 = vmatpush1.bf16.msra.mxu0 0
        %2461 = vmatprep.subr.bf16.mxu0 0
        %2462 = vmatpush1.bf16.msra.mxu0 %v2445
        %2463 = vmatprep.subr.bf16.mxu0 0
        %2464 = vmatpush2.bf16.msra.mxu0 0
        %2465 = vmatprep.subr.bf16.mxu0 0
        %2466 = vmatpush2.bf16.msra.mxu0 0
        %2467 = vmatprep.subr.bf16.mxu0 0
        %2468 = vmatpush2.bf16.msra.mxu0 0
        %2469 = vmatprep.subr.bf16.mxu0 0
        %2470 = vmatpush2.bf16.msra.mxu0 0
        %2471 = vmatprep.subr.bf16.mxu0 0
        %2472 = vmatpush2.bf16.msra.mxu0 0
        %2473 = vmatprep.subr.bf16.mxu0 0
        %2474 = vmatpush2.bf16.msra.mxu0 0
        %2475 = vmatprep.subr.bf16.mxu0 0
        %2476 = vmatpush2.bf16.msra.mxu0 0
        %2477 = vmatprep.subr.bf16.mxu0 0
        %2478 = vmatpush2.bf16.msra.mxu0 0
        %2479 = vmatprep.mubr.bf16.mxu0 0
        %2480 = vmatmul.mubr.bf16.gmra.mxu0 %v2433
        %v2481 = vpop.f32.mrf.mxu0
        %v2482 = vadd.f32 0.0, %v2481
        %v2483 = vpop.f32.mrf.mxu0
        %v2484 = vpop.f32.mrf.mxu0
        %v2485 = vadd.f32 0.0, %v2484
        %v2486 = vpop.f32.mrf.mxu0
        %2487 = vmatprep.mubr.bf16.mxu0 0
        %2488 = vmatmul.mubr.bf16.gmra.mxu0 %v2436
        %v2489 = vpop.f32.mrf.mxu0
        %v2490 = vadd.f32 0.0, %v2489
        %v2491 = vpop.f32.mrf.mxu0
        %v2492 = vpop.f32.mrf.mxu0
        %v2493 = vadd.f32 0.0, %v2492
        %v2494 = vpop.f32.mrf.mxu0
        %2495 = vmatprep.mubr.bf16.mxu0 0
        %2496 = vmatmul.mubr.bf16.gmra.mxu0 %v2439
        %v2497 = vpop.f32.mrf.mxu0
        %v2498 = vadd.f32 0.0, %v2497
        %v2499 = vpop.f32.mrf.mxu0
        %v2500 = vpop.f32.mrf.mxu0
        %v2501 = vadd.f32 0.0, %v2500
        %v2502 = vpop.f32.mrf.mxu0
        %2503 = vmatprep.mubr.bf16.mxu0 0
        %2504 = vmatmul.mubr.bf16.gmra.mxu0 %v2442
        %v2505 = vpop.f32.mrf.mxu0
        %v2506 = vadd.f32 0.0, %v2505
        %v2507 = vpop.f32.mrf.mxu0
        %v2508 = vpop.f32.mrf.mxu0
        %v2509 = vadd.f32 0.0, %v2508
        %v2510 = vpop.f32.mrf.mxu0
        %2511 = vdwg.mxu0
        %v2512 = vadd.f32 %v2410, %v2482
        %v2513 = vadd.f32 %v2411, %v2485
        %v2514 = vadd.f32 %v2412, %v2490
        %v2515 = vadd.f32 %v2413, %v2493
        %v2516 = vadd.f32 %v2414, %v2498
        %v2517 = vadd.f32 %v2415, %v2501
        %v2518 = vadd.f32 %v2416, %v2506
        %v2519 = vadd.f32 %v2417, %v2509
        %v2520 = vld [vmem:[%s2315 + $0x9] sm:$0xff]
        %v2521 = vld [vmem:[%s2315 + $0x21] sm:$0xff]
        %v2522 = vld [vmem:[%s2315 + $0x39] sm:$0xff]
        %v2523 = vld [vmem:[%s2315 + $0x51] sm:$0xff]
        %v2524 = vld [vmem:[%s2315 + $0x69] sm:$0xff]
        %v2525 = vld [vmem:[%s2315 + $0x81] sm:$0xff]
        %v2526 = vld [vmem:[%s2315 + $0x99] sm:$0xff]
        %v2527 = vld [vmem:[%s2315 + $0xb1] sm:$0xff]
        %v2528 = vpack.c.bf16 %v2521, %v2520
        %v2529 = vpack.c.bf16 %v2523, %v2522
        %v2530 = vpack.c.bf16 %v2525, %v2524
        %v2531 = vpack.c.bf16 %v2527, %v2526
        %s2532 = scalar_lea.vmem %s6, 32
        %v2533 = vld [vmem:[%s2532] sm:$0xf]
        %v2535 = vsel %vm1706, %v2528, 0
        %v2538 = vsel %vm1706, %v2529, 0
        %v2541 = vsel %vm1706, %v2530, 0
        %v2544 = vsel %vm1706, %v2531, 0
        %v2547 = vsel %vm1758, %v2533, 0
        %2549 = vmatprep.subr.bf16.mxu0 0
        %2550 = vmatpush1.bf16.msra.mxu0 0
        %2551 = vmatprep.subr.bf16.mxu0 0
        %2552 = vmatpush1.bf16.msra.mxu0 0
        %2553 = vmatprep.subr.bf16.mxu0 0
        %2554 = vmatpush1.bf16.msra.mxu0 0
        %2555 = vmatprep.subr.bf16.mxu0 0
        %2556 = vmatpush1.bf16.msra.mxu0 0
        %2557 = vmatprep.subr.bf16.mxu0 0
        %2558 = vmatpush1.bf16.msra.mxu0 0
        %2559 = vmatprep.subr.bf16.mxu0 0
        %2560 = vmatpush1.bf16.msra.mxu0 0
        %2561 = vmatprep.subr.bf16.mxu0 0
        %2562 = vmatpush1.bf16.msra.mxu0 0
        %2563 = vmatprep.subr.bf16.mxu0 0
        %2564 = vmatpush1.bf16.msra.mxu0 %v2547
        %2565 = vmatprep.subr.bf16.mxu0 0
        %2566 = vmatpush2.bf16.msra.mxu0 0
        %2567 = vmatprep.subr.bf16.mxu0 0
        %2568 = vmatpush2.bf16.msra.mxu0 0
        %2569 = vmatprep.subr.bf16.mxu0 0
        %2570 = vmatpush2.bf16.msra.mxu0 0
        %2571 = vmatprep.subr.bf16.mxu0 0
        %2572 = vmatpush2.bf16.msra.mxu0 0
        %2573 = vmatprep.subr.bf16.mxu0 0
        %2574 = vmatpush2.bf16.msra.mxu0 0
        %2575 = vmatprep.subr.bf16.mxu0 0
        %2576 = vmatpush2.bf16.msra.mxu0 0
        %2577 = vmatprep.subr.bf16.mxu0 0
        %2578 = vmatpush2.bf16.msra.mxu0 0
        %2579 = vmatprep.subr.bf16.mxu0 0
        %2580 = vmatpush2.bf16.msra.mxu0 0
        %2581 = vmatprep.mubr.bf16.mxu0 0
        %2582 = vmatmul.mubr.bf16.gmra.mxu0 %v2535
        %v2583 = vpop.f32.mrf.mxu0
        %v2584 = vadd.f32 0.0, %v2583
        %v2585 = vpop.f32.mrf.mxu0
        %v2586 = vpop.f32.mrf.mxu0
        %v2587 = vadd.f32 0.0, %v2586
        %v2588 = vpop.f32.mrf.mxu0
        %2589 = vmatprep.mubr.bf16.mxu0 0
        %2590 = vmatmul.mubr.bf16.gmra.mxu0 %v2538
        %v2591 = vpop.f32.mrf.mxu0
        %v2592 = vadd.f32 0.0, %v2591
        %v2593 = vpop.f32.mrf.mxu0
        %v2594 = vpop.f32.mrf.mxu0
        %v2595 = vadd.f32 0.0, %v2594
        %v2596 = vpop.f32.mrf.mxu0
        %2597 = vmatprep.mubr.bf16.mxu0 0
        %2598 = vmatmul.mubr.bf16.gmra.mxu0 %v2541
        %v2599 = vpop.f32.mrf.mxu0
        %v2600 = vadd.f32 0.0, %v2599
        %v2601 = vpop.f32.mrf.mxu0
        %v2602 = vpop.f32.mrf.mxu0
        %v2603 = vadd.f32 0.0, %v2602
        %v2604 = vpop.f32.mrf.mxu0
        %2605 = vmatprep.mubr.bf16.mxu0 0
        %2606 = vmatmul.mubr.bf16.gmra.mxu0 %v2544
        %v2607 = vpop.f32.mrf.mxu0
        %v2608 = vadd.f32 0.0, %v2607
        %v2609 = vpop.f32.mrf.mxu0
        %v2610 = vpop.f32.mrf.mxu0
        %v2611 = vadd.f32 0.0, %v2610
        %v2612 = vpop.f32.mrf.mxu0
        %2613 = vdwg.mxu0
        %v2614 = vadd.f32 %v2512, %v2584
        %v2615 = vadd.f32 %v2513, %v2587
        %v2616 = vadd.f32 %v2514, %v2592
        %v2617 = vadd.f32 %v2515, %v2595
        %v2618 = vadd.f32 %v2516, %v2600
        %v2619 = vadd.f32 %v2517, %v2603
        %v2620 = vadd.f32 %v2518, %v2608
        %v2621 = vadd.f32 %v2519, %v2611
        %v2622 = vadd.f32 %v2614, %v1601
        %v2623 = vadd.f32 %v2615, %v1604
        %v2624 = vadd.f32 %v2616, %v1609
        %v2625 = vadd.f32 %v2617, %v1612
        %v2626 = vadd.f32 %v2618, %v1617
        %v2627 = vadd.f32 %v2619, %v1620
        %v2628 = vadd.f32 %v2620, %v1625
        %v2629 = vadd.f32 %v2621, %v1628
        %2630 = vst.msk [vmem:[%s298] sm:$0xff] %vm1706, %v2622
        %2631 = vst.msk [vmem:[%s298 + $0x8] sm:$0xff] %vm1706, %v2623
        %2632 = vst.msk [vmem:[%s298 + $0x10] sm:$0xff] %vm1706, %v2624
        %2633 = vst.msk [vmem:[%s298 + $0x18] sm:$0xff] %vm1706, %v2625
        %2634 = vst.msk [vmem:[%s298 + $0x20] sm:$0xff] %vm1706, %v2626
        %2635 = vst.msk [vmem:[%s298 + $0x28] sm:$0xff] %vm1706, %v2627
        %2636 = vst.msk [vmem:[%s298 + $0x30] sm:$0xff] %vm1706, %v2628
        %2637 = vst.msk [vmem:[%s298 + $0x38] sm:$0xff] %vm1706, %v2629
        %s2638 = sand.u32 %s203, 1
        %s2639 = scalar_lea.sflag [#allocation5], %s2638
        %s2640 = sand.u32 %s203, 1
        %s2641 = smul.addr %s2640, 64
        %s2642 = scalar_lea.vmem [#allocation4], %s2641
        // Predicated region
        $region53: #{tpu_custom_call.1} parent=51 // pred_check
          %p2643 = pneg %p213
        $region54: #{tpu_custom_call.1} parent=51 // pred_check_branch
          %2645 = sbr.rel (%p2643) target = $region56
        $region55: #{tpu_custom_call.1} parent=51 // pred_region
          %s2647 = ssub.s32 1024, 1024
          %2648 = vsyncadd %s2639, %s2647
          %s2649 = smul.addr %s22, 8
          %s2650 = smul.addr %s2649, 128
          %s2651 = scalar_lea.hbm %s8, %s2650
          %s2652 = sshll.u32 %s2642, 4
          %s2653 = int_to_ptr.vmem [resolvable:$true] %s2652
          %2658 = dma.vmem_to_hbm [thread:$0]  %s2653, 1024, %s2651, %s2639, 128, 128, 8
        $region56: #{tpu_custom_call.1} parent=51 // pred_fallthru
          _
      $region52: #{tpu_custom_call.1} parent=5 // pred_fallthru
        _
      %p2659 = scmp.le.s32.totalorder 2, %s17
      // Predicated region
      $region57: #{tpu_custom_call.1} parent=5 // pred_check
        %p2660 = pneg %p2659
      $region58: #{tpu_custom_call.1} parent=5 // pred_check_branch
        %2662 = sbr.rel (%p2660) target = $region60
      $region59: #{tpu_custom_call.1} parent=5 // pred_region
        %s2663 = ssub.s32 %s17, 2
        // Predicated region
        $region61: #{tpu_custom_call.1} parent=59 // pred_check
          %p2664 = pneg %p219
        $region62: #{tpu_custom_call.1} parent=59 // pred_check_branch
          %2666 = sbr.rel (%p2664) target = $region64
        $region63: #{tpu_custom_call.1} parent=59 // pred_region
          %s2667 = sand.u32 %s204, 1
          %s2668 = scalar_lea.sflag [#allocation5], %s2667
          %s2669 = sand.u32 %s204, 1
          %s2670 = smul.addr %s2669, 64
          %s2671 = scalar_lea.vmem [#allocation4], %s2670
          %2672 = dma.done %s2668, 1024
        $region64: #{tpu_custom_call.1} parent=59 // pred_fallthru
          _
      $region60: #{tpu_custom_call.1} parent=5 // pred_fallthru
        _
    $region6: #{tpu_custom_call.1} parent=1 // loop_footer
      %s21 = sadd.s32 1, %s17
    $region7: #{tpu_custom_call.1} parent=1 // loop_footer_branch
      %16 = sbr.rel target = $region3
    $region8: #{tpu_custom_call.1} parent=1 // loop_exit
      _
    %2673 = vsyncpa [#allocation5], 1
    %s2674 = scalar_lea.sflag [#allocation5], 1
    %2675 = vsyncpa %s2674, 1

</llo_original>
